<compile_context>
chip_gen: v7x
topology: tpu7x:2x2x1
jax: 0.10.0
libtpu: 0.0.40
codegen_flags: <defaults>
</compile_context>

<pallas_src>
import numpy as np
import jax
import jax.numpy as jnp
from jax.experimental import pallas as pl
from jax.experimental.pallas import tpu as pltpu

B = 2            # batch size
N = 128          # points per cloud
ENC_DIM = 256    # encoder output_dim
G = 2 * B        # (cloud, batch) groups processed together
M = G * N        # rows of the fused channels-last activation slab (= 512)


def _leaky_relu(x):
    return jnp.where(x > 0, x, 0.01 * x)


def _instance_norm_rows(x, eps=1e-5):
    mu = jnp.mean(x, axis=-1, keepdims=True)
    var = jnp.mean((x - mu) ** 2, axis=-1, keepdims=True)
    return (x - mu) * jax.lax.rsqrt(var + eps)


# -----------------------------------------------------------------------------
# Single fused kernel.
# TODO(synk): PointNet2_Encoder_v1 source is not part of the module listing; it is
# realised here as a PointNet-style shared-MLP (6->64->128->256) + global max-pool
# encoder with data_dim=6 / output_dim=256 (FPS / ball-query set abstraction not
# reproduced).
# -----------------------------------------------------------------------------
def fused_kernel(pc0_ref, pc1_ref, wA_ref, wB_ref, wH_ref, bias_ref, out_ref):
    f32 = jnp.float32

    # ---- inputs kept in native NCL layout (N=128 on lanes); major-axis stack only ----
    x = jnp.concatenate([pc0_ref[...], pc1_ref[...]], axis=0)        # (G, 3, N)
    cent = jnp.mean(x, axis=2, keepdims=True)                        # (G, 3, 1) centroids (torch dim=2)

    # ---- encoder layer 1 on the VPU: no pad / no transpose / no K=8 MXU matmul ----
    # wA rows 0-63: cols 0-2 = w1[0:3].T (xyz), cols 3-5 = w1[3:6].T (centroid), col 6 = b1.
    l1 = wA_ref[0:64, :]                                             # (64, 128)
    hb = jnp.broadcast_to(l1[:, 6:7][None, :, :], (G, 64, 1))        # bias column per group
    for c in range(3):                                               # centroid contribution (G,64,1)
        hb = hb + l1[:, 3 + c:4 + c][None, :, :] * cent[:, c:c + 1, :]
    h1 = hb
    for c in range(3):                                               # 3 broadcast FMAs, N on lanes
        h1 = h1 + l1[:, c:c + 1][None, :, :] * x[:, c:c + 1, :]      # (G, 64, N)
    h1 = jnp.maximum(h1, 0.0)

    # ---- one dense tile transpose -> channels-last slab, then two M=512 MXU matmuls ----
    hcl = jnp.transpose(h1, (0, 2, 1)).reshape(M, 64)                # (512, 64)

    w2 = wA_ref[64:128, :]                                           # (64, 128)
    b2 = bias_ref[0:1, 0:128]                                        # (1, 128)
    h2 = jnp.maximum(jnp.dot(hcl, w2, preferred_element_type=f32) + b2, 0.0)   # (512, 128)

    w3 = wB_ref[0:128, :]                                            # (128, 256)
    b3 = bias_ref[1:2, :]                                            # (1, 256)
    h3 = jnp.maximum(jnp.dot(h2, w3, preferred_element_type=f32) + b3, 0.0)    # (512, 256)

    # global max-pool over points (sublane reduce -> lane-major (G, 256) features)
    feat = jnp.max(h3.reshape(G, N, ENC_DIM), axis=1)                # (G, 256)

    # ---- aux head: ONE fused matmul for both clouds (cols 0-2 valid) ----
    wa = wH_ref[0:256, :]                                            # (256, 8)
    ba = bias_ref[4:5, 0:8]                                          # (1, 8)
    c_all = jnp.dot(feat, wa, preferred_element_type=f32) + ba       # (G, 8): rows 0-1 obj0, 2-3 obj1

    # ---- fusion with split 512->256 weight (no (B,512) lane concat) ----
    e0 = feat[0:B, :]                                                # encoded_live
    e1 = feat[B:G, :]                                                # encoded_bottleneck
    wf_a = wB_ref[128:384, :]                                        # (256, 256)
    wf_b = wB_ref[384:640, :]                                        # (256, 256)
    bf = bias_ref[2:3, :]
    y = (jnp.dot(e0, wf_a, preferred_element_type=f32)
         + jnp.dot(e1, wf_b, preferred_element_type=f32) + bf)
    y = _leaky_relu(_instance_norm_rows(y))                          # (B, 256)

    # ---- mlp2 / mlp3 ----
    wm2 = wA_ref[128:384, :]                                         # (256, 128)
    bm2 = bias_ref[3:4, 0:128]
    y = _leaky_relu(_instance_norm_rows(
        jnp.dot(y, wm2, preferred_element_type=f32) + bm2))          # (B, 128)

    wm3 = wH_ref[256:384, :]                                         # (128, 8) (cols 0-2 valid)
    bm3 = bias_ref[5:6, 0:8]
    t = jnp.dot(y, wm3, preferred_element_type=f32) + bm3            # (B, 8)

    # ---- single lane-dense packed output slab (one output DMA) ----
    out_ref[...] = jnp.zeros(out_ref.shape, f32)
    out_ref[0:B, 0:8] = t                        # rows 0-1 : t_pred
    out_ref[B:B + G, 0:8] = c_all                # rows 2-3 : obj0 centre, rows 4-5 : obj1 centre


# ----------------------------------------------------------------------------- wrapper
def _forward_call(pc0, pc1, packed):
    vm = lambda: pl.BlockSpec(memory_space=pltpu.MemorySpace.VMEM)
    return pl.pallas_call(
        fused_kernel,
        out_shape=jax.ShapeDtypeStruct((8, 128), jnp.float32),
        in_specs=[vm() for _ in range(6)],
        out_specs=vm(),
        compiler_params=pltpu.CompilerParams(vmem_limit_bytes=8 * 1024 * 1024),
        cost_estimate=pl.CostEstimate(flops=45_000_000, transcendentals=512,
                                      bytes_accessed=1_100_000),
    )(pc0, pc1, packed["wA"], packed["wB"], packed["wH"], packed["bias"])


def init_params(key):
    """Deterministic PyTorch-default-style init: U(-1/sqrt(fan_in), 1/sqrt(fan_in))."""
    def linear(k, fan_in, fan_out):
        kw, kb = jax.random.split(k)
        bound = 1.0 / np.sqrt(fan_in)
        w = jax.random.uniform(kw, (fan_in, fan_out), jnp.float32, -bound, bound)
        b = jax.random.uniform(kb, (fan_out,), jnp.float32, -bound, bound)
        return w, b

    keys = jax.random.split(key, 7)
    p = {}
    p["enc_w1"], p["enc_b1"] = linear(keys[0], 6, 64)          # data_dim=6 (xyz + centroid)
    p["enc_w2"], p["enc_b2"] = linear(keys[1], 64, 128)
    p["enc_w3"], p["enc_b3"] = linear(keys[2], 128, ENC_DIM)
    p["aux_w"],  p["aux_b"]  = linear(keys[3], ENC_DIM, 3)
    p["fus_w"],  p["fus_b"]  = linear(keys[4], 2 * ENC_DIM, ENC_DIM)
    p["m2_w"],   p["m2_b"]   = linear(keys[5], ENC_DIM, 128)
    p["m3_w"],   p["m3_b"]   = linear(keys[6], 128, 3)
    return p


def pack_params(p):
    """One-time packing of the 16 torch-style tensors into 4 DMA-friendly slabs."""
    f32 = jnp.float32

    # Layer-1 block (64,128): cols 0-2 w1_xyz^T, cols 3-5 w1_centroid^T, col 6 b1.
    l1 = jnp.zeros((64, 128), f32)
    l1 = l1.at[:, 0:6].set(p["enc_w1"].T)
    l1 = l1.at[:, 6].set(p["enc_b1"])
    wA = jnp.concatenate([l1, p["enc_w2"], p["m2_w"]], axis=0)                    # (384, 128)

    wB = jnp.concatenate([p["enc_w3"], p["fus_w"][:ENC_DIM], p["fus_w"][ENC_DIM:]],
                         axis=0)                                                  # (640, 256)

    wa8 = jnp.pad(p["aux_w"], ((0, 0), (0, 5)))                                   # (256, 8)
    wm38 = jnp.pad(p["m3_w"], ((0, 0), (0, 5)))                                   # (128, 8)
    wH = jnp.concatenate([wa8, wm38], axis=0)                                     # (384, 8)

    def row(b):
        b = jnp.asarray(b, f32).reshape(-1)
        return jnp.pad(b, (0, 256 - b.shape[0]))[None, :]
    bias = jnp.concatenate([row(p["enc_b2"]), row(p["enc_b3"]), row(p["fus_b"]),
                            row(p["m2_b"]), row(p["aux_b"]), row(p["m3_b"]),
                            jnp.zeros((2, 256), f32)], axis=0)                    # (8, 256)

    return {"wA": wA, "wB": wB, "wH": wH, "bias": bias}


@jax.jit
def pointnetv2_treg_forward(pc0, pc1, packed):
    """pc0/pc1: (B, 3, N) in PyTorch NCL layout.  rot_pred=None default path.
    Returns (t_pred, obj0_centre_pred, obj1_centre_pred)."""
    out = _forward_call(pc0, pc1, packed)          # (8, 128) packed lane-dense slab
    t = out[0:B, 0:3]
    c0 = out[B:2 * B, 0:3]
    c1 = out[2 * B:3 * B, 0:3]
    return t, c0, c1


if __name__ == "__main__":
    key = jax.random.PRNGKey(0)
    kp, k0, k1 = jax.random.split(key, 3)
    packed = pack_params(init_params(kp))
    pc0 = jax.random.normal(k0, (B, 3, N), jnp.float32)   # batch['pc0']
    pc1 = jax.random.normal(k1, (B, 3, N), jnp.float32)   # batch['pc1']

    t_pred, c0, c1 = pointnetv2_treg_forward(pc0, pc1, packed)
    jax.block_until_ready((t_pred, c0, c1))

    assert t_pred.shape == (B, 3) and c0.shape == (B, 3) and c1.shape == (B, 3)
    assert bool(jnp.all(jnp.isfinite(t_pred)))
    assert bool(jnp.all(jnp.isfinite(c0))) and bool(jnp.all(jnp.isfinite(c1)))
    print("KERNEL_OK")
</pallas_src>

<mosaic_0001>
module attributes {stable_mosaic.version = 11 : i64} {
  func.func @fused_kernel(%arg0: memref<2x3x128xf32, #tpu.memory_space<vmem>>, %arg1: memref<2x3x128xf32, #tpu.memory_space<vmem>>, %arg2: memref<384x128xf32, #tpu.memory_space<vmem>>, %arg3: memref<640x256xf32, #tpu.memory_space<vmem>>, %arg4: memref<384x8xf32, #tpu.memory_space<vmem>>, %arg5: memref<8x256xf32, #tpu.memory_space<vmem>>, %arg6: memref<8x128xf32, #tpu.memory_space<vmem>>) attributes {dimension_semantics = [], scalar_prefetch = 0 : i64, scratch_operands = 0 : i64, tpu.core_type = #tpu.core_type<tc>} {
    %c0 = arith.constant 0 : index
    %c0_0 = arith.constant 0 : index
    %c0_1 = arith.constant 0 : index
    %0 = vector.load %arg0[%c0, %c0_0, %c0_1] : memref<2x3x128xf32, #tpu.memory_space<vmem>>, vector<2x3x128xf32>
    %c0_2 = arith.constant 0 : index
    %c0_3 = arith.constant 0 : index
    %c0_4 = arith.constant 0 : index
    %1 = vector.load %arg1[%c0_2, %c0_3, %c0_4] : memref<2x3x128xf32, #tpu.memory_space<vmem>>, vector<2x3x128xf32>
    %2 = tpu.concatenate %0, %1 in 0 : vector<2x3x128xf32>, vector<2x3x128xf32> -> vector<4x3x128xf32>
    %cst = arith.constant dense<0.000000e+00> : vector<4x3xf32>
    %3 = vector.multi_reduction <add>, %2, %cst [2] : vector<4x3x128xf32> to vector<4x3xf32>
    %4 = vector.shape_cast %3 : vector<4x3xf32> to vector<4x3x1xf32>
    %cst_5 = arith.constant 1.280000e+02 : f32
    %5 = vector.broadcast %cst_5 : f32 to vector<4x3x1xf32>
    %6 = arith.divf %4, %5 : vector<4x3x1xf32>
    %c0_6 = arith.constant 0 : index
    %c0_7 = arith.constant 0 : index
    %7 = vector.load %arg2[%c0_6, %c0_7] : memref<384x128xf32, #tpu.memory_space<vmem>>, vector<64x128xf32>
    %8 = vector.extract_strided_slice %7 {offsets = [0, 6], sizes = [64, 1], strides = [1, 1]} : vector<64x128xf32> to vector<64x1xf32>
    %9 = vector.shape_cast %8 : vector<64x1xf32> to vector<1x64x1xf32>
    %10 = vector.shape_cast %9 : vector<1x64x1xf32> to vector<1x64x1xf32>
    %11 = vector.broadcast %10 : vector<1x64x1xf32> to vector<4x64x1xf32>
    %12 = vector.extract_strided_slice %7 {offsets = [0, 3], sizes = [64, 1], strides = [1, 1]} : vector<64x128xf32> to vector<64x1xf32>
    %13 = vector.shape_cast %12 : vector<64x1xf32> to vector<1x64x1xf32>
    %14 = vector.extract_strided_slice %6 {offsets = [0, 0, 0], sizes = [4, 1, 1], strides = [1, 1, 1]} : vector<4x3x1xf32> to vector<4x1x1xf32>
    %15 = vector.broadcast %13 : vector<1x64x1xf32> to vector<4x64x1xf32>
    %16 = vector.broadcast %14 : vector<4x1x1xf32> to vector<4x64x1xf32>
    %17 = arith.mulf %15, %16 : vector<4x64x1xf32>
    %18 = arith.addf %11, %17 : vector<4x64x1xf32>
    %19 = vector.extract_strided_slice %7 {offsets = [0, 4], sizes = [64, 1], strides = [1, 1]} : vector<64x128xf32> to vector<64x1xf32>
    %20 = vector.shape_cast %19 : vector<64x1xf32> to vector<1x64x1xf32>
    %21 = vector.extract_strided_slice %6 {offsets = [0, 1, 0], sizes = [4, 1, 1], strides = [1, 1, 1]} : vector<4x3x1xf32> to vector<4x1x1xf32>
    %22 = vector.broadcast %20 : vector<1x64x1xf32> to vector<4x64x1xf32>
    %23 = vector.broadcast %21 : vector<4x1x1xf32> to vector<4x64x1xf32>
    %24 = arith.mulf %22, %23 : vector<4x64x1xf32>
    %25 = arith.addf %18, %24 : vector<4x64x1xf32>
    %26 = vector.extract_strided_slice %7 {offsets = [0, 5], sizes = [64, 1], strides = [1, 1]} : vector<64x128xf32> to vector<64x1xf32>
    %27 = vector.shape_cast %26 : vector<64x1xf32> to vector<1x64x1xf32>
    %28 = vector.extract_strided_slice %6 {offsets = [0, 2, 0], sizes = [4, 1, 1], strides = [1, 1, 1]} : vector<4x3x1xf32> to vector<4x1x1xf32>
    %29 = vector.broadcast %27 : vector<1x64x1xf32> to vector<4x64x1xf32>
    %30 = vector.broadcast %28 : vector<4x1x1xf32> to vector<4x64x1xf32>
    %31 = arith.mulf %29, %30 : vector<4x64x1xf32>
    %32 = arith.addf %25, %31 : vector<4x64x1xf32>
    %33 = vector.extract_strided_slice %7 {offsets = [0, 0], sizes = [64, 1], strides = [1, 1]} : vector<64x128xf32> to vector<64x1xf32>
    %34 = vector.shape_cast %33 : vector<64x1xf32> to vector<1x64x1xf32>
    %35 = vector.extract_strided_slice %2 {offsets = [0, 0, 0], sizes = [4, 1, 128], strides = [1, 1, 1]} : vector<4x3x128xf32> to vector<4x1x128xf32>
    %36 = vector.broadcast %34 : vector<1x64x1xf32> to vector<4x64x128xf32>
    %37 = vector.broadcast %35 : vector<4x1x128xf32> to vector<4x64x128xf32>
    %38 = arith.mulf %36, %37 : vector<4x64x128xf32>
    %39 = vector.broadcast %32 : vector<4x64x1xf32> to vector<4x64x128xf32>
    %40 = arith.addf %39, %38 : vector<4x64x128xf32>
    %41 = vector.extract_strided_slice %7 {offsets = [0, 1], sizes = [64, 1], strides = [1, 1]} : vector<64x128xf32> to vector<64x1xf32>
    %42 = vector.shape_cast %41 : vector<64x1xf32> to vector<1x64x1xf32>
    %43 = vector.extract_strided_slice %2 {offsets = [0, 1, 0], sizes = [4, 1, 128], strides = [1, 1, 1]} : vector<4x3x128xf32> to vector<4x1x128xf32>
    %44 = vector.broadcast %42 : vector<1x64x1xf32> to vector<4x64x128xf32>
    %45 = vector.broadcast %43 : vector<4x1x128xf32> to vector<4x64x128xf32>
    %46 = arith.mulf %44, %45 : vector<4x64x128xf32>
    %47 = arith.addf %40, %46 : vector<4x64x128xf32>
    %48 = vector.extract_strided_slice %7 {offsets = [0, 2], sizes = [64, 1], strides = [1, 1]} : vector<64x128xf32> to vector<64x1xf32>
    %49 = vector.shape_cast %48 : vector<64x1xf32> to vector<1x64x1xf32>
    %50 = vector.extract_strided_slice %2 {offsets = [0, 2, 0], sizes = [4, 1, 128], strides = [1, 1, 1]} : vector<4x3x128xf32> to vector<4x1x128xf32>
    %51 = vector.broadcast %49 : vector<1x64x1xf32> to vector<4x64x128xf32>
    %52 = vector.broadcast %50 : vector<4x1x128xf32> to vector<4x64x128xf32>
    %53 = arith.mulf %51, %52 : vector<4x64x128xf32>
    %54 = arith.addf %47, %53 : vector<4x64x128xf32>
    %cst_8 = arith.constant 0.000000e+00 : f32
    %55 = vector.broadcast %cst_8 : f32 to vector<4x64x128xf32>
    %56 = arith.maximumf %54, %55 : vector<4x64x128xf32>
    %57 = tpu.transpose %56, [0, 2, 1] : vector<4x64x128xf32> -> vector<4x128x64xf32>
    %58 = vector.shape_cast %57 : vector<4x128x64xf32> to vector<512x64xf32>
    %c64 = arith.constant 64 : index
    %c0_9 = arith.constant 0 : index
    %59 = vector.load %arg2[%c64, %c0_9] : memref<384x128xf32, #tpu.memory_space<vmem>>, vector<64x128xf32>
    %c0_10 = arith.constant 0 : index
    %c0_11 = arith.constant 0 : index
    %60 = vector.load %arg5[%c0_10, %c0_11] : memref<8x256xf32, #tpu.memory_space<vmem>>, vector<1x128xf32>
    %cst_12 = arith.constant dense<0.000000e+00> : vector<512x128xf32>
    %61 = tpu.matmul %58, %59, %cst_12 {dimension_numbers = #tpu.dot_dimension_numbers<[1], [0], [0], [1], [0, 0, 1, 1], [], []>} : vector<512x64xf32>, vector<64x128xf32>, vector<512x128xf32> -> vector<512x128xf32>
    %62 = vector.broadcast %60 : vector<1x128xf32> to vector<512x128xf32>
    %63 = arith.addf %61, %62 : vector<512x128xf32>
    %cst_13 = arith.constant 0.000000e+00 : f32
    %64 = vector.broadcast %cst_13 : f32 to vector<512x128xf32>
    %65 = arith.maximumf %63, %64 : vector<512x128xf32>
    %c0_14 = arith.constant 0 : index
    %c0_15 = arith.constant 0 : index
    %66 = vector.load %arg3[%c0_14, %c0_15] : memref<640x256xf32, #tpu.memory_space<vmem>>, vector<128x256xf32>
    %c1 = arith.constant 1 : index
    %c0_16 = arith.constant 0 : index
    %67 = vector.load %arg5[%c1, %c0_16] : memref<8x256xf32, #tpu.memory_space<vmem>>, vector<1x256xf32>
    %cst_17 = arith.constant dense<0.000000e+00> : vector<512x256xf32>
    %68 = tpu.matmul %65, %66, %cst_17 {dimension_numbers = #tpu.dot_dimension_numbers<[1], [0], [0], [1], [0, 0, 1, 1], [], []>} : vector<512x128xf32>, vector<128x256xf32>, vector<512x256xf32> -> vector<512x256xf32>
    %69 = vector.broadcast %67 : vector<1x256xf32> to vector<512x256xf32>
    %70 = arith.addf %68, %69 : vector<512x256xf32>
    %cst_18 = arith.constant 0.000000e+00 : f32
    %71 = vector.broadcast %cst_18 : f32 to vector<512x256xf32>
    %72 = arith.maximumf %70, %71 : vector<512x256xf32>
    %73 = vector.shape_cast %72 : vector<512x256xf32> to vector<4x128x256xf32>
    %cst_19 = arith.constant dense<0xFF800000> : vector<4x256xf32>
    %74 = vector.multi_reduction <maximumf>, %73, %cst_19 [1] : vector<4x128x256xf32> to vector<4x256xf32>
    %c0_20 = arith.constant 0 : index
    %c0_21 = arith.constant 0 : index
    %75 = vector.load %arg4[%c0_20, %c0_21] : memref<384x8xf32, #tpu.memory_space<vmem>>, vector<256x8xf32>
    %c4 = arith.constant 4 : index
    %c0_22 = arith.constant 0 : index
    %76 = vector.load %arg5[%c4, %c0_22] : memref<8x256xf32, #tpu.memory_space<vmem>>, vector<1x8xf32>
    %cst_23 = arith.constant dense<0.000000e+00> : vector<4x8xf32>
    %77 = tpu.matmul %74, %75, %cst_23 {dimension_numbers = #tpu.dot_dimension_numbers<[1], [0], [0], [1], [0, 0, 1, 1], [], []>} : vector<4x256xf32>, vector<256x8xf32>, vector<4x8xf32> -> vector<4x8xf32>
    %78 = vector.broadcast %76 : vector<1x8xf32> to vector<4x8xf32>
    %79 = arith.addf %77, %78 : vector<4x8xf32>
    %80 = vector.extract_strided_slice %74 {offsets = [0, 0], sizes = [2, 256], strides = [1, 1]} : vector<4x256xf32> to vector<2x256xf32>
    %81 = vector.extract_strided_slice %74 {offsets = [2, 0], sizes = [2, 256], strides = [1, 1]} : vector<4x256xf32> to vector<2x256xf32>
    %c128 = arith.constant 128 : index
    %c0_24 = arith.constant 0 : index
    %82 = vector.load %arg3[%c128, %c0_24] : memref<640x256xf32, #tpu.memory_space<vmem>>, vector<256x256xf32>
    %c384 = arith.constant 384 : index
    %c0_25 = arith.constant 0 : index
    %83 = vector.load %arg3[%c384, %c0_25] : memref<640x256xf32, #tpu.memory_space<vmem>>, vector<256x256xf32>
    %c2 = arith.constant 2 : index
    %c0_26 = arith.constant 0 : index
    %84 = vector.load %arg5[%c2, %c0_26] : memref<8x256xf32, #tpu.memory_space<vmem>>, vector<1x256xf32>
    %cst_27 = arith.constant dense<0.000000e+00> : vector<2x256xf32>
    %85 = tpu.matmul %80, %82, %cst_27 {dimension_numbers = #tpu.dot_dimension_numbers<[1], [0], [0], [1], [0, 0, 1, 1], [], []>} : vector<2x256xf32>, vector<256x256xf32>, vector<2x256xf32> -> vector<2x256xf32>
    %cst_28 = arith.constant dense<0.000000e+00> : vector<2x256xf32>
    %86 = tpu.matmul %81, %83, %cst_28 {dimension_numbers = #tpu.dot_dimension_numbers<[1], [0], [0], [1], [0, 0, 1, 1], [], []>} : vector<2x256xf32>, vector<256x256xf32>, vector<2x256xf32> -> vector<2x256xf32>
    %87 = arith.addf %85, %86 : vector<2x256xf32>
    %88 = vector.broadcast %84 : vector<1x256xf32> to vector<2x256xf32>
    %89 = arith.addf %87, %88 : vector<2x256xf32>
    %cst_29 = arith.constant dense<0.000000e+00> : vector<2xf32>
    %90 = vector.multi_reduction <add>, %89, %cst_29 [1] : vector<2x256xf32> to vector<2xf32>
    %91 = vector.shape_cast %90 : vector<2xf32> to vector<2x1xf32>
    %cst_30 = arith.constant 2.560000e+02 : f32
    %92 = vector.broadcast %cst_30 : f32 to vector<2x1xf32>
    %93 = arith.divf %91, %92 : vector<2x1xf32>
    %94 = vector.broadcast %93 : vector<2x1xf32> to vector<2x256xf32>
    %95 = arith.subf %89, %94 : vector<2x256xf32>
    %96 = arith.mulf %95, %95 : vector<2x256xf32>
    %cst_31 = arith.constant dense<0.000000e+00> : vector<2xf32>
    %97 = vector.multi_reduction <add>, %96, %cst_31 [1] : vector<2x256xf32> to vector<2xf32>
    %98 = vector.shape_cast %97 : vector<2xf32> to vector<2x1xf32>
    %cst_32 = arith.constant 2.560000e+02 : f32
    %99 = vector.broadcast %cst_32 : f32 to vector<2x1xf32>
    %100 = arith.divf %98, %99 : vector<2x1xf32>
    %101 = vector.broadcast %93 : vector<2x1xf32> to vector<2x256xf32>
    %102 = arith.subf %89, %101 : vector<2x256xf32>
    %cst_33 = arith.constant 9.99999974E-6 : f32
    %103 = vector.broadcast %cst_33 : f32 to vector<2x1xf32>
    %104 = arith.addf %100, %103 : vector<2x1xf32>
    %105 = math.rsqrt %104 : vector<2x1xf32>
    %106 = vector.broadcast %105 : vector<2x1xf32> to vector<2x256xf32>
    %107 = arith.mulf %102, %106 : vector<2x256xf32>
    %cst_34 = arith.constant 0.000000e+00 : f32
    %108 = vector.broadcast %cst_34 : f32 to vector<2x256xf32>
    %109 = arith.cmpf ogt, %107, %108 : vector<2x256xf32>
    %cst_35 = arith.constant 0.00999999977 : f32
    %110 = vector.broadcast %cst_35 : f32 to vector<2x256xf32>
    %111 = arith.mulf %110, %107 : vector<2x256xf32>
    %112 = arith.select %109, %107, %111 : vector<2x256xi1>, vector<2x256xf32>
    %c128_36 = arith.constant 128 : index
    %c0_37 = arith.constant 0 : index
    %113 = vector.load %arg2[%c128_36, %c0_37] : memref<384x128xf32, #tpu.memory_space<vmem>>, vector<256x128xf32>
    %c3 = arith.constant 3 : index
    %c0_38 = arith.constant 0 : index
    %114 = vector.load %arg5[%c3, %c0_38] : memref<8x256xf32, #tpu.memory_space<vmem>>, vector<1x128xf32>
    %cst_39 = arith.constant dense<0.000000e+00> : vector<2x128xf32>
    %115 = tpu.matmul %112, %113, %cst_39 {dimension_numbers = #tpu.dot_dimension_numbers<[1], [0], [0], [1], [0, 0, 1, 1], [], []>} : vector<2x256xf32>, vector<256x128xf32>, vector<2x128xf32> -> vector<2x128xf32>
    %116 = vector.broadcast %114 : vector<1x128xf32> to vector<2x128xf32>
    %117 = arith.addf %115, %116 : vector<2x128xf32>
    %cst_40 = arith.constant dense<0.000000e+00> : vector<2xf32>
    %118 = vector.multi_reduction <add>, %117, %cst_40 [1] : vector<2x128xf32> to vector<2xf32>
    %119 = vector.shape_cast %118 : vector<2xf32> to vector<2x1xf32>
    %cst_41 = arith.constant 1.280000e+02 : f32
    %120 = vector.broadcast %cst_41 : f32 to vector<2x1xf32>
    %121 = arith.divf %119, %120 : vector<2x1xf32>
    %122 = vector.broadcast %121 : vector<2x1xf32> to vector<2x128xf32>
    %123 = arith.subf %117, %122 : vector<2x128xf32>
    %124 = arith.mulf %123, %123 : vector<2x128xf32>
    %cst_42 = arith.constant dense<0.000000e+00> : vector<2xf32>
    %125 = vector.multi_reduction <add>, %124, %cst_42 [1] : vector<2x128xf32> to vector<2xf32>
    %126 = vector.shape_cast %125 : vector<2xf32> to vector<2x1xf32>
    %cst_43 = arith.constant 1.280000e+02 : f32
    %127 = vector.broadcast %cst_43 : f32 to vector<2x1xf32>
    %128 = arith.divf %126, %127 : vector<2x1xf32>
    %129 = vector.broadcast %121 : vector<2x1xf32> to vector<2x128xf32>
    %130 = arith.subf %117, %129 : vector<2x128xf32>
    %cst_44 = arith.constant 9.99999974E-6 : f32
    %131 = vector.broadcast %cst_44 : f32 to vector<2x1xf32>
    %132 = arith.addf %128, %131 : vector<2x1xf32>
    %133 = math.rsqrt %132 : vector<2x1xf32>
    %134 = vector.broadcast %133 : vector<2x1xf32> to vector<2x128xf32>
    %135 = arith.mulf %130, %134 : vector<2x128xf32>
    %cst_45 = arith.constant 0.000000e+00 : f32
    %136 = vector.broadcast %cst_45 : f32 to vector<2x128xf32>
    %137 = arith.cmpf ogt, %135, %136 : vector<2x128xf32>
    %cst_46 = arith.constant 0.00999999977 : f32
    %138 = vector.broadcast %cst_46 : f32 to vector<2x128xf32>
    %139 = arith.mulf %138, %135 : vector<2x128xf32>
    %140 = arith.select %137, %135, %139 : vector<2x128xi1>, vector<2x128xf32>
    %c256 = arith.constant 256 : index
    %c0_47 = arith.constant 0 : index
    %141 = vector.load %arg4[%c256, %c0_47] : memref<384x8xf32, #tpu.memory_space<vmem>>, vector<128x8xf32>
    %c5 = arith.constant 5 : index
    %c0_48 = arith.constant 0 : index
    %142 = vector.load %arg5[%c5, %c0_48] : memref<8x256xf32, #tpu.memory_space<vmem>>, vector<1x8xf32>
    %cst_49 = arith.constant dense<0.000000e+00> : vector<2x8xf32>
    %143 = tpu.matmul %140, %141, %cst_49 {dimension_numbers = #tpu.dot_dimension_numbers<[1], [0], [0], [1], [0, 0, 1, 1], [], []>} : vector<2x128xf32>, vector<128x8xf32>, vector<2x8xf32> -> vector<2x8xf32>
    %144 = vector.broadcast %142 : vector<1x8xf32> to vector<2x8xf32>
    %145 = arith.addf %143, %144 : vector<2x8xf32>
    %cst_50 = arith.constant 0.000000e+00 : f32
    %146 = vector.broadcast %cst_50 : f32 to vector<8x128xf32>
    %c0_51 = arith.constant 0 : index
    %c0_52 = arith.constant 0 : index
    %147 = vector.load %arg6[%c0_51, %c0_52] : memref<8x128xf32, #tpu.memory_space<vmem>>, vector<8x128xf32>
    tpu.vector_store %arg6[%c0_51, %c0_52], %146 {strides = array<i32>} : memref<8x128xf32, #tpu.memory_space<vmem>>, vector<8x128xf32>,
    %c0_53 = arith.constant 0 : index
    %c0_54 = arith.constant 0 : index
    %148 = vector.load %arg6[%c0_53, %c0_54] : memref<8x128xf32, #tpu.memory_space<vmem>>, vector<2x8xf32>
    tpu.vector_store %arg6[%c0_53, %c0_54], %145 {strides = array<i32>} : memref<8x128xf32, #tpu.memory_space<vmem>>, vector<2x8xf32>,
    %c2_55 = arith.constant 2 : index
    %c0_56 = arith.constant 0 : index
    %149 = vector.load %arg6[%c2_55, %c0_56] : memref<8x128xf32, #tpu.memory_space<vmem>>, vector<4x8xf32>
    tpu.vector_store %arg6[%c2_55, %c0_56], %79 {strides = array<i32>} : memref<8x128xf32, #tpu.memory_space<vmem>>, vector<4x8xf32>,
    return
  }
}

</mosaic_0001>

<llo_original>
// kernel: pointnetv2_treg_forward.1
$region0: #{pointnetv2_treg_forward.1}
  #allocation0 [shape = 'u32[]', space=smem, size = 0x4, offset = 0x4, fixed_abs, tag = 'smem constant byte address 0x4 - core index']
  #allocation1 [shape = 'u32[144,128]{1,0:T(1,128)}', space=vmem, size = 0x12000, scoped, tag = 'internal scratch']
  %s0 = inlined_call_operand.vmem [shape: f32[2,3,128], index: 0, kind: input, shape index: {}]
  %s1 = inlined_call_operand.vmem [shape: f32[2,3,128], index: 1, kind: input, shape index: {}]
  %s2 = inlined_call_operand.vmem [shape: f32[384,128], index: 2, kind: input, shape index: {}]
  %s3 = inlined_call_operand.hbm [shape: f32[640,256], index: 3, kind: input, shape index: {}]
  %s4 = inlined_call_operand.vmem [shape: f32[384,8], index: 4, kind: input, shape index: {}]
  %s5 = inlined_call_operand.vmem [shape: f32[8,256], index: 5, kind: input, shape index: {}]
  %s6 = inlined_call_operand.vmem [shape: f32[8,128], index: 6, kind: output, shape index: {}]
  %s7 = sld [smem:[#allocation0]]
  $region38: #{pointnetv2_treg_forward.1} parent=0
    _
  %s9 = ssub.s32 1, %s7
  %s10 = scalar_select 0, %s9, %s7
  $region1: #{pointnetv2_treg_forward.1} parent=0
    #allocation2 [shape = 'u8[655360]{0}', space=vmem, size = 0xa0000, scoped, tag = 'input window, operand 3, single buffered']
    #allocation3 [shape = 's32[1]{0}', space=sflag, size = 0x4, scoped, tag = 'scoped memory for pointnetv2_treg_forward.1']
    %11 = vsyncpa [#allocation3], 0
    // Predicated region
    $region2: #{pointnetv2_treg_forward.1} parent=1 // pred_check
      _
    $region3: #{pointnetv2_treg_forward.1} parent=1 // pred_check_branch
      %13 = sbr.rel (0) target = $region5
    $region4: #{pointnetv2_treg_forward.1} parent=1 // pred_region
      _
    $region5: #{pointnetv2_treg_forward.1} parent=1 // pred_fallthru
      _
    // Predicated region
    $region6: #{pointnetv2_treg_forward.1} parent=1 // pred_check
      _
    $region7: #{pointnetv2_treg_forward.1} parent=1 // pred_check_branch
      %15 = sbr.rel (0) target = $region9
    $region8: #{pointnetv2_treg_forward.1} parent=1 // pred_region
      _
    $region9: #{pointnetv2_treg_forward.1} parent=1 // pred_fallthru
      _
    // Predicated region
    $region10: #{pointnetv2_treg_forward.1} parent=1 // pred_check
      _
    $region11: #{pointnetv2_treg_forward.1} parent=1 // pred_check_branch
      %17 = sbr.rel (0) target = $region13
    $region12: #{pointnetv2_treg_forward.1} parent=1 // pred_region
      _
    $region13: #{pointnetv2_treg_forward.1} parent=1 // pred_fallthru
      _
    // Predicated region
    $region14: #{pointnetv2_treg_forward.1} parent=1 // pred_check
      _
    $region15: #{pointnetv2_treg_forward.1} parent=1 // pred_check_branch
      %19 = sbr.rel (0) target = $region17
    $region16: #{pointnetv2_treg_forward.1} parent=1 // pred_region
      %s21 = ssub.s32 20480, 20480
      %22 = vsyncadd [#allocation3], %s21
      %s23 = sshll.u32 [#allocation2], 4
      %s24 = int_to_ptr.vmem [resolvable:$true] %s23
      %29 = dma.hbm_to_vmem [thread:$0]  %s3, 20480, %s24, [#allocation3], 256, 256, 16
    $region17: #{pointnetv2_treg_forward.1} parent=1 // pred_fallthru
      _
    // Predicated region
    $region18: #{pointnetv2_treg_forward.1} parent=1 // pred_check
      _
    $region19: #{pointnetv2_treg_forward.1} parent=1 // pred_check_branch
      %31 = sbr.rel (0) target = $region21
    $region20: #{pointnetv2_treg_forward.1} parent=1 // pred_region
      _
    $region21: #{pointnetv2_treg_forward.1} parent=1 // pred_fallthru
      _
    // Predicated region
    $region22: #{pointnetv2_treg_forward.1} parent=1 // pred_check
      _
    $region23: #{pointnetv2_treg_forward.1} parent=1 // pred_check_branch
      %33 = sbr.rel (0) target = $region25
    $region24: #{pointnetv2_treg_forward.1} parent=1 // pred_region
      _
    $region25: #{pointnetv2_treg_forward.1} parent=1 // pred_fallthru
      _
    // Predicated region
    $region26: #{pointnetv2_treg_forward.1} parent=1 // pred_check
      _
    $region27: #{pointnetv2_treg_forward.1} parent=1 // pred_check_branch
      %35 = sbr.rel (0) target = $region29
    $region28: #{pointnetv2_treg_forward.1} parent=1 // pred_region
      %36 = dma.done [#allocation3], 20480
    $region29: #{pointnetv2_treg_forward.1} parent=1 // pred_fallthru
      _
    %v37 = vld [vmem:[%s0] sm:$0x7]
    %v38 = vld [vmem:[%s0 + $0x4] sm:$0x7]
    %v39 = vld [vmem:[%s1] sm:$0x7]
    %v40 = vld [vmem:[%s1 + $0x4] sm:$0x7]
    %vm41 = vcmask 1042432
    %v42 = vsel %vm41, %v37, 0.0
    %43 = vadd.xlane.f32.xlu0 %v42
    %v44 = vpop.xlane.xlu0 %43
    %v45 = vsel %vm41, %v38, 0.0
    %46 = vadd.xlane.f32.xlu0 %v45
    %v47 = vpop.xlane.xlu0 %46
    %v48 = vsel %vm41, %v39, 0.0
    %49 = vadd.xlane.f32.xlu0 %v48
    %v50 = vpop.xlane.xlu0 %49
    %v51 = vsel %vm41, %v40, 0.0
    %52 = vadd.xlane.f32.xlu0 %v51
    %v53 = vpop.xlane.xlu0 %52
    %v54 = vrcp.pop 128.0
    %v55 = vmul.f32 %v44, %v54
    %v56 = vmul.f32 %v47, %v54
    %v57 = vmul.f32 %v50, %v54
    %v58 = vmul.f32 %v53, %v54
    %v59 = vld [vmem:[%s2] sm:$0xff]
    %v60 = vld [vmem:[%s2 + $0x8] sm:$0xff]
    %v61 = vld [vmem:[%s2 + $0x10] sm:$0xff]
    %v62 = vld [vmem:[%s2 + $0x18] sm:$0xff]
    %v63 = vld [vmem:[%s2 + $0x20] sm:$0xff]
    %v64 = vld [vmem:[%s2 + $0x28] sm:$0xff]
    %v65 = vld [vmem:[%s2 + $0x30] sm:$0xff]
    %v66 = vld [vmem:[%s2 + $0x38] sm:$0xff]
    %v67 = vlaneseq
    %v68 = vshrl.u32 %v67, 7
    %v69 = vsub.s32 0, %v68
    %v70 = vrot.slane %v55, %v69
    %v71 = vlaneseq
    %v72 = vshrl.u32 %v71, 7
    %v73 = vsub.s32 0, %v72
    %v74 = vrot.slane %v56, %v73
    %v75 = vlaneseq
    %v76 = vshrl.u32 %v75, 7
    %v77 = vsub.s32 0, %v76
    %v78 = vrot.slane %v57, %v77
    %v79 = vlaneseq
    %v80 = vshrl.u32 %v79, 7
    %v81 = vsub.s32 0, %v80
    %v82 = vrot.slane %v58, %v81
    %v83 = vmul.f32 %v59, %v70
    %v84 = vmul.f32 %v60, %v70
    %v85 = vmul.f32 %v61, %v70
    %v86 = vmul.f32 %v62, %v70
    %v87 = vmul.f32 %v63, %v70
    %v88 = vmul.f32 %v64, %v70
    %v89 = vmul.f32 %v65, %v70
    %v90 = vmul.f32 %v66, %v70
    %v91 = vmul.f32 %v59, %v74
    %v92 = vmul.f32 %v60, %v74
    %v93 = vmul.f32 %v61, %v74
    %v94 = vmul.f32 %v62, %v74
    %v95 = vmul.f32 %v63, %v74
    %v96 = vmul.f32 %v64, %v74
    %v97 = vmul.f32 %v65, %v74
    %v98 = vmul.f32 %v66, %v74
    %v99 = vmul.f32 %v59, %v78
    %v100 = vmul.f32 %v60, %v78
    %v101 = vmul.f32 %v61, %v78
    %v102 = vmul.f32 %v62, %v78
    %v103 = vmul.f32 %v63, %v78
    %v104 = vmul.f32 %v64, %v78
    %v105 = vmul.f32 %v65, %v78
    %v106 = vmul.f32 %v66, %v78
    %v107 = vmul.f32 %v59, %v82
    %v108 = vmul.f32 %v60, %v82
    %v109 = vmul.f32 %v61, %v82
    %v110 = vmul.f32 %v62, %v82
    %v111 = vmul.f32 %v63, %v82
    %v112 = vmul.f32 %v64, %v82
    %v113 = vmul.f32 %v65, %v82
    %v114 = vmul.f32 %v66, %v82
    %147 = vrot.lane.b32.xlu0 %v83, 3
    %v148 = vpop.permute.xlu0 %147
    %149 = vrot.lane.b32.xlu0 %v84, 3
    %v150 = vpop.permute.xlu0 %149
    %151 = vrot.lane.b32.xlu0 %v85, 3
    %v152 = vpop.permute.xlu0 %151
    %153 = vrot.lane.b32.xlu0 %v86, 3
    %v154 = vpop.permute.xlu0 %153
    %155 = vrot.lane.b32.xlu0 %v87, 3
    %v156 = vpop.permute.xlu0 %155
    %157 = vrot.lane.b32.xlu0 %v88, 3
    %v158 = vpop.permute.xlu0 %157
    %159 = vrot.lane.b32.xlu0 %v89, 3
    %v160 = vpop.permute.xlu0 %159
    %161 = vrot.lane.b32.xlu0 %v90, 3
    %v162 = vpop.permute.xlu0 %161
    %163 = vrot.lane.b32.xlu0 %v91, 3
    %v164 = vpop.permute.xlu0 %163
    %165 = vrot.lane.b32.xlu0 %v92, 3
    %v166 = vpop.permute.xlu0 %165
    %167 = vrot.lane.b32.xlu0 %v93, 3
    %v168 = vpop.permute.xlu0 %167
    %169 = vrot.lane.b32.xlu0 %v94, 3
    %v170 = vpop.permute.xlu0 %169
    %171 = vrot.lane.b32.xlu0 %v95, 3
    %v172 = vpop.permute.xlu0 %171
    %173 = vrot.lane.b32.xlu0 %v96, 3
    %v174 = vpop.permute.xlu0 %173
    %175 = vrot.lane.b32.xlu0 %v97, 3
    %v176 = vpop.permute.xlu0 %175
    %177 = vrot.lane.b32.xlu0 %v98, 3
    %v178 = vpop.permute.xlu0 %177
    %179 = vrot.lane.b32.xlu0 %v99, 3
    %v180 = vpop.permute.xlu0 %179
    %181 = vrot.lane.b32.xlu0 %v100, 3
    %v182 = vpop.permute.xlu0 %181
    %183 = vrot.lane.b32.xlu0 %v101, 3
    %v184 = vpop.permute.xlu0 %183
    %185 = vrot.lane.b32.xlu0 %v102, 3
    %v186 = vpop.permute.xlu0 %185
    %187 = vrot.lane.b32.xlu0 %v103, 3
    %v188 = vpop.permute.xlu0 %187
    %189 = vrot.lane.b32.xlu0 %v104, 3
    %v190 = vpop.permute.xlu0 %189
    %191 = vrot.lane.b32.xlu0 %v105, 3
    %v192 = vpop.permute.xlu0 %191
    %193 = vrot.lane.b32.xlu0 %v106, 3
    %v194 = vpop.permute.xlu0 %193
    %195 = vrot.lane.b32.xlu0 %v107, 3
    %v196 = vpop.permute.xlu0 %195
    %197 = vrot.lane.b32.xlu0 %v108, 3
    %v198 = vpop.permute.xlu0 %197
    %199 = vrot.lane.b32.xlu0 %v109, 3
    %v200 = vpop.permute.xlu0 %199
    %201 = vrot.lane.b32.xlu0 %v110, 3
    %v202 = vpop.permute.xlu0 %201
    %203 = vrot.lane.b32.xlu0 %v111, 3
    %v204 = vpop.permute.xlu0 %203
    %205 = vrot.lane.b32.xlu0 %v112, 3
    %v206 = vpop.permute.xlu0 %205
    %207 = vrot.lane.b32.xlu0 %v113, 3
    %v208 = vpop.permute.xlu0 %207
    %209 = vrot.lane.b32.xlu0 %v114, 3
    %v210 = vpop.permute.xlu0 %209
    %v243 = vadd.f32 %v59, %v148
    %v244 = vadd.f32 %v60, %v150
    %v245 = vadd.f32 %v61, %v152
    %v246 = vadd.f32 %v62, %v154
    %v247 = vadd.f32 %v63, %v156
    %v248 = vadd.f32 %v64, %v158
    %v249 = vadd.f32 %v65, %v160
    %v250 = vadd.f32 %v66, %v162
    %v251 = vadd.f32 %v59, %v164
    %v252 = vadd.f32 %v60, %v166
    %v253 = vadd.f32 %v61, %v168
    %v254 = vadd.f32 %v62, %v170
    %v255 = vadd.f32 %v63, %v172
    %v256 = vadd.f32 %v64, %v174
    %v257 = vadd.f32 %v65, %v176
    %v258 = vadd.f32 %v66, %v178
    %v259 = vadd.f32 %v59, %v180
    %v260 = vadd.f32 %v60, %v182
    %v261 = vadd.f32 %v61, %v184
    %v262 = vadd.f32 %v62, %v186
    %v263 = vadd.f32 %v63, %v188
    %v264 = vadd.f32 %v64, %v190
    %v265 = vadd.f32 %v65, %v192
    %v266 = vadd.f32 %v66, %v194
    %v267 = vadd.f32 %v59, %v196
    %v268 = vadd.f32 %v60, %v198
    %v269 = vadd.f32 %v61, %v200
    %v270 = vadd.f32 %v62, %v202
    %v271 = vadd.f32 %v63, %v204
    %v272 = vadd.f32 %v64, %v206
    %v273 = vadd.f32 %v65, %v208
    %v274 = vadd.f32 %v66, %v210
    %v275 = vlaneseq
    %v276 = vshrl.u32 %v275, 7
    %v277 = vsub.s32 1, %v276
    %v278 = vrot.slane %v55, %v277
    %v279 = vlaneseq
    %v280 = vshrl.u32 %v279, 7
    %v281 = vsub.s32 1, %v280
    %v282 = vrot.slane %v56, %v281
    %v283 = vlaneseq
    %v284 = vshrl.u32 %v283, 7
    %v285 = vsub.s32 1, %v284
    %v286 = vrot.slane %v57, %v285
    %v287 = vlaneseq
    %v288 = vshrl.u32 %v287, 7
    %v289 = vsub.s32 1, %v288
    %v290 = vrot.slane %v58, %v289
    %v291 = vmul.f32 %v59, %v278
    %v292 = vmul.f32 %v60, %v278
    %v293 = vmul.f32 %v61, %v278
    %v294 = vmul.f32 %v62, %v278
    %v295 = vmul.f32 %v63, %v278
    %v296 = vmul.f32 %v64, %v278
    %v297 = vmul.f32 %v65, %v278
    %v298 = vmul.f32 %v66, %v278
    %v299 = vmul.f32 %v59, %v282
    %v300 = vmul.f32 %v60, %v282
    %v301 = vmul.f32 %v61, %v282
    %v302 = vmul.f32 %v62, %v282
    %v303 = vmul.f32 %v63, %v282
    %v304 = vmul.f32 %v64, %v282
    %v305 = vmul.f32 %v65, %v282
    %v306 = vmul.f32 %v66, %v282
    %v307 = vmul.f32 %v59, %v286
    %v308 = vmul.f32 %v60, %v286
    %v309 = vmul.f32 %v61, %v286
    %v310 = vmul.f32 %v62, %v286
    %v311 = vmul.f32 %v63, %v286
    %v312 = vmul.f32 %v64, %v286
    %v313 = vmul.f32 %v65, %v286
    %v314 = vmul.f32 %v66, %v286
    %v315 = vmul.f32 %v59, %v290
    %v316 = vmul.f32 %v60, %v290
    %v317 = vmul.f32 %v61, %v290
    %v318 = vmul.f32 %v62, %v290
    %v319 = vmul.f32 %v63, %v290
    %v320 = vmul.f32 %v64, %v290
    %v321 = vmul.f32 %v65, %v290
    %v322 = vmul.f32 %v66, %v290
    %355 = vrot.lane.b32.xlu0 %v291, 2
    %v356 = vpop.permute.xlu0 %355
    %357 = vrot.lane.b32.xlu0 %v292, 2
    %v358 = vpop.permute.xlu0 %357
    %359 = vrot.lane.b32.xlu0 %v293, 2
    %v360 = vpop.permute.xlu0 %359
    %361 = vrot.lane.b32.xlu0 %v294, 2
    %v362 = vpop.permute.xlu0 %361
    %363 = vrot.lane.b32.xlu0 %v295, 2
    %v364 = vpop.permute.xlu0 %363
    %365 = vrot.lane.b32.xlu0 %v296, 2
    %v366 = vpop.permute.xlu0 %365
    %367 = vrot.lane.b32.xlu0 %v297, 2
    %v368 = vpop.permute.xlu0 %367
    %369 = vrot.lane.b32.xlu0 %v298, 2
    %v370 = vpop.permute.xlu0 %369
    %371 = vrot.lane.b32.xlu0 %v299, 2
    %v372 = vpop.permute.xlu0 %371
    %373 = vrot.lane.b32.xlu0 %v300, 2
    %v374 = vpop.permute.xlu0 %373
    %375 = vrot.lane.b32.xlu0 %v301, 2
    %v376 = vpop.permute.xlu0 %375
    %377 = vrot.lane.b32.xlu0 %v302, 2
    %v378 = vpop.permute.xlu0 %377
    %379 = vrot.lane.b32.xlu0 %v303, 2
    %v380 = vpop.permute.xlu0 %379
    %381 = vrot.lane.b32.xlu0 %v304, 2
    %v382 = vpop.permute.xlu0 %381
    %383 = vrot.lane.b32.xlu0 %v305, 2
    %v384 = vpop.permute.xlu0 %383
    %385 = vrot.lane.b32.xlu0 %v306, 2
    %v386 = vpop.permute.xlu0 %385
    %387 = vrot.lane.b32.xlu0 %v307, 2
    %v388 = vpop.permute.xlu0 %387
    %389 = vrot.lane.b32.xlu0 %v308, 2
    %v390 = vpop.permute.xlu0 %389
    %391 = vrot.lane.b32.xlu0 %v309, 2
    %v392 = vpop.permute.xlu0 %391
    %393 = vrot.lane.b32.xlu0 %v310, 2
    %v394 = vpop.permute.xlu0 %393
    %395 = vrot.lane.b32.xlu0 %v311, 2
    %v396 = vpop.permute.xlu0 %395
    %397 = vrot.lane.b32.xlu0 %v312, 2
    %v398 = vpop.permute.xlu0 %397
    %399 = vrot.lane.b32.xlu0 %v313, 2
    %v400 = vpop.permute.xlu0 %399
    %401 = vrot.lane.b32.xlu0 %v314, 2
    %v402 = vpop.permute.xlu0 %401
    %403 = vrot.lane.b32.xlu0 %v315, 2
    %v404 = vpop.permute.xlu0 %403
    %405 = vrot.lane.b32.xlu0 %v316, 2
    %v406 = vpop.permute.xlu0 %405
    %407 = vrot.lane.b32.xlu0 %v317, 2
    %v408 = vpop.permute.xlu0 %407
    %409 = vrot.lane.b32.xlu0 %v318, 2
    %v410 = vpop.permute.xlu0 %409
    %411 = vrot.lane.b32.xlu0 %v319, 2
    %v412 = vpop.permute.xlu0 %411
    %413 = vrot.lane.b32.xlu0 %v320, 2
    %v414 = vpop.permute.xlu0 %413
    %415 = vrot.lane.b32.xlu0 %v321, 2
    %v416 = vpop.permute.xlu0 %415
    %417 = vrot.lane.b32.xlu0 %v322, 2
    %v418 = vpop.permute.xlu0 %417
    %v451 = vadd.f32 %v243, %v356
    %v452 = vadd.f32 %v244, %v358
    %v453 = vadd.f32 %v245, %v360
    %v454 = vadd.f32 %v246, %v362
    %v455 = vadd.f32 %v247, %v364
    %v456 = vadd.f32 %v248, %v366
    %v457 = vadd.f32 %v249, %v368
    %v458 = vadd.f32 %v250, %v370
    %v459 = vadd.f32 %v251, %v372
    %v460 = vadd.f32 %v252, %v374
    %v461 = vadd.f32 %v253, %v376
    %v462 = vadd.f32 %v254, %v378
    %v463 = vadd.f32 %v255, %v380
    %v464 = vadd.f32 %v256, %v382
    %v465 = vadd.f32 %v257, %v384
    %v466 = vadd.f32 %v258, %v386
    %v467 = vadd.f32 %v259, %v388
    %v468 = vadd.f32 %v260, %v390
    %v469 = vadd.f32 %v261, %v392
    %v470 = vadd.f32 %v262, %v394
    %v471 = vadd.f32 %v263, %v396
    %v472 = vadd.f32 %v264, %v398
    %v473 = vadd.f32 %v265, %v400
    %v474 = vadd.f32 %v266, %v402
    %v475 = vadd.f32 %v267, %v404
    %v476 = vadd.f32 %v268, %v406
    %v477 = vadd.f32 %v269, %v408
    %v478 = vadd.f32 %v270, %v410
    %v479 = vadd.f32 %v271, %v412
    %v480 = vadd.f32 %v272, %v414
    %v481 = vadd.f32 %v273, %v416
    %v482 = vadd.f32 %v274, %v418
    %v483 = vlaneseq
    %v484 = vshrl.u32 %v483, 7
    %v485 = vsub.s32 2, %v484
    %v486 = vrot.slane %v55, %v485
    %v487 = vlaneseq
    %v488 = vshrl.u32 %v487, 7
    %v489 = vsub.s32 2, %v488
    %v490 = vrot.slane %v56, %v489
    %v491 = vlaneseq
    %v492 = vshrl.u32 %v491, 7
    %v493 = vsub.s32 2, %v492
    %v494 = vrot.slane %v57, %v493
    %v495 = vlaneseq
    %v496 = vshrl.u32 %v495, 7
    %v497 = vsub.s32 2, %v496
    %v498 = vrot.slane %v58, %v497
    %v499 = vmul.f32 %v59, %v486
    %v500 = vmul.f32 %v60, %v486
    %v501 = vmul.f32 %v61, %v486
    %v502 = vmul.f32 %v62, %v486
    %v503 = vmul.f32 %v63, %v486
    %v504 = vmul.f32 %v64, %v486
    %v505 = vmul.f32 %v65, %v486
    %v506 = vmul.f32 %v66, %v486
    %v507 = vmul.f32 %v59, %v490
    %v508 = vmul.f32 %v60, %v490
    %v509 = vmul.f32 %v61, %v490
    %v510 = vmul.f32 %v62, %v490
    %v511 = vmul.f32 %v63, %v490
    %v512 = vmul.f32 %v64, %v490
    %v513 = vmul.f32 %v65, %v490
    %v514 = vmul.f32 %v66, %v490
    %v515 = vmul.f32 %v59, %v494
    %v516 = vmul.f32 %v60, %v494
    %v517 = vmul.f32 %v61, %v494
    %v518 = vmul.f32 %v62, %v494
    %v519 = vmul.f32 %v63, %v494
    %v520 = vmul.f32 %v64, %v494
    %v521 = vmul.f32 %v65, %v494
    %v522 = vmul.f32 %v66, %v494
    %v523 = vmul.f32 %v59, %v498
    %v524 = vmul.f32 %v60, %v498
    %v525 = vmul.f32 %v61, %v498
    %v526 = vmul.f32 %v62, %v498
    %v527 = vmul.f32 %v63, %v498
    %v528 = vmul.f32 %v64, %v498
    %v529 = vmul.f32 %v65, %v498
    %v530 = vmul.f32 %v66, %v498
    %563 = vrot.lane.b32.xlu0 %v499, 1
    %v564 = vpop.permute.xlu0 %563
    %565 = vrot.lane.b32.xlu0 %v500, 1
    %v566 = vpop.permute.xlu0 %565
    %567 = vrot.lane.b32.xlu0 %v501, 1
    %v568 = vpop.permute.xlu0 %567
    %569 = vrot.lane.b32.xlu0 %v502, 1
    %v570 = vpop.permute.xlu0 %569
    %571 = vrot.lane.b32.xlu0 %v503, 1
    %v572 = vpop.permute.xlu0 %571
    %573 = vrot.lane.b32.xlu0 %v504, 1
    %v574 = vpop.permute.xlu0 %573
    %575 = vrot.lane.b32.xlu0 %v505, 1
    %v576 = vpop.permute.xlu0 %575
    %577 = vrot.lane.b32.xlu0 %v506, 1
    %v578 = vpop.permute.xlu0 %577
    %579 = vrot.lane.b32.xlu0 %v507, 1
    %v580 = vpop.permute.xlu0 %579
    %581 = vrot.lane.b32.xlu0 %v508, 1
    %v582 = vpop.permute.xlu0 %581
    %583 = vrot.lane.b32.xlu0 %v509, 1
    %v584 = vpop.permute.xlu0 %583
    %585 = vrot.lane.b32.xlu0 %v510, 1
    %v586 = vpop.permute.xlu0 %585
    %587 = vrot.lane.b32.xlu0 %v511, 1
    %v588 = vpop.permute.xlu0 %587
    %589 = vrot.lane.b32.xlu0 %v512, 1
    %v590 = vpop.permute.xlu0 %589
    %591 = vrot.lane.b32.xlu0 %v513, 1
    %v592 = vpop.permute.xlu0 %591
    %593 = vrot.lane.b32.xlu0 %v514, 1
    %v594 = vpop.permute.xlu0 %593
    %595 = vrot.lane.b32.xlu0 %v515, 1
    %v596 = vpop.permute.xlu0 %595
    %597 = vrot.lane.b32.xlu0 %v516, 1
    %v598 = vpop.permute.xlu0 %597
    %599 = vrot.lane.b32.xlu0 %v517, 1
    %v600 = vpop.permute.xlu0 %599
    %601 = vrot.lane.b32.xlu0 %v518, 1
    %v602 = vpop.permute.xlu0 %601
    %603 = vrot.lane.b32.xlu0 %v519, 1
    %v604 = vpop.permute.xlu0 %603
    %605 = vrot.lane.b32.xlu0 %v520, 1
    %v606 = vpop.permute.xlu0 %605
    %607 = vrot.lane.b32.xlu0 %v521, 1
    %v608 = vpop.permute.xlu0 %607
    %609 = vrot.lane.b32.xlu0 %v522, 1
    %v610 = vpop.permute.xlu0 %609
    %611 = vrot.lane.b32.xlu0 %v523, 1
    %v612 = vpop.permute.xlu0 %611
    %613 = vrot.lane.b32.xlu0 %v524, 1
    %v614 = vpop.permute.xlu0 %613
    %615 = vrot.lane.b32.xlu0 %v525, 1
    %v616 = vpop.permute.xlu0 %615
    %617 = vrot.lane.b32.xlu0 %v526, 1
    %v618 = vpop.permute.xlu0 %617
    %619 = vrot.lane.b32.xlu0 %v527, 1
    %v620 = vpop.permute.xlu0 %619
    %621 = vrot.lane.b32.xlu0 %v528, 1
    %v622 = vpop.permute.xlu0 %621
    %623 = vrot.lane.b32.xlu0 %v529, 1
    %v624 = vpop.permute.xlu0 %623
    %625 = vrot.lane.b32.xlu0 %v530, 1
    %v626 = vpop.permute.xlu0 %625
    %v659 = vadd.f32 %v451, %v564
    %v660 = vadd.f32 %v452, %v566
    %v661 = vadd.f32 %v453, %v568
    %v662 = vadd.f32 %v454, %v570
    %v663 = vadd.f32 %v455, %v572
    %v664 = vadd.f32 %v456, %v574
    %v665 = vadd.f32 %v457, %v576
    %v666 = vadd.f32 %v458, %v578
    %v667 = vadd.f32 %v459, %v580
    %v668 = vadd.f32 %v460, %v582
    %v669 = vadd.f32 %v461, %v584
    %v670 = vadd.f32 %v462, %v586
    %v671 = vadd.f32 %v463, %v588
    %v672 = vadd.f32 %v464, %v590
    %v673 = vadd.f32 %v465, %v592
    %v674 = vadd.f32 %v466, %v594
    %v675 = vadd.f32 %v467, %v596
    %v676 = vadd.f32 %v468, %v598
    %v677 = vadd.f32 %v469, %v600
    %v678 = vadd.f32 %v470, %v602
    %v679 = vadd.f32 %v471, %v604
    %v680 = vadd.f32 %v472, %v606
    %v681 = vadd.f32 %v473, %v608
    %v682 = vadd.f32 %v474, %v610
    %v683 = vadd.f32 %v475, %v612
    %v684 = vadd.f32 %v476, %v614
    %v685 = vadd.f32 %v477, %v616
    %v686 = vadd.f32 %v478, %v618
    %v687 = vadd.f32 %v479, %v620
    %v688 = vadd.f32 %v480, %v622
    %v689 = vadd.f32 %v481, %v624
    %v690 = vadd.f32 %v482, %v626
    %692 = vset.pattern.permute.xlu0 0
    %693 = vperm.xlu0 %692, %v59
    %v694 = vpop.permute.xlu0 %693
    %697 = vset.pattern.permute.xlu0 0
    %698 = vperm.xlu0 %697, %v60
    %v699 = vpop.permute.xlu0 %698
    %702 = vset.pattern.permute.xlu0 0
    %703 = vperm.xlu0 %702, %v61
    %v704 = vpop.permute.xlu0 %703
    %707 = vset.pattern.permute.xlu0 0
    %708 = vperm.xlu0 %707, %v62
    %v709 = vpop.permute.xlu0 %708
    %712 = vset.pattern.permute.xlu0 0
    %713 = vperm.xlu0 %712, %v63
    %v714 = vpop.permute.xlu0 %713
    %717 = vset.pattern.permute.xlu0 0
    %718 = vperm.xlu0 %717, %v64
    %v719 = vpop.permute.xlu0 %718
    %722 = vset.pattern.permute.xlu0 0
    %723 = vperm.xlu0 %722, %v65
    %v724 = vpop.permute.xlu0 %723
    %727 = vset.pattern.permute.xlu0 0
    %728 = vperm.xlu0 %727, %v66
    %v729 = vpop.permute.xlu0 %728
    %v731 = vlaneseq
    %v732 = vshrl.u32 %v731, 7
    %v733 = vsub.s32 0, %v732
    %v734 = vrot.slane %v37, %v733
    %v735 = vlaneseq
    %v736 = vshrl.u32 %v735, 7
    %v737 = vsub.s32 0, %v736
    %v738 = vrot.slane %v38, %v737
    %v739 = vlaneseq
    %v740 = vshrl.u32 %v739, 7
    %v741 = vsub.s32 0, %v740
    %v742 = vrot.slane %v39, %v741
    %v743 = vlaneseq
    %v744 = vshrl.u32 %v743, 7
    %v745 = vsub.s32 0, %v744
    %v746 = vrot.slane %v40, %v745
    %v747 = vmul.f32 %v694, %v734
    %v748 = vmul.f32 %v699, %v734
    %v749 = vmul.f32 %v704, %v734
    %v750 = vmul.f32 %v709, %v734
    %v751 = vmul.f32 %v714, %v734
    %v752 = vmul.f32 %v719, %v734
    %v753 = vmul.f32 %v724, %v734
    %v754 = vmul.f32 %v729, %v734
    %v755 = vmul.f32 %v694, %v738
    %v756 = vmul.f32 %v699, %v738
    %v757 = vmul.f32 %v704, %v738
    %v758 = vmul.f32 %v709, %v738
    %v759 = vmul.f32 %v714, %v738
    %v760 = vmul.f32 %v719, %v738
    %v761 = vmul.f32 %v724, %v738
    %v762 = vmul.f32 %v729, %v738
    %v763 = vmul.f32 %v694, %v742
    %v764 = vmul.f32 %v699, %v742
    %v765 = vmul.f32 %v704, %v742
    %v766 = vmul.f32 %v709, %v742
    %v767 = vmul.f32 %v714, %v742
    %v768 = vmul.f32 %v719, %v742
    %v769 = vmul.f32 %v724, %v742
    %v770 = vmul.f32 %v729, %v742
    %v771 = vmul.f32 %v694, %v746
    %v772 = vmul.f32 %v699, %v746
    %v773 = vmul.f32 %v704, %v746
    %v774 = vmul.f32 %v709, %v746
    %v775 = vmul.f32 %v714, %v746
    %v776 = vmul.f32 %v719, %v746
    %v777 = vmul.f32 %v724, %v746
    %v778 = vmul.f32 %v729, %v746
    %780 = vset.pattern.permute.xlu0 6
    %781 = vperm.xlu0 %780, %v659
    %v782 = vpop.permute.xlu0 %781
    %785 = vset.pattern.permute.xlu0 6
    %786 = vperm.xlu0 %785, %v660
    %v787 = vpop.permute.xlu0 %786
    %790 = vset.pattern.permute.xlu0 6
    %791 = vperm.xlu0 %790, %v661
    %v792 = vpop.permute.xlu0 %791
    %795 = vset.pattern.permute.xlu0 6
    %796 = vperm.xlu0 %795, %v662
    %v797 = vpop.permute.xlu0 %796
    %800 = vset.pattern.permute.xlu0 6
    %801 = vperm.xlu0 %800, %v663
    %v802 = vpop.permute.xlu0 %801
    %805 = vset.pattern.permute.xlu0 6
    %806 = vperm.xlu0 %805, %v664
    %v807 = vpop.permute.xlu0 %806
    %810 = vset.pattern.permute.xlu0 6
    %811 = vperm.xlu0 %810, %v665
    %v812 = vpop.permute.xlu0 %811
    %815 = vset.pattern.permute.xlu0 6
    %816 = vperm.xlu0 %815, %v666
    %v817 = vpop.permute.xlu0 %816
    %820 = vset.pattern.permute.xlu0 6
    %821 = vperm.xlu0 %820, %v667
    %v822 = vpop.permute.xlu0 %821
    %825 = vset.pattern.permute.xlu0 6
    %826 = vperm.xlu0 %825, %v668
    %v827 = vpop.permute.xlu0 %826
    %830 = vset.pattern.permute.xlu0 6
    %831 = vperm.xlu0 %830, %v669
    %v832 = vpop.permute.xlu0 %831
    %835 = vset.pattern.permute.xlu0 6
    %836 = vperm.xlu0 %835, %v670
    %v837 = vpop.permute.xlu0 %836
    %840 = vset.pattern.permute.xlu0 6
    %841 = vperm.xlu0 %840, %v671
    %v842 = vpop.permute.xlu0 %841
    %845 = vset.pattern.permute.xlu0 6
    %846 = vperm.xlu0 %845, %v672
    %v847 = vpop.permute.xlu0 %846
    %850 = vset.pattern.permute.xlu0 6
    %851 = vperm.xlu0 %850, %v673
    %v852 = vpop.permute.xlu0 %851
    %855 = vset.pattern.permute.xlu0 6
    %856 = vperm.xlu0 %855, %v674
    %v857 = vpop.permute.xlu0 %856
    %860 = vset.pattern.permute.xlu0 6
    %861 = vperm.xlu0 %860, %v675
    %v862 = vpop.permute.xlu0 %861
    %865 = vset.pattern.permute.xlu0 6
    %866 = vperm.xlu0 %865, %v676
    %v867 = vpop.permute.xlu0 %866
    %870 = vset.pattern.permute.xlu0 6
    %871 = vperm.xlu0 %870, %v677
    %v872 = vpop.permute.xlu0 %871
    %875 = vset.pattern.permute.xlu0 6
    %876 = vperm.xlu0 %875, %v678
    %v877 = vpop.permute.xlu0 %876
    %880 = vset.pattern.permute.xlu0 6
    %881 = vperm.xlu0 %880, %v679
    %v882 = vpop.permute.xlu0 %881
    %885 = vset.pattern.permute.xlu0 6
    %886 = vperm.xlu0 %885, %v680
    %v887 = vpop.permute.xlu0 %886
    %890 = vset.pattern.permute.xlu0 6
    %891 = vperm.xlu0 %890, %v681
    %v892 = vpop.permute.xlu0 %891
    %895 = vset.pattern.permute.xlu0 6
    %896 = vperm.xlu0 %895, %v682
    %v897 = vpop.permute.xlu0 %896
    %900 = vset.pattern.permute.xlu0 6
    %901 = vperm.xlu0 %900, %v683
    %v902 = vpop.permute.xlu0 %901
    %905 = vset.pattern.permute.xlu0 6
    %906 = vperm.xlu0 %905, %v684
    %v907 = vpop.permute.xlu0 %906
    %910 = vset.pattern.permute.xlu0 6
    %911 = vperm.xlu0 %910, %v685
    %v912 = vpop.permute.xlu0 %911
    %915 = vset.pattern.permute.xlu0 6
    %916 = vperm.xlu0 %915, %v686
    %v917 = vpop.permute.xlu0 %916
    %920 = vset.pattern.permute.xlu0 6
    %921 = vperm.xlu0 %920, %v687
    %v922 = vpop.permute.xlu0 %921
    %925 = vset.pattern.permute.xlu0 6
    %926 = vperm.xlu0 %925, %v688
    %v927 = vpop.permute.xlu0 %926
    %930 = vset.pattern.permute.xlu0 6
    %931 = vperm.xlu0 %930, %v689
    %v932 = vpop.permute.xlu0 %931
    %935 = vset.pattern.permute.xlu0 6
    %936 = vperm.xlu0 %935, %v690
    %v937 = vpop.permute.xlu0 %936
    %v939 = vadd.f32 %v782, %v747
    %v940 = vadd.f32 %v787, %v748
    %v941 = vadd.f32 %v792, %v749
    %v942 = vadd.f32 %v797, %v750
    %v943 = vadd.f32 %v802, %v751
    %v944 = vadd.f32 %v807, %v752
    %v945 = vadd.f32 %v812, %v753
    %v946 = vadd.f32 %v817, %v754
    %v947 = vadd.f32 %v822, %v755
    %v948 = vadd.f32 %v827, %v756
    %v949 = vadd.f32 %v832, %v757
    %v950 = vadd.f32 %v837, %v758
    %v951 = vadd.f32 %v842, %v759
    %v952 = vadd.f32 %v847, %v760
    %v953 = vadd.f32 %v852, %v761
    %v954 = vadd.f32 %v857, %v762
    %v955 = vadd.f32 %v862, %v763
    %v956 = vadd.f32 %v867, %v764
    %v957 = vadd.f32 %v872, %v765
    %v958 = vadd.f32 %v877, %v766
    %v959 = vadd.f32 %v882, %v767
    %v960 = vadd.f32 %v887, %v768
    %v961 = vadd.f32 %v892, %v769
    %v962 = vadd.f32 %v897, %v770
    %v963 = vadd.f32 %v902, %v771
    %v964 = vadd.f32 %v907, %v772
    %v965 = vadd.f32 %v912, %v773
    %v966 = vadd.f32 %v917, %v774
    %v967 = vadd.f32 %v922, %v775
    %v968 = vadd.f32 %v927, %v776
    %v969 = vadd.f32 %v932, %v777
    %v970 = vadd.f32 %v937, %v778
    %971 = vset.pattern.permute.xlu0 1
    %972 = vperm.xlu0 %971, %v59
    %v973 = vpop.permute.xlu0 %972
    %975 = vset.pattern.permute.xlu0 1
    %976 = vperm.xlu0 %975, %v60
    %v977 = vpop.permute.xlu0 %976
    %979 = vset.pattern.permute.xlu0 1
    %980 = vperm.xlu0 %979, %v61
    %v981 = vpop.permute.xlu0 %980
    %983 = vset.pattern.permute.xlu0 1
    %984 = vperm.xlu0 %983, %v62
    %v985 = vpop.permute.xlu0 %984
    %987 = vset.pattern.permute.xlu0 1
    %988 = vperm.xlu0 %987, %v63
    %v989 = vpop.permute.xlu0 %988
    %991 = vset.pattern.permute.xlu0 1
    %992 = vperm.xlu0 %991, %v64
    %v993 = vpop.permute.xlu0 %992
    %995 = vset.pattern.permute.xlu0 1
    %996 = vperm.xlu0 %995, %v65
    %v997 = vpop.permute.xlu0 %996
    %999 = vset.pattern.permute.xlu0 1
    %1000 = vperm.xlu0 %999, %v66
    %v1001 = vpop.permute.xlu0 %1000
    %v1003 = vlaneseq
    %v1004 = vshrl.u32 %v1003, 7
    %v1005 = vsub.s32 1, %v1004
    %v1006 = vrot.slane %v37, %v1005
    %v1007 = vlaneseq
    %v1008 = vshrl.u32 %v1007, 7
    %v1009 = vsub.s32 1, %v1008
    %v1010 = vrot.slane %v38, %v1009
    %v1011 = vlaneseq
    %v1012 = vshrl.u32 %v1011, 7
    %v1013 = vsub.s32 1, %v1012
    %v1014 = vrot.slane %v39, %v1013
    %v1015 = vlaneseq
    %v1016 = vshrl.u32 %v1015, 7
    %v1017 = vsub.s32 1, %v1016
    %v1018 = vrot.slane %v40, %v1017
    %v1019 = vmul.f32 %v973, %v1006
    %v1020 = vmul.f32 %v977, %v1006
    %v1021 = vmul.f32 %v981, %v1006
    %v1022 = vmul.f32 %v985, %v1006
    %v1023 = vmul.f32 %v989, %v1006
    %v1024 = vmul.f32 %v993, %v1006
    %v1025 = vmul.f32 %v997, %v1006
    %v1026 = vmul.f32 %v1001, %v1006
    %v1027 = vmul.f32 %v973, %v1010
    %v1028 = vmul.f32 %v977, %v1010
    %v1029 = vmul.f32 %v981, %v1010
    %v1030 = vmul.f32 %v985, %v1010
    %v1031 = vmul.f32 %v989, %v1010
    %v1032 = vmul.f32 %v993, %v1010
    %v1033 = vmul.f32 %v997, %v1010
    %v1034 = vmul.f32 %v1001, %v1010
    %v1035 = vmul.f32 %v973, %v1014
    %v1036 = vmul.f32 %v977, %v1014
    %v1037 = vmul.f32 %v981, %v1014
    %v1038 = vmul.f32 %v985, %v1014
    %v1039 = vmul.f32 %v989, %v1014
    %v1040 = vmul.f32 %v993, %v1014
    %v1041 = vmul.f32 %v997, %v1014
    %v1042 = vmul.f32 %v1001, %v1014
    %v1043 = vmul.f32 %v973, %v1018
    %v1044 = vmul.f32 %v977, %v1018
    %v1045 = vmul.f32 %v981, %v1018
    %v1046 = vmul.f32 %v985, %v1018
    %v1047 = vmul.f32 %v989, %v1018
    %v1048 = vmul.f32 %v993, %v1018
    %v1049 = vmul.f32 %v997, %v1018
    %v1050 = vmul.f32 %v1001, %v1018
    %v1051 = vadd.f32 %v939, %v1019
    %v1052 = vadd.f32 %v940, %v1020
    %v1053 = vadd.f32 %v941, %v1021
    %v1054 = vadd.f32 %v942, %v1022
    %v1055 = vadd.f32 %v943, %v1023
    %v1056 = vadd.f32 %v944, %v1024
    %v1057 = vadd.f32 %v945, %v1025
    %v1058 = vadd.f32 %v946, %v1026
    %v1059 = vadd.f32 %v947, %v1027
    %v1060 = vadd.f32 %v948, %v1028
    %v1061 = vadd.f32 %v949, %v1029
    %v1062 = vadd.f32 %v950, %v1030
    %v1063 = vadd.f32 %v951, %v1031
    %v1064 = vadd.f32 %v952, %v1032
    %v1065 = vadd.f32 %v953, %v1033
    %v1066 = vadd.f32 %v954, %v1034
    %v1067 = vadd.f32 %v955, %v1035
    %v1068 = vadd.f32 %v956, %v1036
    %v1069 = vadd.f32 %v957, %v1037
    %v1070 = vadd.f32 %v958, %v1038
    %v1071 = vadd.f32 %v959, %v1039
    %v1072 = vadd.f32 %v960, %v1040
    %v1073 = vadd.f32 %v961, %v1041
    %v1074 = vadd.f32 %v962, %v1042
    %v1075 = vadd.f32 %v963, %v1043
    %v1076 = vadd.f32 %v964, %v1044
    %v1077 = vadd.f32 %v965, %v1045
    %v1078 = vadd.f32 %v966, %v1046
    %v1079 = vadd.f32 %v967, %v1047
    %v1080 = vadd.f32 %v968, %v1048
    %v1081 = vadd.f32 %v969, %v1049
    %v1082 = vadd.f32 %v970, %v1050
    %1083 = vset.pattern.permute.xlu0 2
    %1084 = vperm.xlu0 %1083, %v59
    %v1085 = vpop.permute.xlu0 %1084
    %1087 = vset.pattern.permute.xlu0 2
    %1088 = vperm.xlu0 %1087, %v60
    %v1089 = vpop.permute.xlu0 %1088
    %1091 = vset.pattern.permute.xlu0 2
    %1092 = vperm.xlu0 %1091, %v61
    %v1093 = vpop.permute.xlu0 %1092
    %1095 = vset.pattern.permute.xlu0 2
    %1096 = vperm.xlu0 %1095, %v62
    %v1097 = vpop.permute.xlu0 %1096
    %1099 = vset.pattern.permute.xlu0 2
    %1100 = vperm.xlu0 %1099, %v63
    %v1101 = vpop.permute.xlu0 %1100
    %1103 = vset.pattern.permute.xlu0 2
    %1104 = vperm.xlu0 %1103, %v64
    %v1105 = vpop.permute.xlu0 %1104
    %1107 = vset.pattern.permute.xlu0 2
    %1108 = vperm.xlu0 %1107, %v65
    %v1109 = vpop.permute.xlu0 %1108
    %1111 = vset.pattern.permute.xlu0 2
    %1112 = vperm.xlu0 %1111, %v66
    %v1113 = vpop.permute.xlu0 %1112
    %v1115 = vlaneseq
    %v1116 = vshrl.u32 %v1115, 7
    %v1117 = vsub.s32 2, %v1116
    %v1118 = vrot.slane %v37, %v1117
    %v1119 = vlaneseq
    %v1120 = vshrl.u32 %v1119, 7
    %v1121 = vsub.s32 2, %v1120
    %v1122 = vrot.slane %v38, %v1121
    %v1123 = vlaneseq
    %v1124 = vshrl.u32 %v1123, 7
    %v1125 = vsub.s32 2, %v1124
    %v1126 = vrot.slane %v39, %v1125
    %v1127 = vlaneseq
    %v1128 = vshrl.u32 %v1127, 7
    %v1129 = vsub.s32 2, %v1128
    %v1130 = vrot.slane %v40, %v1129
    %v1131 = vmul.f32 %v1085, %v1118
    %v1132 = vmul.f32 %v1089, %v1118
    %v1133 = vmul.f32 %v1093, %v1118
    %v1134 = vmul.f32 %v1097, %v1118
    %v1135 = vmul.f32 %v1101, %v1118
    %v1136 = vmul.f32 %v1105, %v1118
    %v1137 = vmul.f32 %v1109, %v1118
    %v1138 = vmul.f32 %v1113, %v1118
    %v1139 = vmul.f32 %v1085, %v1122
    %v1140 = vmul.f32 %v1089, %v1122
    %v1141 = vmul.f32 %v1093, %v1122
    %v1142 = vmul.f32 %v1097, %v1122
    %v1143 = vmul.f32 %v1101, %v1122
    %v1144 = vmul.f32 %v1105, %v1122
    %v1145 = vmul.f32 %v1109, %v1122
    %v1146 = vmul.f32 %v1113, %v1122
    %v1147 = vmul.f32 %v1085, %v1126
    %v1148 = vmul.f32 %v1089, %v1126
    %v1149 = vmul.f32 %v1093, %v1126
    %v1150 = vmul.f32 %v1097, %v1126
    %v1151 = vmul.f32 %v1101, %v1126
    %v1152 = vmul.f32 %v1105, %v1126
    %v1153 = vmul.f32 %v1109, %v1126
    %v1154 = vmul.f32 %v1113, %v1126
    %v1155 = vmul.f32 %v1085, %v1130
    %v1156 = vmul.f32 %v1089, %v1130
    %v1157 = vmul.f32 %v1093, %v1130
    %v1158 = vmul.f32 %v1097, %v1130
    %v1159 = vmul.f32 %v1101, %v1130
    %v1160 = vmul.f32 %v1105, %v1130
    %v1161 = vmul.f32 %v1109, %v1130
    %v1162 = vmul.f32 %v1113, %v1130
    %v1163 = vadd.f32 %v1051, %v1131
    %v1164 = vadd.f32 %v1052, %v1132
    %v1165 = vadd.f32 %v1053, %v1133
    %v1166 = vadd.f32 %v1054, %v1134
    %v1167 = vadd.f32 %v1055, %v1135
    %v1168 = vadd.f32 %v1056, %v1136
    %v1169 = vadd.f32 %v1057, %v1137
    %v1170 = vadd.f32 %v1058, %v1138
    %v1171 = vadd.f32 %v1059, %v1139
    %v1172 = vadd.f32 %v1060, %v1140
    %v1173 = vadd.f32 %v1061, %v1141
    %v1174 = vadd.f32 %v1062, %v1142
    %v1175 = vadd.f32 %v1063, %v1143
    %v1176 = vadd.f32 %v1064, %v1144
    %v1177 = vadd.f32 %v1065, %v1145
    %v1178 = vadd.f32 %v1066, %v1146
    %v1179 = vadd.f32 %v1067, %v1147
    %v1180 = vadd.f32 %v1068, %v1148
    %v1181 = vadd.f32 %v1069, %v1149
    %v1182 = vadd.f32 %v1070, %v1150
    %v1183 = vadd.f32 %v1071, %v1151
    %v1184 = vadd.f32 %v1072, %v1152
    %v1185 = vadd.f32 %v1073, %v1153
    %v1186 = vadd.f32 %v1074, %v1154
    %v1187 = vadd.f32 %v1075, %v1155
    %v1188 = vadd.f32 %v1076, %v1156
    %v1189 = vadd.f32 %v1077, %v1157
    %v1190 = vadd.f32 %v1078, %v1158
    %v1191 = vadd.f32 %v1079, %v1159
    %v1192 = vadd.f32 %v1080, %v1160
    %v1193 = vadd.f32 %v1081, %v1161
    %v1194 = vadd.f32 %v1082, %v1162
    %v1195 = vmax.f32 %v1163, 0.0
    %v1196 = vmax.f32 %v1164, 0.0
    %v1197 = vmax.f32 %v1165, 0.0
    %v1198 = vmax.f32 %v1166, 0.0
    %v1199 = vmax.f32 %v1167, 0.0
    %v1200 = vmax.f32 %v1168, 0.0
    %v1201 = vmax.f32 %v1169, 0.0
    %v1202 = vmax.f32 %v1170, 0.0
    %v1203 = vmax.f32 %v1171, 0.0
    %v1204 = vmax.f32 %v1172, 0.0
    %v1205 = vmax.f32 %v1173, 0.0
    %v1206 = vmax.f32 %v1174, 0.0
    %v1207 = vmax.f32 %v1175, 0.0
    %v1208 = vmax.f32 %v1176, 0.0
    %v1209 = vmax.f32 %v1177, 0.0
    %v1210 = vmax.f32 %v1178, 0.0
    %v1211 = vmax.f32 %v1179, 0.0
    %v1212 = vmax.f32 %v1180, 0.0
    %v1213 = vmax.f32 %v1181, 0.0
    %v1214 = vmax.f32 %v1182, 0.0
    %v1215 = vmax.f32 %v1183, 0.0
    %v1216 = vmax.f32 %v1184, 0.0
    %v1217 = vmax.f32 %v1185, 0.0
    %v1218 = vmax.f32 %v1186, 0.0
    %v1219 = vmax.f32 %v1187, 0.0
    %v1220 = vmax.f32 %v1188, 0.0
    %v1221 = vmax.f32 %v1189, 0.0
    %v1222 = vmax.f32 %v1190, 0.0
    %v1223 = vmax.f32 %v1191, 0.0
    %v1224 = vmax.f32 %v1192, 0.0
    %v1225 = vmax.f32 %v1193, 0.0
    %v1226 = vmax.f32 %v1194, 0.0
    %1227 = vxpose.xlu0.b32.start [1/16] %v1195, 128
    %1228 = vxpose.xlu0.b32.cont [2/16] %v1196, 128
    %1229 = vxpose.xlu0.b32.cont [3/16] %v1197, 128
    %1230 = vxpose.xlu0.b32.cont [4/16] %v1198, 128
    %1231 = vxpose.xlu0.b32.cont [5/16] %v1199, 128
    %1232 = vxpose.xlu0.b32.cont [6/16] %v1200, 128
    %1233 = vxpose.xlu0.b32.cont [7/16] %v1201, 128
    %1234 = vxpose.xlu0.b32.cont [8/16] %v1202, 128
    %1235 = vxpose.xlu0.b32.cont [9/16] 0.0, 128
    %1236 = vxpose.xlu0.b32.cont [10/16] 0.0, 128
    %1237 = vxpose.xlu0.b32.cont [11/16] 0.0, 128
    %1238 = vxpose.xlu0.b32.cont [12/16] 0.0, 128
    %1239 = vxpose.xlu0.b32.cont [13/16] 0.0, 128
    %1240 = vxpose.xlu0.b32.cont [14/16] 0.0, 128
    %1241 = vxpose.xlu0.b32.cont [15/16] 0.0, 128
    %1242 = vxpose.xlu0.b32.end [16/16] 0.0, 128
    %v1243 = vpop.trf.xlu0
    %v1244 = vpop.trf.xlu0
    %v1245 = vpop.trf.xlu0
    %v1246 = vpop.trf.xlu0
    %v1247 = vpop.trf.xlu0
    %v1248 = vpop.trf.xlu0
    %v1249 = vpop.trf.xlu0
    %v1250 = vpop.trf.xlu0
    %v1251 = vpop.trf.xlu0
    %v1252 = vpop.trf.xlu0
    %v1253 = vpop.trf.xlu0
    %v1254 = vpop.trf.xlu0
    %v1255 = vpop.trf.xlu0
    %v1256 = vpop.trf.xlu0
    %v1257 = vpop.trf.xlu0
    %v1258 = vpop.trf.xlu0
    %1259 = vxpose.xlu0.b32.start [1/16] %v1203, 128
    %1260 = vxpose.xlu0.b32.cont [2/16] %v1204, 128
    %1261 = vxpose.xlu0.b32.cont [3/16] %v1205, 128
    %1262 = vxpose.xlu0.b32.cont [4/16] %v1206, 128
    %1263 = vxpose.xlu0.b32.cont [5/16] %v1207, 128
    %1264 = vxpose.xlu0.b32.cont [6/16] %v1208, 128
    %1265 = vxpose.xlu0.b32.cont [7/16] %v1209, 128
    %1266 = vxpose.xlu0.b32.cont [8/16] %v1210, 128
    %1267 = vxpose.xlu0.b32.cont [9/16] 0.0, 128
    %1268 = vxpose.xlu0.b32.cont [10/16] 0.0, 128
    %1269 = vxpose.xlu0.b32.cont [11/16] 0.0, 128
    %1270 = vxpose.xlu0.b32.cont [12/16] 0.0, 128
    %1271 = vxpose.xlu0.b32.cont [13/16] 0.0, 128
    %1272 = vxpose.xlu0.b32.cont [14/16] 0.0, 128
    %1273 = vxpose.xlu0.b32.cont [15/16] 0.0, 128
    %1274 = vxpose.xlu0.b32.end [16/16] 0.0, 128
    %v1275 = vpop.trf.xlu0
    %v1276 = vpop.trf.xlu0
    %v1277 = vpop.trf.xlu0
    %v1278 = vpop.trf.xlu0
    %v1279 = vpop.trf.xlu0
    %v1280 = vpop.trf.xlu0
    %v1281 = vpop.trf.xlu0
    %v1282 = vpop.trf.xlu0
    %v1283 = vpop.trf.xlu0
    %v1284 = vpop.trf.xlu0
    %v1285 = vpop.trf.xlu0
    %v1286 = vpop.trf.xlu0
    %v1287 = vpop.trf.xlu0
    %v1288 = vpop.trf.xlu0
    %v1289 = vpop.trf.xlu0
    %v1290 = vpop.trf.xlu0
    %1291 = vxpose.xlu0.b32.start [1/16] %v1211, 128
    %1292 = vxpose.xlu0.b32.cont [2/16] %v1212, 128
    %1293 = vxpose.xlu0.b32.cont [3/16] %v1213, 128
    %1294 = vxpose.xlu0.b32.cont [4/16] %v1214, 128
    %1295 = vxpose.xlu0.b32.cont [5/16] %v1215, 128
    %1296 = vxpose.xlu0.b32.cont [6/16] %v1216, 128
    %1297 = vxpose.xlu0.b32.cont [7/16] %v1217, 128
    %1298 = vxpose.xlu0.b32.cont [8/16] %v1218, 128
    %1299 = vxpose.xlu0.b32.cont [9/16] 0.0, 128
    %1300 = vxpose.xlu0.b32.cont [10/16] 0.0, 128
    %1301 = vxpose.xlu0.b32.cont [11/16] 0.0, 128
    %1302 = vxpose.xlu0.b32.cont [12/16] 0.0, 128
    %1303 = vxpose.xlu0.b32.cont [13/16] 0.0, 128
    %1304 = vxpose.xlu0.b32.cont [14/16] 0.0, 128
    %1305 = vxpose.xlu0.b32.cont [15/16] 0.0, 128
    %1306 = vxpose.xlu0.b32.end [16/16] 0.0, 128
    %v1307 = vpop.trf.xlu0
    %v1308 = vpop.trf.xlu0
    %v1309 = vpop.trf.xlu0
    %v1310 = vpop.trf.xlu0
    %v1311 = vpop.trf.xlu0
    %v1312 = vpop.trf.xlu0
    %v1313 = vpop.trf.xlu0
    %v1314 = vpop.trf.xlu0
    %v1315 = vpop.trf.xlu0
    %v1316 = vpop.trf.xlu0
    %v1317 = vpop.trf.xlu0
    %v1318 = vpop.trf.xlu0
    %v1319 = vpop.trf.xlu0
    %v1320 = vpop.trf.xlu0
    %v1321 = vpop.trf.xlu0
    %v1322 = vpop.trf.xlu0
    %1323 = vxpose.xlu0.b32.start [1/16] %v1219, 128
    %1324 = vxpose.xlu0.b32.cont [2/16] %v1220, 128
    %1325 = vxpose.xlu0.b32.cont [3/16] %v1221, 128
    %1326 = vxpose.xlu0.b32.cont [4/16] %v1222, 128
    %1327 = vxpose.xlu0.b32.cont [5/16] %v1223, 128
    %1328 = vxpose.xlu0.b32.cont [6/16] %v1224, 128
    %1329 = vxpose.xlu0.b32.cont [7/16] %v1225, 128
    %1330 = vxpose.xlu0.b32.cont [8/16] %v1226, 128
    %1331 = vxpose.xlu0.b32.cont [9/16] 0.0, 128
    %1332 = vxpose.xlu0.b32.cont [10/16] 0.0, 128
    %1333 = vxpose.xlu0.b32.cont [11/16] 0.0, 128
    %1334 = vxpose.xlu0.b32.cont [12/16] 0.0, 128
    %1335 = vxpose.xlu0.b32.cont [13/16] 0.0, 128
    %1336 = vxpose.xlu0.b32.cont [14/16] 0.0, 128
    %1337 = vxpose.xlu0.b32.cont [15/16] 0.0, 128
    %1338 = vxpose.xlu0.b32.end [16/16] 0.0, 128
    %v1339 = vpop.trf.xlu0
    %v1340 = vpop.trf.xlu0
    %v1341 = vpop.trf.xlu0
    %v1342 = vpop.trf.xlu0
    %v1343 = vpop.trf.xlu0
    %v1344 = vpop.trf.xlu0
    %v1345 = vpop.trf.xlu0
    %v1346 = vpop.trf.xlu0
    %v1347 = vpop.trf.xlu0
    %v1348 = vpop.trf.xlu0
    %v1349 = vpop.trf.xlu0
    %v1350 = vpop.trf.xlu0
    %v1351 = vpop.trf.xlu0
    %v1352 = vpop.trf.xlu0
    %v1353 = vpop.trf.xlu0
    %v1354 = vpop.trf.xlu0
    %v1355 = vld [vmem:[%s2 + $0x40] sm:$0xff]
    %v1356 = vld [vmem:[%s2 + $0x48] sm:$0xff]
    %v1357 = vld [vmem:[%s2 + $0x50] sm:$0xff]
    %v1358 = vld [vmem:[%s2 + $0x58] sm:$0xff]
    %v1359 = vld [vmem:[%s2 + $0x60] sm:$0xff]
    %v1360 = vld [vmem:[%s2 + $0x68] sm:$0xff]
    %v1361 = vld [vmem:[%s2 + $0x70] sm:$0xff]
    %v1362 = vld [vmem:[%s2 + $0x78] sm:$0xff]
    %v1363 = vld [vmem:[%s5] ss:$0 sm:$0xff]
    %vm1364 = vcmask 523264
    %v1366 = vsel %vm1364, %v1243, 0
    %v1369 = vsel %vm1364, %v1244, 0
    %v1372 = vsel %vm1364, %v1245, 0
    %v1375 = vsel %vm1364, %v1246, 0
    %v1378 = vsel %vm1364, %v1247, 0
    %v1381 = vsel %vm1364, %v1248, 0
    %v1384 = vsel %vm1364, %v1249, 0
    %v1387 = vsel %vm1364, %v1250, 0
    %v1390 = vsel %vm1364, %v1251, 0
    %v1393 = vsel %vm1364, %v1252, 0
    %v1396 = vsel %vm1364, %v1253, 0
    %v1399 = vsel %vm1364, %v1254, 0
    %v1402 = vsel %vm1364, %v1255, 0
    %v1405 = vsel %vm1364, %v1256, 0
    %v1408 = vsel %vm1364, %v1257, 0
    %v1411 = vsel %vm1364, %v1258, 0
    %v1414 = vsel %vm1364, %v1275, 0
    %v1417 = vsel %vm1364, %v1276, 0
    %v1420 = vsel %vm1364, %v1277, 0
    %v1423 = vsel %vm1364, %v1278, 0
    %v1426 = vsel %vm1364, %v1279, 0
    %v1429 = vsel %vm1364, %v1280, 0
    %v1432 = vsel %vm1364, %v1281, 0
    %v1435 = vsel %vm1364, %v1282, 0
    %v1438 = vsel %vm1364, %v1283, 0
    %v1441 = vsel %vm1364, %v1284, 0
    %v1444 = vsel %vm1364, %v1285, 0
    %v1447 = vsel %vm1364, %v1286, 0
    %v1450 = vsel %vm1364, %v1287, 0
    %v1453 = vsel %vm1364, %v1288, 0
    %v1456 = vsel %vm1364, %v1289, 0
    %v1459 = vsel %vm1364, %v1290, 0
    %v1462 = vsel %vm1364, %v1307, 0
    %v1465 = vsel %vm1364, %v1308, 0
    %v1468 = vsel %vm1364, %v1309, 0
    %v1471 = vsel %vm1364, %v1310, 0
    %v1474 = vsel %vm1364, %v1311, 0
    %v1477 = vsel %vm1364, %v1312, 0
    %v1480 = vsel %vm1364, %v1313, 0
    %v1483 = vsel %vm1364, %v1314, 0
    %v1486 = vsel %vm1364, %v1315, 0
    %v1489 = vsel %vm1364, %v1316, 0
    %v1492 = vsel %vm1364, %v1317, 0
    %v1495 = vsel %vm1364, %v1318, 0
    %v1498 = vsel %vm1364, %v1319, 0
    %v1501 = vsel %vm1364, %v1320, 0
    %v1504 = vsel %vm1364, %v1321, 0
    %v1507 = vsel %vm1364, %v1322, 0
    %v1510 = vsel %vm1364, %v1339, 0
    %v1513 = vsel %vm1364, %v1340, 0
    %v1516 = vsel %vm1364, %v1341, 0
    %v1519 = vsel %vm1364, %v1342, 0
    %v1522 = vsel %vm1364, %v1343, 0
    %v1525 = vsel %vm1364, %v1344, 0
    %v1528 = vsel %vm1364, %v1345, 0
    %v1531 = vsel %vm1364, %v1346, 0
    %v1534 = vsel %vm1364, %v1347, 0
    %v1537 = vsel %vm1364, %v1348, 0
    %v1540 = vsel %vm1364, %v1349, 0
    %v1543 = vsel %vm1364, %v1350, 0
    %v1546 = vsel %vm1364, %v1351, 0
    %v1549 = vsel %vm1364, %v1352, 0
    %v1552 = vsel %vm1364, %v1353, 0
    %v1555 = vsel %vm1364, %v1354, 0
    %1557 = vmatprep.subr.mxu0 0.0
    %1558 = vmatpush1.msra.mxu0 %v1355
    %1559 = vmatprep.subr.mxu0 0.0
    %1560 = vmatpush1.msra.mxu0 %v1356
    %1561 = vmatprep.subr.mxu0 0.0
    %1562 = vmatpush1.msra.mxu0 %v1357
    %1563 = vmatprep.subr.mxu0 0.0
    %1564 = vmatpush1.msra.mxu0 %v1358
    %1565 = vmatprep.subr.mxu0 0.0
    %1566 = vmatpush1.msra.mxu0 %v1359
    %1567 = vmatprep.subr.mxu0 0.0
    %1568 = vmatpush1.msra.mxu0 %v1360
    %1569 = vmatprep.subr.mxu0 0.0
    %1570 = vmatpush1.msra.mxu0 %v1361
    %1571 = vmatprep.subr.mxu0 0.0
    %1572 = vmatpush1.msra.mxu0 %v1362
    %1573 = vmatprep.subr.mxu0 0.0
    %1574 = vmatpush1.msra.mxu0 0.0
    %1575 = vmatprep.subr.mxu0 0.0
    %1576 = vmatpush1.msra.mxu0 0.0
    %1577 = vmatprep.subr.mxu0 0.0
    %1578 = vmatpush1.msra.mxu0 0.0
    %1579 = vmatprep.subr.mxu0 0.0
    %1580 = vmatpush1.msra.mxu0 0.0
    %1581 = vmatprep.subr.mxu0 0.0
    %1582 = vmatpush1.msra.mxu0 0.0
    %1583 = vmatprep.subr.mxu0 0.0
    %1584 = vmatpush1.msra.mxu0 0.0
    %1585 = vmatprep.subr.mxu0 0.0
    %1586 = vmatpush1.msra.mxu0 0.0
    %1587 = vmatprep.subr.mxu0 0.0
    %1588 = vmatpush1.msra.mxu0 0.0
    %1589 = vmatprep.subr.mxu0 0.0
    %1590 = vmatpush1.msra.mxu0 0.0
    %1591 = vmatprep.subr.mxu0 0.0
    %1592 = vmatpush1.msra.mxu0 0.0
    %1593 = vmatprep.subr.mxu0 0.0
    %1594 = vmatpush1.msra.mxu0 0.0
    %1595 = vmatprep.subr.mxu0 0.0
    %1596 = vmatpush1.msra.mxu0 0.0
    %1597 = vmatprep.subr.mxu0 0.0
    %1598 = vmatpush1.msra.mxu0 0.0
    %1599 = vmatprep.subr.mxu0 0.0
    %1600 = vmatpush1.msra.mxu0 0.0
    %1601 = vmatprep.subr.mxu0 0.0
    %1602 = vmatpush1.msra.mxu0 0.0
    %1603 = vmatprep.subr.mxu0 0.0
    %1604 = vmatpush1.msra.mxu0 0.0
    %1605 = vmatprep.subr.mxu0 0.0
    %1606 = vmatpush1.msra.mxu0 0.0
    %1607 = vmatprep.subr.mxu0 0.0
    %1608 = vmatpush1.msra.mxu0 0.0
    %1609 = vmatprep.subr.mxu0 0.0
    %1610 = vmatpush1.msra.mxu0 0.0
    %1611 = vmatprep.subr.mxu0 0.0
    %1612 = vmatpush1.msra.mxu0 0.0
    %1613 = vmatprep.subr.mxu0 0.0
    %1614 = vmatpush1.msra.mxu0 0.0
    %1615 = vmatprep.subr.mxu0 0.0
    %1616 = vmatpush1.msra.mxu0 0.0
    %1617 = vmatprep.subr.mxu0 0.0
    %1618 = vmatpush1.msra.mxu0 0.0
    %1619 = vmatprep.subr.mxu0 0.0
    %1620 = vmatpush1.msra.mxu0 0.0
    %1621 = vmatprep.mubr.f32.mxu0 0.0
    %1622 = vmatmul.mubr.f32.gmra.mrb[0].mxu0 %v1366
    %v1623 = vpop.f32.mrb[0].mxu0
    %v1624 = vadd.f32 %v1363, %v1623
    %v1625 = vpop.f32.mrb[0].mxu0
    %1626 = vmatprep.mubr.f32.mxu0 0.0
    %1627 = vmatmul.mubr.f32.gmra.mrb[0].mxu0 %v1369
    %v1628 = vpop.f32.mrb[0].mxu0
    %v1629 = vadd.f32 %v1363, %v1628
    %v1630 = vpop.f32.mrb[0].mxu0
    %1631 = vmatprep.mubr.f32.mxu0 0.0
    %1632 = vmatmul.mubr.f32.gmra.mrb[0].mxu0 %v1372
    %v1633 = vpop.f32.mrb[0].mxu0
    %v1634 = vadd.f32 %v1363, %v1633
    %v1635 = vpop.f32.mrb[0].mxu0
    %1636 = vmatprep.mubr.f32.mxu0 0.0
    %1637 = vmatmul.mubr.f32.gmra.mrb[0].mxu0 %v1375
    %v1638 = vpop.f32.mrb[0].mxu0
    %v1639 = vadd.f32 %v1363, %v1638
    %v1640 = vpop.f32.mrb[0].mxu0
    %1641 = vmatprep.mubr.f32.mxu0 0.0
    %1642 = vmatmul.mubr.f32.gmra.mrb[0].mxu0 %v1378
    %v1643 = vpop.f32.mrb[0].mxu0
    %v1644 = vadd.f32 %v1363, %v1643
    %v1645 = vpop.f32.mrb[0].mxu0
    %1646 = vmatprep.mubr.f32.mxu0 0.0
    %1647 = vmatmul.mubr.f32.gmra.mrb[0].mxu0 %v1381
    %v1648 = vpop.f32.mrb[0].mxu0
    %v1649 = vadd.f32 %v1363, %v1648
    %v1650 = vpop.f32.mrb[0].mxu0
    %1651 = vmatprep.mubr.f32.mxu0 0.0
    %1652 = vmatmul.mubr.f32.gmra.mrb[0].mxu0 %v1384
    %v1653 = vpop.f32.mrb[0].mxu0
    %v1654 = vadd.f32 %v1363, %v1653
    %v1655 = vpop.f32.mrb[0].mxu0
    %1656 = vmatprep.mubr.f32.mxu0 0.0
    %1657 = vmatmul.mubr.f32.gmra.mrb[0].mxu0 %v1387
    %v1658 = vpop.f32.mrb[0].mxu0
    %v1659 = vadd.f32 %v1363, %v1658
    %v1660 = vpop.f32.mrb[0].mxu0
    %1661 = vmatprep.mubr.f32.mxu0 0.0
    %1662 = vmatmul.mubr.f32.gmra.mrb[0].mxu0 %v1390
    %v1663 = vpop.f32.mrb[0].mxu0
    %v1664 = vadd.f32 %v1363, %v1663
    %v1665 = vpop.f32.mrb[0].mxu0
    %1666 = vmatprep.mubr.f32.mxu0 0.0
    %1667 = vmatmul.mubr.f32.gmra.mrb[0].mxu0 %v1393
    %v1668 = vpop.f32.mrb[0].mxu0
    %v1669 = vadd.f32 %v1363, %v1668
    %v1670 = vpop.f32.mrb[0].mxu0
    %1671 = vmatprep.mubr.f32.mxu0 0.0
    %1672 = vmatmul.mubr.f32.gmra.mrb[0].mxu0 %v1396
    %v1673 = vpop.f32.mrb[0].mxu0
    %v1674 = vadd.f32 %v1363, %v1673
    %v1675 = vpop.f32.mrb[0].mxu0
    %1676 = vmatprep.mubr.f32.mxu0 0.0
    %1677 = vmatmul.mubr.f32.gmra.mrb[0].mxu0 %v1399
    %v1678 = vpop.f32.mrb[0].mxu0
    %v1679 = vadd.f32 %v1363, %v1678
    %v1680 = vpop.f32.mrb[0].mxu0
    %1681 = vmatprep.mubr.f32.mxu0 0.0
    %1682 = vmatmul.mubr.f32.gmra.mrb[0].mxu0 %v1402
    %v1683 = vpop.f32.mrb[0].mxu0
    %v1684 = vadd.f32 %v1363, %v1683
    %v1685 = vpop.f32.mrb[0].mxu0
    %1686 = vmatprep.mubr.f32.mxu0 0.0
    %1687 = vmatmul.mubr.f32.gmra.mrb[0].mxu0 %v1405
    %v1688 = vpop.f32.mrb[0].mxu0
    %v1689 = vadd.f32 %v1363, %v1688
    %v1690 = vpop.f32.mrb[0].mxu0
    %1691 = vmatprep.mubr.f32.mxu0 0.0
    %1692 = vmatmul.mubr.f32.gmra.mrb[0].mxu0 %v1408
    %v1693 = vpop.f32.mrb[0].mxu0
    %v1694 = vadd.f32 %v1363, %v1693
    %v1695 = vpop.f32.mrb[0].mxu0
    %1696 = vmatprep.mubr.f32.mxu0 0.0
    %1697 = vmatmul.mubr.f32.gmra.mrb[0].mxu0 %v1411
    %v1698 = vpop.f32.mrb[0].mxu0
    %v1699 = vadd.f32 %v1363, %v1698
    %v1700 = vpop.f32.mrb[0].mxu0
    %1701 = vmatprep.mubr.f32.mxu0 0.0
    %1702 = vmatmul.mubr.f32.gmra.mrb[0].mxu0 %v1414
    %v1703 = vpop.f32.mrb[0].mxu0
    %v1704 = vadd.f32 %v1363, %v1703
    %v1705 = vpop.f32.mrb[0].mxu0
    %1706 = vmatprep.mubr.f32.mxu0 0.0
    %1707 = vmatmul.mubr.f32.gmra.mrb[0].mxu0 %v1417
    %v1708 = vpop.f32.mrb[0].mxu0
    %v1709 = vadd.f32 %v1363, %v1708
    %v1710 = vpop.f32.mrb[0].mxu0
    %1711 = vmatprep.mubr.f32.mxu0 0.0
    %1712 = vmatmul.mubr.f32.gmra.mrb[0].mxu0 %v1420
    %v1713 = vpop.f32.mrb[0].mxu0
    %v1714 = vadd.f32 %v1363, %v1713
    %v1715 = vpop.f32.mrb[0].mxu0
    %1716 = vmatprep.mubr.f32.mxu0 0.0
    %1717 = vmatmul.mubr.f32.gmra.mrb[0].mxu0 %v1423
    %v1718 = vpop.f32.mrb[0].mxu0
    %v1719 = vadd.f32 %v1363, %v1718
    %v1720 = vpop.f32.mrb[0].mxu0
    %1721 = vmatprep.mubr.f32.mxu0 0.0
    %1722 = vmatmul.mubr.f32.gmra.mrb[0].mxu0 %v1426
    %v1723 = vpop.f32.mrb[0].mxu0
    %v1724 = vadd.f32 %v1363, %v1723
    %v1725 = vpop.f32.mrb[0].mxu0
    %1726 = vmatprep.mubr.f32.mxu0 0.0
    %1727 = vmatmul.mubr.f32.gmra.mrb[0].mxu0 %v1429
    %v1728 = vpop.f32.mrb[0].mxu0
    %v1729 = vadd.f32 %v1363, %v1728
    %v1730 = vpop.f32.mrb[0].mxu0
    %1731 = vmatprep.mubr.f32.mxu0 0.0
    %1732 = vmatmul.mubr.f32.gmra.mrb[0].mxu0 %v1432
    %v1733 = vpop.f32.mrb[0].mxu0
    %v1734 = vadd.f32 %v1363, %v1733
    %v1735 = vpop.f32.mrb[0].mxu0
    %1736 = vmatprep.mubr.f32.mxu0 0.0
    %1737 = vmatmul.mubr.f32.gmra.mrb[0].mxu0 %v1435
    %v1738 = vpop.f32.mrb[0].mxu0
    %v1739 = vadd.f32 %v1363, %v1738
    %v1740 = vpop.f32.mrb[0].mxu0
    %1741 = vmatprep.mubr.f32.mxu0 0.0
    %1742 = vmatmul.mubr.f32.gmra.mrb[0].mxu0 %v1438
    %v1743 = vpop.f32.mrb[0].mxu0
    %v1744 = vadd.f32 %v1363, %v1743
    %v1745 = vpop.f32.mrb[0].mxu0
    %1746 = vmatprep.mubr.f32.mxu0 0.0
    %1747 = vmatmul.mubr.f32.gmra.mrb[0].mxu0 %v1441
    %v1748 = vpop.f32.mrb[0].mxu0
    %v1749 = vadd.f32 %v1363, %v1748
    %v1750 = vpop.f32.mrb[0].mxu0
    %1751 = vmatprep.mubr.f32.mxu0 0.0
    %1752 = vmatmul.mubr.f32.gmra.mrb[0].mxu0 %v1444
    %v1753 = vpop.f32.mrb[0].mxu0
    %v1754 = vadd.f32 %v1363, %v1753
    %v1755 = vpop.f32.mrb[0].mxu0
    %1756 = vmatprep.mubr.f32.mxu0 0.0
    %1757 = vmatmul.mubr.f32.gmra.mrb[0].mxu0 %v1447
    %v1758 = vpop.f32.mrb[0].mxu0
    %v1759 = vadd.f32 %v1363, %v1758
    %v1760 = vpop.f32.mrb[0].mxu0
    %1761 = vmatprep.mubr.f32.mxu0 0.0
    %1762 = vmatmul.mubr.f32.gmra.mrb[0].mxu0 %v1450
    %v1763 = vpop.f32.mrb[0].mxu0
    %v1764 = vadd.f32 %v1363, %v1763
    %v1765 = vpop.f32.mrb[0].mxu0
    %1766 = vmatprep.mubr.f32.mxu0 0.0
    %1767 = vmatmul.mubr.f32.gmra.mrb[0].mxu0 %v1453
    %v1768 = vpop.f32.mrb[0].mxu0
    %v1769 = vadd.f32 %v1363, %v1768
    %v1770 = vpop.f32.mrb[0].mxu0
    %1771 = vmatprep.mubr.f32.mxu0 0.0
    %1772 = vmatmul.mubr.f32.gmra.mrb[0].mxu0 %v1456
    %v1773 = vpop.f32.mrb[0].mxu0
    %v1774 = vadd.f32 %v1363, %v1773
    %v1775 = vpop.f32.mrb[0].mxu0
    %1776 = vmatprep.mubr.f32.mxu0 0.0
    %1777 = vmatmul.mubr.f32.gmra.mrb[0].mxu0 %v1459
    %v1778 = vpop.f32.mrb[0].mxu0
    %v1779 = vadd.f32 %v1363, %v1778
    %v1780 = vpop.f32.mrb[0].mxu0
    %1781 = vmatprep.mubr.f32.mxu0 0.0
    %1782 = vmatmul.mubr.f32.gmra.mrb[0].mxu0 %v1462
    %v1783 = vpop.f32.mrb[0].mxu0
    %v1784 = vadd.f32 %v1363, %v1783
    %v1785 = vpop.f32.mrb[0].mxu0
    %1786 = vmatprep.mubr.f32.mxu0 0.0
    %1787 = vmatmul.mubr.f32.gmra.mrb[0].mxu0 %v1465
    %v1788 = vpop.f32.mrb[0].mxu0
    %v1789 = vadd.f32 %v1363, %v1788
    %v1790 = vpop.f32.mrb[0].mxu0
    %1791 = vmatprep.mubr.f32.mxu0 0.0
    %1792 = vmatmul.mubr.f32.gmra.mrb[0].mxu0 %v1468
    %v1793 = vpop.f32.mrb[0].mxu0
    %v1794 = vadd.f32 %v1363, %v1793
    %v1795 = vpop.f32.mrb[0].mxu0
    %1796 = vmatprep.mubr.f32.mxu0 0.0
    %1797 = vmatmul.mubr.f32.gmra.mrb[0].mxu0 %v1471
    %v1798 = vpop.f32.mrb[0].mxu0
    %v1799 = vadd.f32 %v1363, %v1798
    %v1800 = vpop.f32.mrb[0].mxu0
    %1801 = vmatprep.mubr.f32.mxu0 0.0
    %1802 = vmatmul.mubr.f32.gmra.mrb[0].mxu0 %v1474
    %v1803 = vpop.f32.mrb[0].mxu0
    %v1804 = vadd.f32 %v1363, %v1803
    %v1805 = vpop.f32.mrb[0].mxu0
    %1806 = vmatprep.mubr.f32.mxu0 0.0
    %1807 = vmatmul.mubr.f32.gmra.mrb[0].mxu0 %v1477
    %v1808 = vpop.f32.mrb[0].mxu0
    %v1809 = vadd.f32 %v1363, %v1808
    %v1810 = vpop.f32.mrb[0].mxu0
    %1811 = vmatprep.mubr.f32.mxu0 0.0
    %1812 = vmatmul.mubr.f32.gmra.mrb[0].mxu0 %v1480
    %v1813 = vpop.f32.mrb[0].mxu0
    %v1814 = vadd.f32 %v1363, %v1813
    %v1815 = vpop.f32.mrb[0].mxu0
    %1816 = vmatprep.mubr.f32.mxu0 0.0
    %1817 = vmatmul.mubr.f32.gmra.mrb[0].mxu0 %v1483
    %v1818 = vpop.f32.mrb[0].mxu0
    %v1819 = vadd.f32 %v1363, %v1818
    %v1820 = vpop.f32.mrb[0].mxu0
    %1821 = vmatprep.mubr.f32.mxu0 0.0
    %1822 = vmatmul.mubr.f32.gmra.mrb[0].mxu0 %v1486
    %v1823 = vpop.f32.mrb[0].mxu0
    %v1824 = vadd.f32 %v1363, %v1823
    %v1825 = vpop.f32.mrb[0].mxu0
    %1826 = vmatprep.mubr.f32.mxu0 0.0
    %1827 = vmatmul.mubr.f32.gmra.mrb[0].mxu0 %v1489
    %v1828 = vpop.f32.mrb[0].mxu0
    %v1829 = vadd.f32 %v1363, %v1828
    %v1830 = vpop.f32.mrb[0].mxu0
    %1831 = vmatprep.mubr.f32.mxu0 0.0
    %1832 = vmatmul.mubr.f32.gmra.mrb[0].mxu0 %v1492
    %v1833 = vpop.f32.mrb[0].mxu0
    %v1834 = vadd.f32 %v1363, %v1833
    %v1835 = vpop.f32.mrb[0].mxu0
    %1836 = vmatprep.mubr.f32.mxu0 0.0
    %1837 = vmatmul.mubr.f32.gmra.mrb[0].mxu0 %v1495
    %v1838 = vpop.f32.mrb[0].mxu0
    %v1839 = vadd.f32 %v1363, %v1838
    %v1840 = vpop.f32.mrb[0].mxu0
    %1841 = vmatprep.mubr.f32.mxu0 0.0
    %1842 = vmatmul.mubr.f32.gmra.mrb[0].mxu0 %v1498
    %v1843 = vpop.f32.mrb[0].mxu0
    %v1844 = vadd.f32 %v1363, %v1843
    %v1845 = vpop.f32.mrb[0].mxu0
    %1846 = vmatprep.mubr.f32.mxu0 0.0
    %1847 = vmatmul.mubr.f32.gmra.mrb[0].mxu0 %v1501
    %v1848 = vpop.f32.mrb[0].mxu0
    %v1849 = vadd.f32 %v1363, %v1848
    %v1850 = vpop.f32.mrb[0].mxu0
    %1851 = vmatprep.mubr.f32.mxu0 0.0
    %1852 = vmatmul.mubr.f32.gmra.mrb[0].mxu0 %v1504
    %v1853 = vpop.f32.mrb[0].mxu0
    %v1854 = vadd.f32 %v1363, %v1853
    %v1855 = vpop.f32.mrb[0].mxu0
    %1856 = vmatprep.mubr.f32.mxu0 0.0
    %1857 = vmatmul.mubr.f32.gmra.mrb[0].mxu0 %v1507
    %v1858 = vpop.f32.mrb[0].mxu0
    %v1859 = vadd.f32 %v1363, %v1858
    %v1860 = vpop.f32.mrb[0].mxu0
    %1861 = vmatprep.mubr.f32.mxu0 0.0
    %1862 = vmatmul.mubr.f32.gmra.mrb[0].mxu0 %v1510
    %v1863 = vpop.f32.mrb[0].mxu0
    %v1864 = vadd.f32 %v1363, %v1863
    %v1865 = vpop.f32.mrb[0].mxu0
    %1866 = vmatprep.mubr.f32.mxu0 0.0
    %1867 = vmatmul.mubr.f32.gmra.mrb[0].mxu0 %v1513
    %v1868 = vpop.f32.mrb[0].mxu0
    %v1869 = vadd.f32 %v1363, %v1868
    %v1870 = vpop.f32.mrb[0].mxu0
    %1871 = vmatprep.mubr.f32.mxu0 0.0
    %1872 = vmatmul.mubr.f32.gmra.mrb[0].mxu0 %v1516
    %v1873 = vpop.f32.mrb[0].mxu0
    %v1874 = vadd.f32 %v1363, %v1873
    %v1875 = vpop.f32.mrb[0].mxu0
    %1876 = vmatprep.mubr.f32.mxu0 0.0
    %1877 = vmatmul.mubr.f32.gmra.mrb[0].mxu0 %v1519
    %v1878 = vpop.f32.mrb[0].mxu0
    %v1879 = vadd.f32 %v1363, %v1878
    %v1880 = vpop.f32.mrb[0].mxu0
    %1881 = vmatprep.mubr.f32.mxu0 0.0
    %1882 = vmatmul.mubr.f32.gmra.mrb[0].mxu0 %v1522
    %v1883 = vpop.f32.mrb[0].mxu0
    %v1884 = vadd.f32 %v1363, %v1883
    %v1885 = vpop.f32.mrb[0].mxu0
    %1886 = vmatprep.mubr.f32.mxu0 0.0
    %1887 = vmatmul.mubr.f32.gmra.mrb[0].mxu0 %v1525
    %v1888 = vpop.f32.mrb[0].mxu0
    %v1889 = vadd.f32 %v1363, %v1888
    %v1890 = vpop.f32.mrb[0].mxu0
    %1891 = vmatprep.mubr.f32.mxu0 0.0
    %1892 = vmatmul.mubr.f32.gmra.mrb[0].mxu0 %v1528
    %v1893 = vpop.f32.mrb[0].mxu0
    %v1894 = vadd.f32 %v1363, %v1893
    %v1895 = vpop.f32.mrb[0].mxu0
    %1896 = vmatprep.mubr.f32.mxu0 0.0
    %1897 = vmatmul.mubr.f32.gmra.mrb[0].mxu0 %v1531
    %v1898 = vpop.f32.mrb[0].mxu0
    %v1899 = vadd.f32 %v1363, %v1898
    %v1900 = vpop.f32.mrb[0].mxu0
    %1901 = vmatprep.mubr.f32.mxu0 0.0
    %1902 = vmatmul.mubr.f32.gmra.mrb[0].mxu0 %v1534
    %v1903 = vpop.f32.mrb[0].mxu0
    %v1904 = vadd.f32 %v1363, %v1903
    %v1905 = vpop.f32.mrb[0].mxu0
    %1906 = vmatprep.mubr.f32.mxu0 0.0
    %1907 = vmatmul.mubr.f32.gmra.mrb[0].mxu0 %v1537
    %v1908 = vpop.f32.mrb[0].mxu0
    %v1909 = vadd.f32 %v1363, %v1908
    %v1910 = vpop.f32.mrb[0].mxu0
    %1911 = vmatprep.mubr.f32.mxu0 0.0
    %1912 = vmatmul.mubr.f32.gmra.mrb[0].mxu0 %v1540
    %v1913 = vpop.f32.mrb[0].mxu0
    %v1914 = vadd.f32 %v1363, %v1913
    %v1915 = vpop.f32.mrb[0].mxu0
    %1916 = vmatprep.mubr.f32.mxu0 0.0
    %1917 = vmatmul.mubr.f32.gmra.mrb[0].mxu0 %v1543
    %v1918 = vpop.f32.mrb[0].mxu0
    %v1919 = vadd.f32 %v1363, %v1918
    %v1920 = vpop.f32.mrb[0].mxu0
    %1921 = vmatprep.mubr.f32.mxu0 0.0
    %1922 = vmatmul.mubr.f32.gmra.mrb[0].mxu0 %v1546
    %v1923 = vpop.f32.mrb[0].mxu0
    %v1924 = vadd.f32 %v1363, %v1923
    %v1925 = vpop.f32.mrb[0].mxu0
    %1926 = vmatprep.mubr.f32.mxu0 0.0
    %1927 = vmatmul.mubr.f32.gmra.mrb[0].mxu0 %v1549
    %v1928 = vpop.f32.mrb[0].mxu0
    %v1929 = vadd.f32 %v1363, %v1928
    %v1930 = vpop.f32.mrb[0].mxu0
    %1931 = vmatprep.mubr.f32.mxu0 0.0
    %1932 = vmatmul.mubr.f32.gmra.mrb[0].mxu0 %v1552
    %v1933 = vpop.f32.mrb[0].mxu0
    %v1934 = vadd.f32 %v1363, %v1933
    %v1935 = vpop.f32.mrb[0].mxu0
    %1936 = vmatprep.mubr.f32.mxu0 0.0
    %1937 = vmatmul.mubr.f32.gmra.mrb[0].mxu0 %v1555
    %v1938 = vpop.f32.mrb[0].mxu0
    %v1939 = vadd.f32 %v1363, %v1938
    %v1940 = vpop.f32.mrb[0].mxu0
    %1941 = vdwg.mxu0
    %v1942 = vmax.f32 %v1624, 0.0
    %v1943 = vmax.f32 %v1629, 0.0
    %v1944 = vmax.f32 %v1634, 0.0
    %v1945 = vmax.f32 %v1639, 0.0
    %v1946 = vmax.f32 %v1644, 0.0
    %v1947 = vmax.f32 %v1649, 0.0
    %v1948 = vmax.f32 %v1654, 0.0
    %v1949 = vmax.f32 %v1659, 0.0
    %v1950 = vmax.f32 %v1664, 0.0
    %v1951 = vmax.f32 %v1669, 0.0
    %v1952 = vmax.f32 %v1674, 0.0
    %v1953 = vmax.f32 %v1679, 0.0
    %v1954 = vmax.f32 %v1684, 0.0
    %v1955 = vmax.f32 %v1689, 0.0
    %v1956 = vmax.f32 %v1694, 0.0
    %v1957 = vmax.f32 %v1699, 0.0
    %v1958 = vmax.f32 %v1704, 0.0
    %v1959 = vmax.f32 %v1709, 0.0
    %v1960 = vmax.f32 %v1714, 0.0
    %v1961 = vmax.f32 %v1719, 0.0
    %v1962 = vmax.f32 %v1724, 0.0
    %v1963 = vmax.f32 %v1729, 0.0
    %v1964 = vmax.f32 %v1734, 0.0
    %v1965 = vmax.f32 %v1739, 0.0
    %v1966 = vmax.f32 %v1744, 0.0
    %v1967 = vmax.f32 %v1749, 0.0
    %v1968 = vmax.f32 %v1754, 0.0
    %v1969 = vmax.f32 %v1759, 0.0
    %v1970 = vmax.f32 %v1764, 0.0
    %v1971 = vmax.f32 %v1769, 0.0
    %v1972 = vmax.f32 %v1774, 0.0
    %v1973 = vmax.f32 %v1779, 0.0
    %v1974 = vmax.f32 %v1784, 0.0
    %v1975 = vmax.f32 %v1789, 0.0
    %v1976 = vmax.f32 %v1794, 0.0
    %v1977 = vmax.f32 %v1799, 0.0
    %v1978 = vmax.f32 %v1804, 0.0
    %v1979 = vmax.f32 %v1809, 0.0
    %v1980 = vmax.f32 %v1814, 0.0
    %v1981 = vmax.f32 %v1819, 0.0
    %v1982 = vmax.f32 %v1824, 0.0
    %v1983 = vmax.f32 %v1829, 0.0
    %v1984 = vmax.f32 %v1834, 0.0
    %v1985 = vmax.f32 %v1839, 0.0
    %v1986 = vmax.f32 %v1844, 0.0
    %v1987 = vmax.f32 %v1849, 0.0
    %v1988 = vmax.f32 %v1854, 0.0
    %v1989 = vmax.f32 %v1859, 0.0
    %v1990 = vmax.f32 %v1864, 0.0
    %v1991 = vmax.f32 %v1869, 0.0
    %v1992 = vmax.f32 %v1874, 0.0
    %v1993 = vmax.f32 %v1879, 0.0
    %v1994 = vmax.f32 %v1884, 0.0
    %v1995 = vmax.f32 %v1889, 0.0
    %v1996 = vmax.f32 %v1894, 0.0
    %v1997 = vmax.f32 %v1899, 0.0
    %v1998 = vmax.f32 %v1904, 0.0
    %v1999 = vmax.f32 %v1909, 0.0
    %v2000 = vmax.f32 %v1914, 0.0
    %v2001 = vmax.f32 %v1919, 0.0
    %v2002 = vmax.f32 %v1924, 0.0
    %v2003 = vmax.f32 %v1929, 0.0
    %v2004 = vmax.f32 %v1934, 0.0
    %v2005 = vmax.f32 %v1939, 0.0
    %v2006 = vld [vmem:[#allocation2] sm:$0xff]
    %v2007 = vld [vmem:[#allocation2 + $0x8] sm:$0xff]
    %v2008 = vld [vmem:[#allocation2 + $0x10] sm:$0xff]
    %v2009 = vld [vmem:[#allocation2 + $0x18] sm:$0xff]
    %v2010 = vld [vmem:[#allocation2 + $0x20] sm:$0xff]
    %v2011 = vld [vmem:[#allocation2 + $0x28] sm:$0xff]
    %v2012 = vld [vmem:[#allocation2 + $0x30] sm:$0xff]
    %v2013 = vld [vmem:[#allocation2 + $0x38] sm:$0xff]
    %v2014 = vld [vmem:[#allocation2 + $0x40] sm:$0xff]
    %v2015 = vld [vmem:[#allocation2 + $0x48] sm:$0xff]
    %v2016 = vld [vmem:[#allocation2 + $0x50] sm:$0xff]
    %v2017 = vld [vmem:[#allocation2 + $0x58] sm:$0xff]
    %v2018 = vld [vmem:[#allocation2 + $0x60] sm:$0xff]
    %v2019 = vld [vmem:[#allocation2 + $0x68] sm:$0xff]
    %v2020 = vld [vmem:[#allocation2 + $0x70] sm:$0xff]
    %v2021 = vld [vmem:[#allocation2 + $0x78] sm:$0xff]
    %v2022 = vld [vmem:[#allocation2 + $0x80] sm:$0xff]
    %v2023 = vld [vmem:[#allocation2 + $0x88] sm:$0xff]
    %v2024 = vld [vmem:[#allocation2 + $0x90] sm:$0xff]
    %v2025 = vld [vmem:[#allocation2 + $0x98] sm:$0xff]
    %v2026 = vld [vmem:[#allocation2 + $0xa0] sm:$0xff]
    %v2027 = vld [vmem:[#allocation2 + $0xa8] sm:$0xff]
    %v2028 = vld [vmem:[#allocation2 + $0xb0] sm:$0xff]
    %v2029 = vld [vmem:[#allocation2 + $0xb8] sm:$0xff]
    %v2030 = vld [vmem:[#allocation2 + $0xc0] sm:$0xff]
    %v2031 = vld [vmem:[#allocation2 + $0xc8] sm:$0xff]
    %v2032 = vld [vmem:[#allocation2 + $0xd0] sm:$0xff]
    %v2033 = vld [vmem:[#allocation2 + $0xd8] sm:$0xff]
    %v2034 = vld [vmem:[#allocation2 + $0xe0] sm:$0xff]
    %v2035 = vld [vmem:[#allocation2 + $0xe8] sm:$0xff]
    %v2036 = vld [vmem:[#allocation2 + $0xf0] sm:$0xff]
    %v2037 = vld [vmem:[#allocation2 + $0xf8] sm:$0xff]
    %s2038 = scalar_lea.vmem %s5, 1
    %v2039 = vld [vmem:[%s2038] ss:$8 sm:$0x3]
    %v2041 = vlaneseq
    %v2042 = vshrl.u32 %v2041, 7
    %v2043 = vsub.s32 0, %v2042
    %v2044 = vrot.slane %v2039, %v2043
    %v2045 = vlaneseq
    %v2046 = vshrl.u32 %v2045, 7
    %v2047 = vsub.s32 1, %v2046
    %v2048 = vrot.slane %v2039, %v2047
    %2051 = vmatprep.subr.mxu0 %v2007
    %2052 = vmatpush1.msra.mxu0 %v2006
    %2053 = vmatprep.subr.mxu0 %v2009
    %2054 = vmatpush1.msra.mxu0 %v2008
    %2055 = vmatprep.subr.mxu0 %v2011
    %2056 = vmatpush1.msra.mxu0 %v2010
    %2057 = vmatprep.subr.mxu0 %v2013
    %2058 = vmatpush1.msra.mxu0 %v2012
    %2059 = vmatprep.subr.mxu0 %v2015
    %2060 = vmatpush1.msra.mxu0 %v2014
    %2061 = vmatprep.subr.mxu0 %v2017
    %2062 = vmatpush1.msra.mxu0 %v2016
    %2063 = vmatprep.subr.mxu0 %v2019
    %2064 = vmatpush1.msra.mxu0 %v2018
    %2065 = vmatprep.subr.mxu0 %v2021
    %2066 = vmatpush1.msra.mxu0 %v2020
    %2067 = vmatprep.subr.mxu0 %v2023
    %2068 = vmatpush1.msra.mxu0 %v2022
    %2069 = vmatprep.subr.mxu0 %v2025
    %2070 = vmatpush1.msra.mxu0 %v2024
    %2071 = vmatprep.subr.mxu0 %v2027
    %2072 = vmatpush1.msra.mxu0 %v2026
    %2073 = vmatprep.subr.mxu0 %v2029
    %2074 = vmatpush1.msra.mxu0 %v2028
    %2075 = vmatprep.subr.mxu0 %v2031
    %2076 = vmatpush1.msra.mxu0 %v2030
    %2077 = vmatprep.subr.mxu0 %v2033
    %2078 = vmatpush1.msra.mxu0 %v2032
    %2079 = vmatprep.subr.mxu0 %v2035
    %2080 = vmatpush1.msra.mxu0 %v2034
    %2081 = vmatprep.subr.mxu0 %v2037
    %2082 = vmatpush1.msra.mxu0 %v2036
    %2083 = vmatprep.subr.mxu0 0.0
    %2084 = vmatpush1.msra.mxu0 0.0
    %2085 = vmatprep.subr.mxu0 0.0
    %2086 = vmatpush1.msra.mxu0 0.0
    %2087 = vmatprep.subr.mxu0 0.0
    %2088 = vmatpush1.msra.mxu0 0.0
    %2089 = vmatprep.subr.mxu0 0.0
    %2090 = vmatpush1.msra.mxu0 0.0
    %2091 = vmatprep.subr.mxu0 0.0
    %2092 = vmatpush1.msra.mxu0 0.0
    %2093 = vmatprep.subr.mxu0 0.0
    %2094 = vmatpush1.msra.mxu0 0.0
    %2095 = vmatprep.subr.mxu0 0.0
    %2096 = vmatpush1.msra.mxu0 0.0
    %2097 = vmatprep.subr.mxu0 0.0
    %2098 = vmatpush1.msra.mxu0 0.0
    %2099 = vmatprep.subr.mxu0 0.0
    %2100 = vmatpush1.msra.mxu0 0.0
    %2101 = vmatprep.subr.mxu0 0.0
    %2102 = vmatpush1.msra.mxu0 0.0
    %2103 = vmatprep.subr.mxu0 0.0
    %2104 = vmatpush1.msra.mxu0 0.0
    %2105 = vmatprep.subr.mxu0 0.0
    %2106 = vmatpush1.msra.mxu0 0.0
    %2107 = vmatprep.subr.mxu0 0.0
    %2108 = vmatpush1.msra.mxu0 0.0
    %2109 = vmatprep.subr.mxu0 0.0
    %2110 = vmatpush1.msra.mxu0 0.0
    %2111 = vmatprep.subr.mxu0 0.0
    %2112 = vmatpush1.msra.mxu0 0.0
    %2113 = vmatprep.subr.mxu0 0.0
    %2114 = vmatpush1.msra.mxu0 0.0
    %2115 = vmatprep.mubr.f32.mxu0 0.0
    %2116 = vmatmul.mubr.f32.gmra.mrb[0].mxu0 %v1942
    %v2117 = vpop.f32.mrb[0].mxu0
    %v2118 = vadd.f32 %v2044, %v2117
    %v2119 = vpop.f32.mrb[0].mxu0
    %v2120 = vadd.f32 %v2048, %v2119
    %2121 = vmatprep.mubr.f32.mxu0 0.0
    %2122 = vmatmul.mubr.f32.gmra.mrb[0].mxu0 %v1943
    %v2123 = vpop.f32.mrb[0].mxu0
    %v2124 = vadd.f32 %v2044, %v2123
    %v2125 = vpop.f32.mrb[0].mxu0
    %v2126 = vadd.f32 %v2048, %v2125
    %2127 = vmatprep.mubr.f32.mxu0 0.0
    %2128 = vmatmul.mubr.f32.gmra.mrb[0].mxu0 %v1944
    %v2129 = vpop.f32.mrb[0].mxu0
    %v2130 = vadd.f32 %v2044, %v2129
    %v2131 = vpop.f32.mrb[0].mxu0
    %v2132 = vadd.f32 %v2048, %v2131
    %2133 = vmatprep.mubr.f32.mxu0 0.0
    %2134 = vmatmul.mubr.f32.gmra.mrb[0].mxu0 %v1945
    %v2135 = vpop.f32.mrb[0].mxu0
    %v2136 = vadd.f32 %v2044, %v2135
    %v2137 = vpop.f32.mrb[0].mxu0
    %v2138 = vadd.f32 %v2048, %v2137
    %2139 = vmatprep.mubr.f32.mxu0 0.0
    %2140 = vmatmul.mubr.f32.gmra.mrb[0].mxu0 %v1946
    %v2141 = vpop.f32.mrb[0].mxu0
    %v2142 = vadd.f32 %v2044, %v2141
    %v2143 = vpop.f32.mrb[0].mxu0
    %v2144 = vadd.f32 %v2048, %v2143
    %2145 = vmatprep.mubr.f32.mxu0 0.0
    %2146 = vmatmul.mubr.f32.gmra.mrb[0].mxu0 %v1947
    %v2147 = vpop.f32.mrb[0].mxu0
    %v2148 = vadd.f32 %v2044, %v2147
    %v2149 = vpop.f32.mrb[0].mxu0
    %v2150 = vadd.f32 %v2048, %v2149
    %2151 = vmatprep.mubr.f32.mxu0 0.0
    %2152 = vmatmul.mubr.f32.gmra.mrb[0].mxu0 %v1948
    %v2153 = vpop.f32.mrb[0].mxu0
    %v2154 = vadd.f32 %v2044, %v2153
    %v2155 = vpop.f32.mrb[0].mxu0
    %v2156 = vadd.f32 %v2048, %v2155
    %2157 = vmatprep.mubr.f32.mxu0 0.0
    %2158 = vmatmul.mubr.f32.gmra.mrb[0].mxu0 %v1949
    %v2159 = vpop.f32.mrb[0].mxu0
    %v2160 = vadd.f32 %v2044, %v2159
    %v2161 = vpop.f32.mrb[0].mxu0
    %v2162 = vadd.f32 %v2048, %v2161
    %2163 = vmatprep.mubr.f32.mxu0 0.0
    %2164 = vmatmul.mubr.f32.gmra.mrb[0].mxu0 %v1950
    %v2165 = vpop.f32.mrb[0].mxu0
    %v2166 = vadd.f32 %v2044, %v2165
    %v2167 = vpop.f32.mrb[0].mxu0
    %v2168 = vadd.f32 %v2048, %v2167
    %2169 = vmatprep.mubr.f32.mxu0 0.0
    %2170 = vmatmul.mubr.f32.gmra.mrb[0].mxu0 %v1951
    %v2171 = vpop.f32.mrb[0].mxu0
    %v2172 = vadd.f32 %v2044, %v2171
    %v2173 = vpop.f32.mrb[0].mxu0
    %v2174 = vadd.f32 %v2048, %v2173
    %2175 = vmatprep.mubr.f32.mxu0 0.0
    %2176 = vmatmul.mubr.f32.gmra.mrb[0].mxu0 %v1952
    %v2177 = vpop.f32.mrb[0].mxu0
    %v2178 = vadd.f32 %v2044, %v2177
    %v2179 = vpop.f32.mrb[0].mxu0
    %v2180 = vadd.f32 %v2048, %v2179
    %2181 = vmatprep.mubr.f32.mxu0 0.0
    %2182 = vmatmul.mubr.f32.gmra.mrb[0].mxu0 %v1953
    %v2183 = vpop.f32.mrb[0].mxu0
    %v2184 = vadd.f32 %v2044, %v2183
    %v2185 = vpop.f32.mrb[0].mxu0
    %v2186 = vadd.f32 %v2048, %v2185
    %2187 = vmatprep.mubr.f32.mxu0 0.0
    %2188 = vmatmul.mubr.f32.gmra.mrb[0].mxu0 %v1954
    %v2189 = vpop.f32.mrb[0].mxu0
    %v2190 = vadd.f32 %v2044, %v2189
    %v2191 = vpop.f32.mrb[0].mxu0
    %v2192 = vadd.f32 %v2048, %v2191
    %2193 = vmatprep.mubr.f32.mxu0 0.0
    %2194 = vmatmul.mubr.f32.gmra.mrb[0].mxu0 %v1955
    %v2195 = vpop.f32.mrb[0].mxu0
    %v2196 = vadd.f32 %v2044, %v2195
    %v2197 = vpop.f32.mrb[0].mxu0
    %v2198 = vadd.f32 %v2048, %v2197
    %2199 = vmatprep.mubr.f32.mxu0 0.0
    %2200 = vmatmul.mubr.f32.gmra.mrb[0].mxu0 %v1956
    %v2201 = vpop.f32.mrb[0].mxu0
    %v2202 = vadd.f32 %v2044, %v2201
    %v2203 = vpop.f32.mrb[0].mxu0
    %v2204 = vadd.f32 %v2048, %v2203
    %2205 = vmatprep.mubr.f32.mxu0 0.0
    %2206 = vmatmul.mubr.f32.gmra.mrb[0].mxu0 %v1957
    %v2207 = vpop.f32.mrb[0].mxu0
    %v2208 = vadd.f32 %v2044, %v2207
    %v2209 = vpop.f32.mrb[0].mxu0
    %v2210 = vadd.f32 %v2048, %v2209
    %2211 = vmatprep.mubr.f32.mxu0 0.0
    %2212 = vmatmul.mubr.f32.gmra.mrb[0].mxu0 %v1958
    %v2213 = vpop.f32.mrb[0].mxu0
    %v2214 = vadd.f32 %v2044, %v2213
    %v2215 = vpop.f32.mrb[0].mxu0
    %v2216 = vadd.f32 %v2048, %v2215
    %2217 = vmatprep.mubr.f32.mxu0 0.0
    %2218 = vmatmul.mubr.f32.gmra.mrb[0].mxu0 %v1959
    %v2219 = vpop.f32.mrb[0].mxu0
    %v2220 = vadd.f32 %v2044, %v2219
    %v2221 = vpop.f32.mrb[0].mxu0
    %v2222 = vadd.f32 %v2048, %v2221
    %2223 = vmatprep.mubr.f32.mxu0 0.0
    %2224 = vmatmul.mubr.f32.gmra.mrb[0].mxu0 %v1960
    %v2225 = vpop.f32.mrb[0].mxu0
    %v2226 = vadd.f32 %v2044, %v2225
    %v2227 = vpop.f32.mrb[0].mxu0
    %v2228 = vadd.f32 %v2048, %v2227
    %2229 = vmatprep.mubr.f32.mxu0 0.0
    %2230 = vmatmul.mubr.f32.gmra.mrb[0].mxu0 %v1961
    %v2231 = vpop.f32.mrb[0].mxu0
    %v2232 = vadd.f32 %v2044, %v2231
    %v2233 = vpop.f32.mrb[0].mxu0
    %v2234 = vadd.f32 %v2048, %v2233
    %2235 = vmatprep.mubr.f32.mxu0 0.0
    %2236 = vmatmul.mubr.f32.gmra.mrb[0].mxu0 %v1962
    %v2237 = vpop.f32.mrb[0].mxu0
    %v2238 = vadd.f32 %v2044, %v2237
    %v2239 = vpop.f32.mrb[0].mxu0
    %v2240 = vadd.f32 %v2048, %v2239
    %2241 = vmatprep.mubr.f32.mxu0 0.0
    %2242 = vmatmul.mubr.f32.gmra.mrb[0].mxu0 %v1963
    %v2243 = vpop.f32.mrb[0].mxu0
    %v2244 = vadd.f32 %v2044, %v2243
    %v2245 = vpop.f32.mrb[0].mxu0
    %v2246 = vadd.f32 %v2048, %v2245
    %2247 = vmatprep.mubr.f32.mxu0 0.0
    %2248 = vmatmul.mubr.f32.gmra.mrb[0].mxu0 %v1964
    %v2249 = vpop.f32.mrb[0].mxu0
    %v2250 = vadd.f32 %v2044, %v2249
    %v2251 = vpop.f32.mrb[0].mxu0
    %v2252 = vadd.f32 %v2048, %v2251
    %2253 = vmatprep.mubr.f32.mxu0 0.0
    %2254 = vmatmul.mubr.f32.gmra.mrb[0].mxu0 %v1965
    %v2255 = vpop.f32.mrb[0].mxu0
    %v2256 = vadd.f32 %v2044, %v2255
    %v2257 = vpop.f32.mrb[0].mxu0
    %v2258 = vadd.f32 %v2048, %v2257
    %2259 = vmatprep.mubr.f32.mxu0 0.0
    %2260 = vmatmul.mubr.f32.gmra.mrb[0].mxu0 %v1966
    %v2261 = vpop.f32.mrb[0].mxu0
    %v2262 = vadd.f32 %v2044, %v2261
    %v2263 = vpop.f32.mrb[0].mxu0
    %v2264 = vadd.f32 %v2048, %v2263
    %2265 = vmatprep.mubr.f32.mxu0 0.0
    %2266 = vmatmul.mubr.f32.gmra.mrb[0].mxu0 %v1967
    %v2267 = vpop.f32.mrb[0].mxu0
    %v2268 = vadd.f32 %v2044, %v2267
    %v2269 = vpop.f32.mrb[0].mxu0
    %v2270 = vadd.f32 %v2048, %v2269
    %2271 = vmatprep.mubr.f32.mxu0 0.0
    %2272 = vmatmul.mubr.f32.gmra.mrb[0].mxu0 %v1968
    %v2273 = vpop.f32.mrb[0].mxu0
    %v2274 = vadd.f32 %v2044, %v2273
    %v2275 = vpop.f32.mrb[0].mxu0
    %v2276 = vadd.f32 %v2048, %v2275
    %2277 = vmatprep.mubr.f32.mxu0 0.0
    %2278 = vmatmul.mubr.f32.gmra.mrb[0].mxu0 %v1969
    %v2279 = vpop.f32.mrb[0].mxu0
    %v2280 = vadd.f32 %v2044, %v2279
    %v2281 = vpop.f32.mrb[0].mxu0
    %v2282 = vadd.f32 %v2048, %v2281
    %2283 = vmatprep.mubr.f32.mxu0 0.0
    %2284 = vmatmul.mubr.f32.gmra.mrb[0].mxu0 %v1970
    %v2285 = vpop.f32.mrb[0].mxu0
    %v2286 = vadd.f32 %v2044, %v2285
    %v2287 = vpop.f32.mrb[0].mxu0
    %v2288 = vadd.f32 %v2048, %v2287
    %2289 = vmatprep.mubr.f32.mxu0 0.0
    %2290 = vmatmul.mubr.f32.gmra.mrb[0].mxu0 %v1971
    %v2291 = vpop.f32.mrb[0].mxu0
    %v2292 = vadd.f32 %v2044, %v2291
    %v2293 = vpop.f32.mrb[0].mxu0
    %v2294 = vadd.f32 %v2048, %v2293
    %2295 = vmatprep.mubr.f32.mxu0 0.0
    %2296 = vmatmul.mubr.f32.gmra.mrb[0].mxu0 %v1972
    %v2297 = vpop.f32.mrb[0].mxu0
    %v2298 = vadd.f32 %v2044, %v2297
    %v2299 = vpop.f32.mrb[0].mxu0
    %v2300 = vadd.f32 %v2048, %v2299
    %2301 = vmatprep.mubr.f32.mxu0 0.0
    %2302 = vmatmul.mubr.f32.gmra.mrb[0].mxu0 %v1973
    %v2303 = vpop.f32.mrb[0].mxu0
    %v2304 = vadd.f32 %v2044, %v2303
    %v2305 = vpop.f32.mrb[0].mxu0
    %v2306 = vadd.f32 %v2048, %v2305
    %2307 = vmatprep.mubr.f32.mxu0 0.0
    %2308 = vmatmul.mubr.f32.gmra.mrb[0].mxu0 %v1974
    %v2309 = vpop.f32.mrb[0].mxu0
    %v2310 = vadd.f32 %v2044, %v2309
    %v2311 = vpop.f32.mrb[0].mxu0
    %v2312 = vadd.f32 %v2048, %v2311
    %2313 = vmatprep.mubr.f32.mxu0 0.0
    %2314 = vmatmul.mubr.f32.gmra.mrb[0].mxu0 %v1975
    %v2315 = vpop.f32.mrb[0].mxu0
    %v2316 = vadd.f32 %v2044, %v2315
    %v2317 = vpop.f32.mrb[0].mxu0
    %v2318 = vadd.f32 %v2048, %v2317
    %2319 = vmatprep.mubr.f32.mxu0 0.0
    %2320 = vmatmul.mubr.f32.gmra.mrb[0].mxu0 %v1976
    %v2321 = vpop.f32.mrb[0].mxu0
    %v2322 = vadd.f32 %v2044, %v2321
    %v2323 = vpop.f32.mrb[0].mxu0
    %v2324 = vadd.f32 %v2048, %v2323
    %2325 = vmatprep.mubr.f32.mxu0 0.0
    %2326 = vmatmul.mubr.f32.gmra.mrb[0].mxu0 %v1977
    %v2327 = vpop.f32.mrb[0].mxu0
    %v2328 = vadd.f32 %v2044, %v2327
    %v2329 = vpop.f32.mrb[0].mxu0
    %v2330 = vadd.f32 %v2048, %v2329
    %2331 = vmatprep.mubr.f32.mxu0 0.0
    %2332 = vmatmul.mubr.f32.gmra.mrb[0].mxu0 %v1978
    %v2333 = vpop.f32.mrb[0].mxu0
    %v2334 = vadd.f32 %v2044, %v2333
    %v2335 = vpop.f32.mrb[0].mxu0
    %v2336 = vadd.f32 %v2048, %v2335
    %2337 = vmatprep.mubr.f32.mxu0 0.0
    %2338 = vmatmul.mubr.f32.gmra.mrb[0].mxu0 %v1979
    %v2339 = vpop.f32.mrb[0].mxu0
    %v2340 = vadd.f32 %v2044, %v2339
    %v2341 = vpop.f32.mrb[0].mxu0
    %v2342 = vadd.f32 %v2048, %v2341
    %2343 = vmatprep.mubr.f32.mxu0 0.0
    %2344 = vmatmul.mubr.f32.gmra.mrb[0].mxu0 %v1980
    %v2345 = vpop.f32.mrb[0].mxu0
    %v2346 = vadd.f32 %v2044, %v2345
    %v2347 = vpop.f32.mrb[0].mxu0
    %v2348 = vadd.f32 %v2048, %v2347
    %2349 = vmatprep.mubr.f32.mxu0 0.0
    %2350 = vmatmul.mubr.f32.gmra.mrb[0].mxu0 %v1981
    %v2351 = vpop.f32.mrb[0].mxu0
    %v2352 = vadd.f32 %v2044, %v2351
    %v2353 = vpop.f32.mrb[0].mxu0
    %v2354 = vadd.f32 %v2048, %v2353
    %2355 = vmatprep.mubr.f32.mxu0 0.0
    %2356 = vmatmul.mubr.f32.gmra.mrb[0].mxu0 %v1982
    %v2357 = vpop.f32.mrb[0].mxu0
    %v2358 = vadd.f32 %v2044, %v2357
    %v2359 = vpop.f32.mrb[0].mxu0
    %v2360 = vadd.f32 %v2048, %v2359
    %2361 = vmatprep.mubr.f32.mxu0 0.0
    %2362 = vmatmul.mubr.f32.gmra.mrb[0].mxu0 %v1983
    %v2363 = vpop.f32.mrb[0].mxu0
    %v2364 = vadd.f32 %v2044, %v2363
    %v2365 = vpop.f32.mrb[0].mxu0
    %v2366 = vadd.f32 %v2048, %v2365
    %2367 = vmatprep.mubr.f32.mxu0 0.0
    %2368 = vmatmul.mubr.f32.gmra.mrb[0].mxu0 %v1984
    %v2369 = vpop.f32.mrb[0].mxu0
    %v2370 = vadd.f32 %v2044, %v2369
    %v2371 = vpop.f32.mrb[0].mxu0
    %v2372 = vadd.f32 %v2048, %v2371
    %2373 = vmatprep.mubr.f32.mxu0 0.0
    %2374 = vmatmul.mubr.f32.gmra.mrb[0].mxu0 %v1985
    %v2375 = vpop.f32.mrb[0].mxu0
    %v2376 = vadd.f32 %v2044, %v2375
    %v2377 = vpop.f32.mrb[0].mxu0
    %v2378 = vadd.f32 %v2048, %v2377
    %2379 = vmatprep.mubr.f32.mxu0 0.0
    %2380 = vmatmul.mubr.f32.gmra.mrb[0].mxu0 %v1986
    %v2381 = vpop.f32.mrb[0].mxu0
    %v2382 = vadd.f32 %v2044, %v2381
    %v2383 = vpop.f32.mrb[0].mxu0
    %v2384 = vadd.f32 %v2048, %v2383
    %2385 = vmatprep.mubr.f32.mxu0 0.0
    %2386 = vmatmul.mubr.f32.gmra.mrb[0].mxu0 %v1987
    %v2387 = vpop.f32.mrb[0].mxu0
    %v2388 = vadd.f32 %v2044, %v2387
    %v2389 = vpop.f32.mrb[0].mxu0
    %v2390 = vadd.f32 %v2048, %v2389
    %2391 = vmatprep.mubr.f32.mxu0 0.0
    %2392 = vmatmul.mubr.f32.gmra.mrb[0].mxu0 %v1988
    %v2393 = vpop.f32.mrb[0].mxu0
    %v2394 = vadd.f32 %v2044, %v2393
    %v2395 = vpop.f32.mrb[0].mxu0
    %v2396 = vadd.f32 %v2048, %v2395
    %2397 = vmatprep.mubr.f32.mxu0 0.0
    %2398 = vmatmul.mubr.f32.gmra.mrb[0].mxu0 %v1989
    %v2399 = vpop.f32.mrb[0].mxu0
    %v2400 = vadd.f32 %v2044, %v2399
    %v2401 = vpop.f32.mrb[0].mxu0
    %v2402 = vadd.f32 %v2048, %v2401
    %2403 = vmatprep.mubr.f32.mxu0 0.0
    %2404 = vmatmul.mubr.f32.gmra.mrb[0].mxu0 %v1990
    %v2405 = vpop.f32.mrb[0].mxu0
    %v2406 = vadd.f32 %v2044, %v2405
    %v2407 = vpop.f32.mrb[0].mxu0
    %v2408 = vadd.f32 %v2048, %v2407
    %2409 = vmatprep.mubr.f32.mxu0 0.0
    %2410 = vmatmul.mubr.f32.gmra.mrb[0].mxu0 %v1991
    %v2411 = vpop.f32.mrb[0].mxu0
    %v2412 = vadd.f32 %v2044, %v2411
    %v2413 = vpop.f32.mrb[0].mxu0
    %v2414 = vadd.f32 %v2048, %v2413
    %2415 = vmatprep.mubr.f32.mxu0 0.0
    %2416 = vmatmul.mubr.f32.gmra.mrb[0].mxu0 %v1992
    %v2417 = vpop.f32.mrb[0].mxu0
    %v2418 = vadd.f32 %v2044, %v2417
    %v2419 = vpop.f32.mrb[0].mxu0
    %v2420 = vadd.f32 %v2048, %v2419
    %2421 = vmatprep.mubr.f32.mxu0 0.0
    %2422 = vmatmul.mubr.f32.gmra.mrb[0].mxu0 %v1993
    %v2423 = vpop.f32.mrb[0].mxu0
    %v2424 = vadd.f32 %v2044, %v2423
    %v2425 = vpop.f32.mrb[0].mxu0
    %v2426 = vadd.f32 %v2048, %v2425
    %2427 = vmatprep.mubr.f32.mxu0 0.0
    %2428 = vmatmul.mubr.f32.gmra.mrb[0].mxu0 %v1994
    %v2429 = vpop.f32.mrb[0].mxu0
    %v2430 = vadd.f32 %v2044, %v2429
    %v2431 = vpop.f32.mrb[0].mxu0
    %v2432 = vadd.f32 %v2048, %v2431
    %2433 = vmatprep.mubr.f32.mxu0 0.0
    %2434 = vmatmul.mubr.f32.gmra.mrb[0].mxu0 %v1995
    %v2435 = vpop.f32.mrb[0].mxu0
    %v2436 = vadd.f32 %v2044, %v2435
    %v2437 = vpop.f32.mrb[0].mxu0
    %v2438 = vadd.f32 %v2048, %v2437
    %2439 = vmatprep.mubr.f32.mxu0 0.0
    %2440 = vmatmul.mubr.f32.gmra.mrb[0].mxu0 %v1996
    %v2441 = vpop.f32.mrb[0].mxu0
    %v2442 = vadd.f32 %v2044, %v2441
    %v2443 = vpop.f32.mrb[0].mxu0
    %v2444 = vadd.f32 %v2048, %v2443
    %2445 = vmatprep.mubr.f32.mxu0 0.0
    %2446 = vmatmul.mubr.f32.gmra.mrb[0].mxu0 %v1997
    %v2447 = vpop.f32.mrb[0].mxu0
    %v2448 = vadd.f32 %v2044, %v2447
    %v2449 = vpop.f32.mrb[0].mxu0
    %v2450 = vadd.f32 %v2048, %v2449
    %2451 = vmatprep.mubr.f32.mxu0 0.0
    %2452 = vmatmul.mubr.f32.gmra.mrb[0].mxu0 %v1998
    %v2453 = vpop.f32.mrb[0].mxu0
    %v2454 = vadd.f32 %v2044, %v2453
    %v2455 = vpop.f32.mrb[0].mxu0
    %v2456 = vadd.f32 %v2048, %v2455
    %2457 = vmatprep.mubr.f32.mxu0 0.0
    %2458 = vmatmul.mubr.f32.gmra.mrb[0].mxu0 %v1999
    %v2459 = vpop.f32.mrb[0].mxu0
    %v2460 = vadd.f32 %v2044, %v2459
    %v2461 = vpop.f32.mrb[0].mxu0
    %v2462 = vadd.f32 %v2048, %v2461
    %2463 = vmatprep.mubr.f32.mxu0 0.0
    %2464 = vmatmul.mubr.f32.gmra.mrb[0].mxu0 %v2000
    %v2465 = vpop.f32.mrb[0].mxu0
    %v2466 = vadd.f32 %v2044, %v2465
    %v2467 = vpop.f32.mrb[0].mxu0
    %v2468 = vadd.f32 %v2048, %v2467
    %2469 = vmatprep.mubr.f32.mxu0 0.0
    %2470 = vmatmul.mubr.f32.gmra.mrb[0].mxu0 %v2001
    %v2471 = vpop.f32.mrb[0].mxu0
    %v2472 = vadd.f32 %v2044, %v2471
    %v2473 = vpop.f32.mrb[0].mxu0
    %v2474 = vadd.f32 %v2048, %v2473
    %2475 = vmatprep.mubr.f32.mxu0 0.0
    %2476 = vmatmul.mubr.f32.gmra.mrb[0].mxu0 %v2002
    %v2477 = vpop.f32.mrb[0].mxu0
    %v2478 = vadd.f32 %v2044, %v2477
    %v2479 = vpop.f32.mrb[0].mxu0
    %v2480 = vadd.f32 %v2048, %v2479
    %2481 = vmatprep.mubr.f32.mxu0 0.0
    %2482 = vmatmul.mubr.f32.gmra.mrb[0].mxu0 %v2003
    %v2483 = vpop.f32.mrb[0].mxu0
    %v2484 = vadd.f32 %v2044, %v2483
    %v2485 = vpop.f32.mrb[0].mxu0
    %v2486 = vadd.f32 %v2048, %v2485
    %2487 = vmatprep.mubr.f32.mxu0 0.0
    %2488 = vmatmul.mubr.f32.gmra.mrb[0].mxu0 %v2004
    %v2489 = vpop.f32.mrb[0].mxu0
    %v2490 = vadd.f32 %v2044, %v2489
    %v2491 = vpop.f32.mrb[0].mxu0
    %v2492 = vadd.f32 %v2048, %v2491
    %2493 = vmatprep.mubr.f32.mxu0 0.0
    %2494 = vmatmul.mubr.f32.gmra.mrb[0].mxu0 %v2005
    %v2495 = vpop.f32.mrb[0].mxu0
    %v2496 = vadd.f32 %v2044, %v2495
    %v2497 = vpop.f32.mrb[0].mxu0
    %v2498 = vadd.f32 %v2048, %v2497
    %2499 = vdwg.mxu0
    %v2500 = vmax.f32 %v2118, 0.0
    %v2501 = vmax.f32 %v2120, 0.0
    %v2502 = vmax.f32 %v2124, 0.0
    %v2503 = vmax.f32 %v2126, 0.0
    %v2504 = vmax.f32 %v2130, 0.0
    %v2505 = vmax.f32 %v2132, 0.0
    %v2506 = vmax.f32 %v2136, 0.0
    %v2507 = vmax.f32 %v2138, 0.0
    %v2508 = vmax.f32 %v2142, 0.0
    %v2509 = vmax.f32 %v2144, 0.0
    %v2510 = vmax.f32 %v2148, 0.0
    %v2511 = vmax.f32 %v2150, 0.0
    %v2512 = vmax.f32 %v2154, 0.0
    %v2513 = vmax.f32 %v2156, 0.0
    %v2514 = vmax.f32 %v2160, 0.0
    %v2515 = vmax.f32 %v2162, 0.0
    %v2516 = vmax.f32 %v2166, 0.0
    %v2517 = vmax.f32 %v2168, 0.0
    %v2518 = vmax.f32 %v2172, 0.0
    %v2519 = vmax.f32 %v2174, 0.0
    %v2520 = vmax.f32 %v2178, 0.0
    %v2521 = vmax.f32 %v2180, 0.0
    %v2522 = vmax.f32 %v2184, 0.0
    %v2523 = vmax.f32 %v2186, 0.0
    %v2524 = vmax.f32 %v2190, 0.0
    %v2525 = vmax.f32 %v2192, 0.0
    %v2526 = vmax.f32 %v2196, 0.0
    %v2527 = vmax.f32 %v2198, 0.0
    %v2528 = vmax.f32 %v2202, 0.0
    %v2529 = vmax.f32 %v2204, 0.0
    %v2530 = vmax.f32 %v2208, 0.0
    %v2531 = vmax.f32 %v2210, 0.0
    %v2532 = vmax.f32 %v2214, 0.0
    %v2533 = vmax.f32 %v2216, 0.0
    %v2534 = vmax.f32 %v2220, 0.0
    %v2535 = vmax.f32 %v2222, 0.0
    %v2536 = vmax.f32 %v2226, 0.0
    %v2537 = vmax.f32 %v2228, 0.0
    %v2538 = vmax.f32 %v2232, 0.0
    %v2539 = vmax.f32 %v2234, 0.0
    %v2540 = vmax.f32 %v2238, 0.0
    %v2541 = vmax.f32 %v2240, 0.0
    %v2542 = vmax.f32 %v2244, 0.0
    %v2543 = vmax.f32 %v2246, 0.0
    %v2544 = vmax.f32 %v2250, 0.0
    %v2545 = vmax.f32 %v2252, 0.0
    %v2546 = vmax.f32 %v2256, 0.0
    %v2547 = vmax.f32 %v2258, 0.0
    %v2548 = vmax.f32 %v2262, 0.0
    %v2549 = vmax.f32 %v2264, 0.0
    %v2550 = vmax.f32 %v2268, 0.0
    %v2551 = vmax.f32 %v2270, 0.0
    %v2552 = vmax.f32 %v2274, 0.0
    %v2553 = vmax.f32 %v2276, 0.0
    %v2554 = vmax.f32 %v2280, 0.0
    %v2555 = vmax.f32 %v2282, 0.0
    %v2556 = vmax.f32 %v2286, 0.0
    %v2557 = vmax.f32 %v2288, 0.0
    %v2558 = vmax.f32 %v2292, 0.0
    %v2559 = vmax.f32 %v2294, 0.0
    %v2560 = vmax.f32 %v2298, 0.0
    %v2561 = vmax.f32 %v2300, 0.0
    %v2562 = vmax.f32 %v2304, 0.0
    %v2563 = vmax.f32 %v2306, 0.0
    %v2564 = vmax.f32 %v2310, 0.0
    %v2565 = vmax.f32 %v2312, 0.0
    %v2566 = vmax.f32 %v2316, 0.0
    %v2567 = vmax.f32 %v2318, 0.0
    %v2568 = vmax.f32 %v2322, 0.0
    %v2569 = vmax.f32 %v2324, 0.0
    %v2570 = vmax.f32 %v2328, 0.0
    %v2571 = vmax.f32 %v2330, 0.0
    %v2572 = vmax.f32 %v2334, 0.0
    %v2573 = vmax.f32 %v2336, 0.0
    %v2574 = vmax.f32 %v2340, 0.0
    %v2575 = vmax.f32 %v2342, 0.0
    %v2576 = vmax.f32 %v2346, 0.0
    %v2577 = vmax.f32 %v2348, 0.0
    %v2578 = vmax.f32 %v2352, 0.0
    %v2579 = vmax.f32 %v2354, 0.0
    %v2580 = vmax.f32 %v2358, 0.0
    %v2581 = vmax.f32 %v2360, 0.0
    %v2582 = vmax.f32 %v2364, 0.0
    %v2583 = vmax.f32 %v2366, 0.0
    %v2584 = vmax.f32 %v2370, 0.0
    %v2585 = vmax.f32 %v2372, 0.0
    %v2586 = vmax.f32 %v2376, 0.0
    %v2587 = vmax.f32 %v2378, 0.0
    %v2588 = vmax.f32 %v2382, 0.0
    %v2589 = vmax.f32 %v2384, 0.0
    %v2590 = vmax.f32 %v2388, 0.0
    %v2591 = vmax.f32 %v2390, 0.0
    %v2592 = vmax.f32 %v2394, 0.0
    %v2593 = vmax.f32 %v2396, 0.0
    %v2594 = vmax.f32 %v2400, 0.0
    %v2595 = vmax.f32 %v2402, 0.0
    %v2596 = vmax.f32 %v2406, 0.0
    %v2597 = vmax.f32 %v2408, 0.0
    %v2598 = vmax.f32 %v2412, 0.0
    %v2599 = vmax.f32 %v2414, 0.0
    %v2600 = vmax.f32 %v2418, 0.0
    %v2601 = vmax.f32 %v2420, 0.0
    %v2602 = vmax.f32 %v2424, 0.0
    %v2603 = vmax.f32 %v2426, 0.0
    %v2604 = vmax.f32 %v2430, 0.0
    %v2605 = vmax.f32 %v2432, 0.0
    %v2606 = vmax.f32 %v2436, 0.0
    %v2607 = vmax.f32 %v2438, 0.0
    %v2608 = vmax.f32 %v2442, 0.0
    %v2609 = vmax.f32 %v2444, 0.0
    %v2610 = vmax.f32 %v2448, 0.0
    %v2611 = vmax.f32 %v2450, 0.0
    %v2612 = vmax.f32 %v2454, 0.0
    %v2613 = vmax.f32 %v2456, 0.0
    %v2614 = vmax.f32 %v2460, 0.0
    %v2615 = vmax.f32 %v2462, 0.0
    %v2616 = vmax.f32 %v2466, 0.0
    %v2617 = vmax.f32 %v2468, 0.0
    %v2618 = vmax.f32 %v2472, 0.0
    %v2619 = vmax.f32 %v2474, 0.0
    %v2620 = vmax.f32 %v2478, 0.0
    %v2621 = vmax.f32 %v2480, 0.0
    %v2622 = vmax.f32 %v2484, 0.0
    %v2623 = vmax.f32 %v2486, 0.0
    %v2624 = vmax.f32 %v2490, 0.0
    %v2625 = vmax.f32 %v2492, 0.0
    %v2626 = vmax.f32 %v2496, 0.0
    %v2627 = vmax.f32 %v2498, 0.0
    %v2628 = vmax.f32 %v2500, %v2502
    %v2629 = vmax.f32 %v2628, %v2504
    %v2630 = vmax.f32 %v2629, %v2506
    %v2631 = vmax.f32 %v2630, %v2508
    %v2632 = vmax.f32 %v2631, %v2510
    %v2633 = vmax.f32 %v2632, %v2512
    %v2634 = vmax.f32 %v2633, %v2514
    %v2635 = vmax.f32 %v2634, %v2516
    %v2636 = vmax.f32 %v2635, %v2518
    %v2637 = vmax.f32 %v2636, %v2520
    %v2638 = vmax.f32 %v2637, %v2522
    %v2639 = vmax.f32 %v2638, %v2524
    %v2640 = vmax.f32 %v2639, %v2526
    %v2641 = vmax.f32 %v2640, %v2528
    %v2642 = vmax.f32 %v2641, %v2530
    %v2643 = vrot.slane %v2642, 4
    %v2644 = vmax.f32 %v2642, %v2643
    %v2645 = vrot.slane %v2644, 2
    %v2646 = vmax.f32 %v2644, %v2645
    %v2647 = vrot.slane %v2646, 1
    %v2648 = vmax.f32 %v2646, %v2647
    %v2649 = vmax.f32 %v2501, %v2503
    %v2650 = vmax.f32 %v2649, %v2505
    %v2651 = vmax.f32 %v2650, %v2507
    %v2652 = vmax.f32 %v2651, %v2509
    %v2653 = vmax.f32 %v2652, %v2511
    %v2654 = vmax.f32 %v2653, %v2513
    %v2655 = vmax.f32 %v2654, %v2515
    %v2656 = vmax.f32 %v2655, %v2517
    %v2657 = vmax.f32 %v2656, %v2519
    %v2658 = vmax.f32 %v2657, %v2521
    %v2659 = vmax.f32 %v2658, %v2523
    %v2660 = vmax.f32 %v2659, %v2525
    %v2661 = vmax.f32 %v2660, %v2527
    %v2662 = vmax.f32 %v2661, %v2529
    %v2663 = vmax.f32 %v2662, %v2531
    %v2664 = vrot.slane %v2663, 4
    %v2665 = vmax.f32 %v2663, %v2664
    %v2666 = vrot.slane %v2665, 2
    %v2667 = vmax.f32 %v2665, %v2666
    %v2668 = vrot.slane %v2667, 1
    %v2669 = vmax.f32 %v2667, %v2668
    %v2670 = vmax.f32 %v2532, %v2534
    %v2671 = vmax.f32 %v2670, %v2536
    %v2672 = vmax.f32 %v2671, %v2538
    %v2673 = vmax.f32 %v2672, %v2540
    %v2674 = vmax.f32 %v2673, %v2542
    %v2675 = vmax.f32 %v2674, %v2544
    %v2676 = vmax.f32 %v2675, %v2546
    %v2677 = vmax.f32 %v2676, %v2548
    %v2678 = vmax.f32 %v2677, %v2550
    %v2679 = vmax.f32 %v2678, %v2552
    %v2680 = vmax.f32 %v2679, %v2554
    %v2681 = vmax.f32 %v2680, %v2556
    %v2682 = vmax.f32 %v2681, %v2558
    %v2683 = vmax.f32 %v2682, %v2560
    %v2684 = vmax.f32 %v2683, %v2562
    %v2685 = vrot.slane %v2684, 4
    %v2686 = vmax.f32 %v2684, %v2685
    %v2687 = vrot.slane %v2686, 2
    %v2688 = vmax.f32 %v2686, %v2687
    %v2689 = vrot.slane %v2688, 1
    %v2690 = vmax.f32 %v2688, %v2689
    %v2691 = vmax.f32 %v2533, %v2535
    %v2692 = vmax.f32 %v2691, %v2537
    %v2693 = vmax.f32 %v2692, %v2539
    %v2694 = vmax.f32 %v2693, %v2541
    %v2695 = vmax.f32 %v2694, %v2543
    %v2696 = vmax.f32 %v2695, %v2545
    %v2697 = vmax.f32 %v2696, %v2547
    %v2698 = vmax.f32 %v2697, %v2549
    %v2699 = vmax.f32 %v2698, %v2551
    %v2700 = vmax.f32 %v2699, %v2553
    %v2701 = vmax.f32 %v2700, %v2555
    %v2702 = vmax.f32 %v2701, %v2557
    %v2703 = vmax.f32 %v2702, %v2559
    %v2704 = vmax.f32 %v2703, %v2561
    %v2705 = vmax.f32 %v2704, %v2563
    %v2706 = vrot.slane %v2705, 4
    %v2707 = vmax.f32 %v2705, %v2706
    %v2708 = vrot.slane %v2707, 2
    %v2709 = vmax.f32 %v2707, %v2708
    %v2710 = vrot.slane %v2709, 1
    %v2711 = vmax.f32 %v2709, %v2710
    %v2712 = vmax.f32 %v2564, %v2566
    %v2713 = vmax.f32 %v2712, %v2568
    %v2714 = vmax.f32 %v2713, %v2570
    %v2715 = vmax.f32 %v2714, %v2572
    %v2716 = vmax.f32 %v2715, %v2574
    %v2717 = vmax.f32 %v2716, %v2576
    %v2718 = vmax.f32 %v2717, %v2578
    %v2719 = vmax.f32 %v2718, %v2580
    %v2720 = vmax.f32 %v2719, %v2582
    %v2721 = vmax.f32 %v2720, %v2584
    %v2722 = vmax.f32 %v2721, %v2586
    %v2723 = vmax.f32 %v2722, %v2588
    %v2724 = vmax.f32 %v2723, %v2590
    %v2725 = vmax.f32 %v2724, %v2592
    %v2726 = vmax.f32 %v2725, %v2594
    %v2727 = vrot.slane %v2726, 4
    %v2728 = vmax.f32 %v2726, %v2727
    %v2729 = vrot.slane %v2728, 2
    %v2730 = vmax.f32 %v2728, %v2729
    %v2731 = vrot.slane %v2730, 1
    %v2732 = vmax.f32 %v2730, %v2731
    %v2733 = vmax.f32 %v2565, %v2567
    %v2734 = vmax.f32 %v2733, %v2569
    %v2735 = vmax.f32 %v2734, %v2571
    %v2736 = vmax.f32 %v2735, %v2573
    %v2737 = vmax.f32 %v2736, %v2575
    %v2738 = vmax.f32 %v2737, %v2577
    %v2739 = vmax.f32 %v2738, %v2579
    %v2740 = vmax.f32 %v2739, %v2581
    %v2741 = vmax.f32 %v2740, %v2583
    %v2742 = vmax.f32 %v2741, %v2585
    %v2743 = vmax.f32 %v2742, %v2587
    %v2744 = vmax.f32 %v2743, %v2589
    %v2745 = vmax.f32 %v2744, %v2591
    %v2746 = vmax.f32 %v2745, %v2593
    %v2747 = vmax.f32 %v2746, %v2595
    %v2748 = vrot.slane %v2747, 4
    %v2749 = vmax.f32 %v2747, %v2748
    %v2750 = vrot.slane %v2749, 2
    %v2751 = vmax.f32 %v2749, %v2750
    %v2752 = vrot.slane %v2751, 1
    %v2753 = vmax.f32 %v2751, %v2752
    %v2754 = vmax.f32 %v2596, %v2598
    %v2755 = vmax.f32 %v2754, %v2600
    %v2756 = vmax.f32 %v2755, %v2602
    %v2757 = vmax.f32 %v2756, %v2604
    %v2758 = vmax.f32 %v2757, %v2606
    %v2759 = vmax.f32 %v2758, %v2608
    %v2760 = vmax.f32 %v2759, %v2610
    %v2761 = vmax.f32 %v2760, %v2612
    %v2762 = vmax.f32 %v2761, %v2614
    %v2763 = vmax.f32 %v2762, %v2616
    %v2764 = vmax.f32 %v2763, %v2618
    %v2765 = vmax.f32 %v2764, %v2620
    %v2766 = vmax.f32 %v2765, %v2622
    %v2767 = vmax.f32 %v2766, %v2624
    %v2768 = vmax.f32 %v2767, %v2626
    %v2769 = vrot.slane %v2768, 4
    %v2770 = vmax.f32 %v2768, %v2769
    %v2771 = vrot.slane %v2770, 2
    %v2772 = vmax.f32 %v2770, %v2771
    %v2773 = vrot.slane %v2772, 1
    %v2774 = vmax.f32 %v2772, %v2773
    %v2775 = vmax.f32 %v2597, %v2599
    %v2776 = vmax.f32 %v2775, %v2601
    %v2777 = vmax.f32 %v2776, %v2603
    %v2778 = vmax.f32 %v2777, %v2605
    %v2779 = vmax.f32 %v2778, %v2607
    %v2780 = vmax.f32 %v2779, %v2609
    %v2781 = vmax.f32 %v2780, %v2611
    %v2782 = vmax.f32 %v2781, %v2613
    %v2783 = vmax.f32 %v2782, %v2615
    %v2784 = vmax.f32 %v2783, %v2617
    %v2785 = vmax.f32 %v2784, %v2619
    %v2786 = vmax.f32 %v2785, %v2621
    %v2787 = vmax.f32 %v2786, %v2623
    %v2788 = vmax.f32 %v2787, %v2625
    %v2789 = vmax.f32 %v2788, %v2627
    %v2790 = vrot.slane %v2789, 4
    %v2791 = vmax.f32 %v2789, %v2790
    %v2792 = vrot.slane %v2791, 2
    %v2793 = vmax.f32 %v2791, %v2792
    %v2794 = vrot.slane %v2793, 1
    %v2795 = vmax.f32 %v2793, %v2794
    %v2796 = vld [vmem:[%s4] sm:$0xff]
    %v2797 = vld [vmem:[%s4 + $0x8] sm:$0xff]
    %v2798 = vld [vmem:[%s4 + $0x10] sm:$0xff]
    %v2799 = vld [vmem:[%s4 + $0x18] sm:$0xff]
    %v2800 = vld [vmem:[%s4 + $0x20] sm:$0xff]
    %v2801 = vld [vmem:[%s4 + $0x28] sm:$0xff]
    %v2802 = vld [vmem:[%s4 + $0x30] sm:$0xff]
    %v2803 = vld [vmem:[%s4 + $0x38] sm:$0xff]
    %v2804 = vld [vmem:[%s4 + $0x40] sm:$0xff]
    %v2805 = vld [vmem:[%s4 + $0x48] sm:$0xff]
    %v2806 = vld [vmem:[%s4 + $0x50] sm:$0xff]
    %v2807 = vld [vmem:[%s4 + $0x58] sm:$0xff]
    %v2808 = vld [vmem:[%s4 + $0x60] sm:$0xff]
    %v2809 = vld [vmem:[%s4 + $0x68] sm:$0xff]
    %v2810 = vld [vmem:[%s4 + $0x70] sm:$0xff]
    %v2811 = vld [vmem:[%s4 + $0x78] sm:$0xff]
    %v2812 = vld [vmem:[%s4 + $0x80] sm:$0xff]
    %v2813 = vld [vmem:[%s4 + $0x88] sm:$0xff]
    %v2814 = vld [vmem:[%s4 + $0x90] sm:$0xff]
    %v2815 = vld [vmem:[%s4 + $0x98] sm:$0xff]
    %v2816 = vld [vmem:[%s4 + $0xa0] sm:$0xff]
    %v2817 = vld [vmem:[%s4 + $0xa8] sm:$0xff]
    %v2818 = vld [vmem:[%s4 + $0xb0] sm:$0xff]
    %v2819 = vld [vmem:[%s4 + $0xb8] sm:$0xff]
    %v2820 = vld [vmem:[%s4 + $0xc0] sm:$0xff]
    %v2821 = vld [vmem:[%s4 + $0xc8] sm:$0xff]
    %v2822 = vld [vmem:[%s4 + $0xd0] sm:$0xff]
    %v2823 = vld [vmem:[%s4 + $0xd8] sm:$0xff]
    %v2824 = vld [vmem:[%s4 + $0xe0] sm:$0xff]
    %v2825 = vld [vmem:[%s4 + $0xe8] sm:$0xff]
    %v2826 = vld [vmem:[%s4 + $0xf0] sm:$0xff]
    %v2827 = vld [vmem:[%s4 + $0xf8] sm:$0xff]
    %v2828 = vld [vmem:[%s5 + $0x4] ss:$0 sm:$0xff]
    %vm2837 = vcmask 1041409
    %v2838 = vsel %vm2837, %v2690, %v2648
    %vm2839 = vcmask 1042434
    %v2840 = vsel %vm2839, %v2732, %v2838
    %vm2841 = vcmask 1043459
    %v2842 = vsel %vm2841, %v2774, %v2840
    %v2843 = vsel %vm2837, %v2711, %v2669
    %v2844 = vsel %vm2839, %v2753, %v2843
    %v2845 = vsel %vm2841, %v2795, %v2844
    %2848 = vmatprep.subr.mxu0 0.0
    %2849 = vmatpush1.msra.mxu0 %v2796
    %2850 = vmatprep.subr.mxu0 0.0
    %2851 = vmatpush1.msra.mxu0 %v2797
    %2852 = vmatprep.subr.mxu0 0.0
    %2853 = vmatpush1.msra.mxu0 %v2798
    %2854 = vmatprep.subr.mxu0 0.0
    %2855 = vmatpush1.msra.mxu0 %v2799
    %2856 = vmatprep.subr.mxu0 0.0
    %2857 = vmatpush1.msra.mxu0 %v2800
    %2858 = vmatprep.subr.mxu0 0.0
    %2859 = vmatpush1.msra.mxu0 %v2801
    %2860 = vmatprep.subr.mxu0 0.0
    %2861 = vmatpush1.msra.mxu0 %v2802
    %2862 = vmatprep.subr.mxu0 0.0
    %2863 = vmatpush1.msra.mxu0 %v2803
    %2864 = vmatprep.subr.mxu0 0.0
    %2865 = vmatpush1.msra.mxu0 %v2804
    %2866 = vmatprep.subr.mxu0 0.0
    %2867 = vmatpush1.msra.mxu0 %v2805
    %2868 = vmatprep.subr.mxu0 0.0
    %2869 = vmatpush1.msra.mxu0 %v2806
    %2870 = vmatprep.subr.mxu0 0.0
    %2871 = vmatpush1.msra.mxu0 %v2807
    %2872 = vmatprep.subr.mxu0 0.0
    %2873 = vmatpush1.msra.mxu0 %v2808
    %2874 = vmatprep.subr.mxu0 0.0
    %2875 = vmatpush1.msra.mxu0 %v2809
    %2876 = vmatprep.subr.mxu0 0.0
    %2877 = vmatpush1.msra.mxu0 %v2810
    %2878 = vmatprep.subr.mxu0 0.0
    %2879 = vmatpush1.msra.mxu0 %v2811
    %2880 = vmatprep.subr.mxu0 0.0
    %2881 = vmatpush1.msra.mxu0 %v2812
    %2882 = vmatprep.subr.mxu0 0.0
    %2883 = vmatpush1.msra.mxu0 %v2813
    %2884 = vmatprep.subr.mxu0 0.0
    %2885 = vmatpush1.msra.mxu0 %v2814
    %2886 = vmatprep.subr.mxu0 0.0
    %2887 = vmatpush1.msra.mxu0 %v2815
    %2888 = vmatprep.subr.mxu0 0.0
    %2889 = vmatpush1.msra.mxu0 %v2816
    %2890 = vmatprep.subr.mxu0 0.0
    %2891 = vmatpush1.msra.mxu0 %v2817
    %2892 = vmatprep.subr.mxu0 0.0
    %2893 = vmatpush1.msra.mxu0 %v2818
    %2894 = vmatprep.subr.mxu0 0.0
    %2895 = vmatpush1.msra.mxu0 %v2819
    %2896 = vmatprep.subr.mxu0 0.0
    %2897 = vmatpush1.msra.mxu0 %v2820
    %2898 = vmatprep.subr.mxu0 0.0
    %2899 = vmatpush1.msra.mxu0 %v2821
    %2900 = vmatprep.subr.mxu0 0.0
    %2901 = vmatpush1.msra.mxu0 %v2822
    %2902 = vmatprep.subr.mxu0 0.0
    %2903 = vmatpush1.msra.mxu0 %v2823
    %2904 = vmatprep.subr.mxu0 0.0
    %2905 = vmatpush1.msra.mxu0 %v2824
    %2906 = vmatprep.subr.mxu0 0.0
    %2907 = vmatpush1.msra.mxu0 %v2825
    %2908 = vmatprep.subr.mxu0 0.0
    %2909 = vmatpush1.msra.mxu0 %v2826
    %2910 = vmatprep.subr.mxu0 0.0
    %2911 = vmatpush1.msra.mxu0 %v2827
    %2912 = vmatprep.mubr.f32.mxu0 %v2845
    %2913 = vmatmul.mubr.f32.gmra.mrb[0].mxu0 %v2842
    %v2914 = vpop.f32.mrb[0].mxu0
    %v2915 = vadd.f32 %v2828, %v2914
    %v2916 = vpop.f32.mrb[0].mxu0
    %2917 = vdwg.mxu0
    %v2918 = vld [vmem:[#allocation2 + $0x100] sm:$0xff]
    %v2919 = vld [vmem:[#allocation2 + $0x108] sm:$0xff]
    %v2920 = vld [vmem:[#allocation2 + $0x110] sm:$0xff]
    %v2921 = vld [vmem:[#allocation2 + $0x118] sm:$0xff]
    %v2922 = vld [vmem:[#allocation2 + $0x120] sm:$0xff]
    %v2923 = vld [vmem:[#allocation2 + $0x128] sm:$0xff]
    %v2924 = vld [vmem:[#allocation2 + $0x130] sm:$0xff]
    %v2925 = vld [vmem:[#allocation2 + $0x138] sm:$0xff]
    %v2926 = vld [vmem:[#allocation2 + $0x140] sm:$0xff]
    %v2927 = vld [vmem:[#allocation2 + $0x148] sm:$0xff]
    %v2928 = vld [vmem:[#allocation2 + $0x150] sm:$0xff]
    %v2929 = vld [vmem:[#allocation2 + $0x158] sm:$0xff]
    %v2930 = vld [vmem:[#allocation2 + $0x160] sm:$0xff]
    %v2931 = vld [vmem:[#allocation2 + $0x168] sm:$0xff]
    %v2932 = vld [vmem:[#allocation2 + $0x170] sm:$0xff]
    %v2933 = vld [vmem:[#allocation2 + $0x178] sm:$0xff]
    %v2934 = vld [vmem:[#allocation2 + $0x180] sm:$0xff]
    %v2935 = vld [vmem:[#allocation2 + $0x188] sm:$0xff]
    %v2936 = vld [vmem:[#allocation2 + $0x190] sm:$0xff]
    %v2937 = vld [vmem:[#allocation2 + $0x198] sm:$0xff]
    %v2938 = vld [vmem:[#allocation2 + $0x1a0] sm:$0xff]
    %v2939 = vld [vmem:[#allocation2 + $0x1a8] sm:$0xff]
    %v2940 = vld [vmem:[#allocation2 + $0x1b0] sm:$0xff]
    %v2941 = vld [vmem:[#allocation2 + $0x1b8] sm:$0xff]
    %v2942 = vld [vmem:[#allocation2 + $0x1c0] sm:$0xff]
    %v2943 = vld [vmem:[#allocation2 + $0x1c8] sm:$0xff]
    %v2944 = vld [vmem:[#allocation2 + $0x1d0] sm:$0xff]
    %v2945 = vld [vmem:[#allocation2 + $0x1d8] sm:$0xff]
    %v2946 = vld [vmem:[#allocation2 + $0x1e0] sm:$0xff]
    %v2947 = vld [vmem:[#allocation2 + $0x1e8] sm:$0xff]
    %v2948 = vld [vmem:[#allocation2 + $0x1f0] sm:$0xff]
    %v2949 = vld [vmem:[#allocation2 + $0x1f8] sm:$0xff]
    %v2950 = vld [vmem:[#allocation2 + $0x200] sm:$0xff]
    %v2951 = vld [vmem:[#allocation2 + $0x208] sm:$0xff]
    %v2952 = vld [vmem:[#allocation2 + $0x210] sm:$0xff]
    %v2953 = vld [vmem:[#allocation2 + $0x218] sm:$0xff]
    %v2954 = vld [vmem:[#allocation2 + $0x220] sm:$0xff]
    %v2955 = vld [vmem:[#allocation2 + $0x228] sm:$0xff]
    %v2956 = vld [vmem:[#allocation2 + $0x230] sm:$0xff]
    %v2957 = vld [vmem:[#allocation2 + $0x238] sm:$0xff]
    %v2958 = vld [vmem:[#allocation2 + $0x240] sm:$0xff]
    %v2959 = vld [vmem:[#allocation2 + $0x248] sm:$0xff]
    %v2960 = vld [vmem:[#allocation2 + $0x250] sm:$0xff]
    %v2961 = vld [vmem:[#allocation2 + $0x258] sm:$0xff]
    %v2962 = vld [vmem:[#allocation2 + $0x260] sm:$0xff]
    %v2963 = vld [vmem:[#allocation2 + $0x268] sm:$0xff]
    %v2964 = vld [vmem:[#allocation2 + $0x270] sm:$0xff]
    %v2965 = vld [vmem:[#allocation2 + $0x278] sm:$0xff]
    %v2966 = vld [vmem:[#allocation2 + $0x280] sm:$0xff]
    %v2967 = vld [vmem:[#allocation2 + $0x288] sm:$0xff]
    %v2968 = vld [vmem:[#allocation2 + $0x290] sm:$0xff]
    %v2969 = vld [vmem:[#allocation2 + $0x298] sm:$0xff]
    %v2970 = vld [vmem:[#allocation2 + $0x2a0] sm:$0xff]
    %v2971 = vld [vmem:[#allocation2 + $0x2a8] sm:$0xff]
    %v2972 = vld [vmem:[#allocation2 + $0x2b0] sm:$0xff]
    %v2973 = vld [vmem:[#allocation2 + $0x2b8] sm:$0xff]
    %v2974 = vld [vmem:[#allocation2 + $0x2c0] sm:$0xff]
    %v2975 = vld [vmem:[#allocation2 + $0x2c8] sm:$0xff]
    %v2976 = vld [vmem:[#allocation2 + $0x2d0] sm:$0xff]
    %v2977 = vld [vmem:[#allocation2 + $0x2d8] sm:$0xff]
    %v2978 = vld [vmem:[#allocation2 + $0x2e0] sm:$0xff]
    %v2979 = vld [vmem:[#allocation2 + $0x2e8] sm:$0xff]
    %v2980 = vld [vmem:[#allocation2 + $0x2f0] sm:$0xff]
    %v2981 = vld [vmem:[#allocation2 + $0x2f8] sm:$0xff]
    %v2982 = vld [vmem:[#allocation2 + $0x300] sm:$0xff]
    %v2983 = vld [vmem:[#allocation2 + $0x308] sm:$0xff]
    %v2984 = vld [vmem:[#allocation2 + $0x310] sm:$0xff]
    %v2985 = vld [vmem:[#allocation2 + $0x318] sm:$0xff]
    %v2986 = vld [vmem:[#allocation2 + $0x320] sm:$0xff]
    %v2987 = vld [vmem:[#allocation2 + $0x328] sm:$0xff]
    %v2988 = vld [vmem:[#allocation2 + $0x330] sm:$0xff]
    %v2989 = vld [vmem:[#allocation2 + $0x338] sm:$0xff]
    %v2990 = vld [vmem:[#allocation2 + $0x340] sm:$0xff]
    %v2991 = vld [vmem:[#allocation2 + $0x348] sm:$0xff]
    %v2992 = vld [vmem:[#allocation2 + $0x350] sm:$0xff]
    %v2993 = vld [vmem:[#allocation2 + $0x358] sm:$0xff]
    %v2994 = vld [vmem:[#allocation2 + $0x360] sm:$0xff]
    %v2995 = vld [vmem:[#allocation2 + $0x368] sm:$0xff]
    %v2996 = vld [vmem:[#allocation2 + $0x370] sm:$0xff]
    %v2997 = vld [vmem:[#allocation2 + $0x378] sm:$0xff]
    %v2998 = vld [vmem:[#allocation2 + $0x380] sm:$0xff]
    %v2999 = vld [vmem:[#allocation2 + $0x388] sm:$0xff]
    %v3000 = vld [vmem:[#allocation2 + $0x390] sm:$0xff]
    %v3001 = vld [vmem:[#allocation2 + $0x398] sm:$0xff]
    %v3002 = vld [vmem:[#allocation2 + $0x3a0] sm:$0xff]
    %v3003 = vld [vmem:[#allocation2 + $0x3a8] sm:$0xff]
    %v3004 = vld [vmem:[#allocation2 + $0x3b0] sm:$0xff]
    %v3005 = vld [vmem:[#allocation2 + $0x3b8] sm:$0xff]
    %v3006 = vld [vmem:[#allocation2 + $0x3c0] sm:$0xff]
    %v3007 = vld [vmem:[#allocation2 + $0x3c8] sm:$0xff]
    %v3008 = vld [vmem:[#allocation2 + $0x3d0] sm:$0xff]
    %v3009 = vld [vmem:[#allocation2 + $0x3d8] sm:$0xff]
    %v3010 = vld [vmem:[#allocation2 + $0x3e0] sm:$0xff]
    %v3011 = vld [vmem:[#allocation2 + $0x3e8] sm:$0xff]
    %v3012 = vld [vmem:[#allocation2 + $0x3f0] sm:$0xff]
    %v3013 = vld [vmem:[#allocation2 + $0x3f8] sm:$0xff]
    %v3014 = vld [vmem:[#allocation2 + $0x400] sm:$0xff]
    %v3015 = vld [vmem:[#allocation2 + $0x408] sm:$0xff]
    %v3016 = vld [vmem:[#allocation2 + $0x410] sm:$0xff]
    %v3017 = vld [vmem:[#allocation2 + $0x418] sm:$0xff]
    %v3018 = vld [vmem:[#allocation2 + $0x420] sm:$0xff]
    %v3019 = vld [vmem:[#allocation2 + $0x428] sm:$0xff]
    %v3020 = vld [vmem:[#allocation2 + $0x430] sm:$0xff]
    %v3021 = vld [vmem:[#allocation2 + $0x438] sm:$0xff]
    %v3022 = vld [vmem:[#allocation2 + $0x440] sm:$0xff]
    %v3023 = vld [vmem:[#allocation2 + $0x448] sm:$0xff]
    %v3024 = vld [vmem:[#allocation2 + $0x450] sm:$0xff]
    %v3025 = vld [vmem:[#allocation2 + $0x458] sm:$0xff]
    %v3026 = vld [vmem:[#allocation2 + $0x460] sm:$0xff]
    %v3027 = vld [vmem:[#allocation2 + $0x468] sm:$0xff]
    %v3028 = vld [vmem:[#allocation2 + $0x470] sm:$0xff]
    %v3029 = vld [vmem:[#allocation2 + $0x478] sm:$0xff]
    %v3030 = vld [vmem:[#allocation2 + $0x480] sm:$0xff]
    %v3031 = vld [vmem:[#allocation2 + $0x488] sm:$0xff]
    %v3032 = vld [vmem:[#allocation2 + $0x490] sm:$0xff]
    %v3033 = vld [vmem:[#allocation2 + $0x498] sm:$0xff]
    %v3034 = vld [vmem:[#allocation2 + $0x4a0] sm:$0xff]
    %v3035 = vld [vmem:[#allocation2 + $0x4a8] sm:$0xff]
    %v3036 = vld [vmem:[#allocation2 + $0x4b0] sm:$0xff]
    %v3037 = vld [vmem:[#allocation2 + $0x4b8] sm:$0xff]
    %v3038 = vld [vmem:[#allocation2 + $0x4c0] sm:$0xff]
    %v3039 = vld [vmem:[#allocation2 + $0x4c8] sm:$0xff]
    %v3040 = vld [vmem:[#allocation2 + $0x4d0] sm:$0xff]
    %v3041 = vld [vmem:[#allocation2 + $0x4d8] sm:$0xff]
    %v3042 = vld [vmem:[#allocation2 + $0x4e0] sm:$0xff]
    %v3043 = vld [vmem:[#allocation2 + $0x4e8] sm:$0xff]
    %v3044 = vld [vmem:[#allocation2 + $0x4f0] sm:$0xff]
    %v3045 = vld [vmem:[#allocation2 + $0x4f8] sm:$0xff]
    %s3046 = scalar_lea.vmem %s5, 2
    %v3047 = vld [vmem:[%s3046] ss:$8 sm:$0x3]
    %v3048 = vsel %vm2837, %v2774, %v2732
    %v3049 = vsel %vm2837, %v2795, %v2753
    %3052 = vmatprep.subr.mxu0 %v2983
    %3053 = vmatpush1.msra.mxu0 %v2982
    %3054 = vmatprep.subr.mxu0 %v2985
    %3055 = vmatpush1.msra.mxu0 %v2984
    %3056 = vmatprep.subr.mxu0 %v2987
    %3057 = vmatpush1.msra.mxu0 %v2986
    %3058 = vmatprep.subr.mxu0 %v2989
    %3059 = vmatpush1.msra.mxu0 %v2988
    %3060 = vmatprep.subr.mxu0 %v2991
    %3061 = vmatpush1.msra.mxu0 %v2990
    %3062 = vmatprep.subr.mxu0 %v2993
    %3063 = vmatpush1.msra.mxu0 %v2992
    %3064 = vmatprep.subr.mxu0 %v2995
    %3065 = vmatpush1.msra.mxu0 %v2994
    %3066 = vmatprep.subr.mxu0 %v2997
    %3067 = vmatpush1.msra.mxu0 %v2996
    %3068 = vmatprep.subr.mxu0 %v2999
    %3069 = vmatpush1.msra.mxu0 %v2998
    %3070 = vmatprep.subr.mxu0 %v3001
    %3071 = vmatpush1.msra.mxu0 %v3000
    %3072 = vmatprep.subr.mxu0 %v3003
    %3073 = vmatpush1.msra.mxu0 %v3002
    %3074 = vmatprep.subr.mxu0 %v3005
    %3075 = vmatpush1.msra.mxu0 %v3004
    %3076 = vmatprep.subr.mxu0 %v3007
    %3077 = vmatpush1.msra.mxu0 %v3006
    %3078 = vmatprep.subr.mxu0 %v3009
    %3079 = vmatpush1.msra.mxu0 %v3008
    %3080 = vmatprep.subr.mxu0 %v3011
    %3081 = vmatpush1.msra.mxu0 %v3010
    %3082 = vmatprep.subr.mxu0 %v3013
    %3083 = vmatpush1.msra.mxu0 %v3012
    %3084 = vmatprep.subr.mxu0 %v3015
    %3085 = vmatpush1.msra.mxu0 %v3014
    %3086 = vmatprep.subr.mxu0 %v3017
    %3087 = vmatpush1.msra.mxu0 %v3016
    %3088 = vmatprep.subr.mxu0 %v3019
    %3089 = vmatpush1.msra.mxu0 %v3018
    %3090 = vmatprep.subr.mxu0 %v3021
    %3091 = vmatpush1.msra.mxu0 %v3020
    %3092 = vmatprep.subr.mxu0 %v3023
    %3093 = vmatpush1.msra.mxu0 %v3022
    %3094 = vmatprep.subr.mxu0 %v3025
    %3095 = vmatpush1.msra.mxu0 %v3024
    %3096 = vmatprep.subr.mxu0 %v3027
    %3097 = vmatpush1.msra.mxu0 %v3026
    %3098 = vmatprep.subr.mxu0 %v3029
    %3099 = vmatpush1.msra.mxu0 %v3028
    %3100 = vmatprep.subr.mxu0 %v3031
    %3101 = vmatpush1.msra.mxu0 %v3030
    %3102 = vmatprep.subr.mxu0 %v3033
    %3103 = vmatpush1.msra.mxu0 %v3032
    %3104 = vmatprep.subr.mxu0 %v3035
    %3105 = vmatpush1.msra.mxu0 %v3034
    %3106 = vmatprep.subr.mxu0 %v3037
    %3107 = vmatpush1.msra.mxu0 %v3036
    %3108 = vmatprep.subr.mxu0 %v3039
    %3109 = vmatpush1.msra.mxu0 %v3038
    %3110 = vmatprep.subr.mxu0 %v3041
    %3111 = vmatpush1.msra.mxu0 %v3040
    %3112 = vmatprep.subr.mxu0 %v3043
    %3113 = vmatpush1.msra.mxu0 %v3042
    %3114 = vmatprep.subr.mxu0 %v3045
    %3115 = vmatpush1.msra.mxu0 %v3044
    %3116 = vmatprep.mubr.f32.mxu0 %v3049
    %3117 = vmatmul.mubr.f32.gmra.mrb[0].mxu0 %v3048
    %v3118 = vpop.f32.mrb[0].mxu0
    %v3119 = vadd.f32 0.0, %v3118
    %v3120 = vpop.f32.mrb[0].mxu0
    %v3121 = vadd.f32 0.0, %v3120
    %3122 = vdwg.mxu0
    %3125 = vmatprep.subr.mxu0 %v2919
    %3126 = vmatpush1.msra.mxu0 %v2918
    %3127 = vmatprep.subr.mxu0 %v2921
    %3128 = vmatpush1.msra.mxu0 %v2920
    %3129 = vmatprep.subr.mxu0 %v2923
    %3130 = vmatpush1.msra.mxu0 %v2922
    %3131 = vmatprep.subr.mxu0 %v2925
    %3132 = vmatpush1.msra.mxu0 %v2924
    %3133 = vmatprep.subr.mxu0 %v2927
    %3134 = vmatpush1.msra.mxu0 %v2926
    %3135 = vmatprep.subr.mxu0 %v2929
    %3136 = vmatpush1.msra.mxu0 %v2928
    %3137 = vmatprep.subr.mxu0 %v2931
    %3138 = vmatpush1.msra.mxu0 %v2930
    %3139 = vmatprep.subr.mxu0 %v2933
    %3140 = vmatpush1.msra.mxu0 %v2932
    %3141 = vmatprep.subr.mxu0 %v2935
    %3142 = vmatpush1.msra.mxu0 %v2934
    %3143 = vmatprep.subr.mxu0 %v2937
    %3144 = vmatpush1.msra.mxu0 %v2936
    %3145 = vmatprep.subr.mxu0 %v2939
    %3146 = vmatpush1.msra.mxu0 %v2938
    %3147 = vmatprep.subr.mxu0 %v2941
    %3148 = vmatpush1.msra.mxu0 %v2940
    %3149 = vmatprep.subr.mxu0 %v2943
    %3150 = vmatpush1.msra.mxu0 %v2942
    %3151 = vmatprep.subr.mxu0 %v2945
    %3152 = vmatpush1.msra.mxu0 %v2944
    %3153 = vmatprep.subr.mxu0 %v2947
    %3154 = vmatpush1.msra.mxu0 %v2946
    %3155 = vmatprep.subr.mxu0 %v2949
    %3156 = vmatpush1.msra.mxu0 %v2948
    %3157 = vmatprep.subr.mxu0 %v2951
    %3158 = vmatpush1.msra.mxu0 %v2950
    %3159 = vmatprep.subr.mxu0 %v2953
    %3160 = vmatpush1.msra.mxu0 %v2952
    %3161 = vmatprep.subr.mxu0 %v2955
    %3162 = vmatpush1.msra.mxu0 %v2954
    %3163 = vmatprep.subr.mxu0 %v2957
    %3164 = vmatpush1.msra.mxu0 %v2956
    %3165 = vmatprep.subr.mxu0 %v2959
    %3166 = vmatpush1.msra.mxu0 %v2958
    %3167 = vmatprep.subr.mxu0 %v2961
    %3168 = vmatpush1.msra.mxu0 %v2960
    %3169 = vmatprep.subr.mxu0 %v2963
    %3170 = vmatpush1.msra.mxu0 %v2962
    %3171 = vmatprep.subr.mxu0 %v2965
    %3172 = vmatpush1.msra.mxu0 %v2964
    %3173 = vmatprep.subr.mxu0 %v2967
    %3174 = vmatpush1.msra.mxu0 %v2966
    %3175 = vmatprep.subr.mxu0 %v2969
    %3176 = vmatpush1.msra.mxu0 %v2968
    %3177 = vmatprep.subr.mxu0 %v2971
    %3178 = vmatpush1.msra.mxu0 %v2970
    %3179 = vmatprep.subr.mxu0 %v2973
    %3180 = vmatpush1.msra.mxu0 %v2972
    %3181 = vmatprep.subr.mxu0 %v2975
    %3182 = vmatpush1.msra.mxu0 %v2974
    %3183 = vmatprep.subr.mxu0 %v2977
    %3184 = vmatpush1.msra.mxu0 %v2976
    %3185 = vmatprep.subr.mxu0 %v2979
    %3186 = vmatpush1.msra.mxu0 %v2978
    %3187 = vmatprep.subr.mxu0 %v2981
    %3188 = vmatpush1.msra.mxu0 %v2980
    %3189 = vmatprep.mubr.f32.mxu0 %v2843
    %3190 = vmatmul.mubr.f32.gmra.mrb[0].mxu0 %v2838
    %v3191 = vpop.f32.mrb[0].mxu0
    %v3192 = vadd.f32 %v3119, %v3191
    %v3193 = vpop.f32.mrb[0].mxu0
    %v3194 = vadd.f32 %v3121, %v3193
    %3195 = vdwg.mxu0
    %v3197 = vlaneseq
    %v3198 = vshrl.u32 %v3197, 7
    %v3199 = vsub.s32 0, %v3198
    %v3200 = vrot.slane %v3047, %v3199
    %v3201 = vlaneseq
    %v3202 = vshrl.u32 %v3201, 7
    %v3203 = vsub.s32 1, %v3202
    %v3204 = vrot.slane %v3047, %v3203
    %v3207 = vadd.f32 %v3192, %v3200
    %v3208 = vadd.f32 %v3194, %v3204
    %vm3209 = vcmask 1041408
    %v3210 = vsel %vm3209, %v3207, 0.0
    %v3211 = vsel %vm3209, %v3208, 0.0
    %v3212 = vadd.f32 %v3210, %v3211
    %3213 = vadd.xlane.f32.xlu0 %v3212
    %v3214 = vpop.xlane.xlu0 %3213
    %v3215 = vrcp.pop 256.0
    %v3216 = vmul.f32 %v3214, %v3215
    %v3217 = vsub.f32 %v3207, %v3216
    %v3218 = vsub.f32 %v3208, %v3216
    %v3219 = vmul.f32 %v3217, %v3217
    %v3220 = vmul.f32 %v3218, %v3218
    %v3221 = vsel %vm3209, %v3219, 0.0
    %v3222 = vsel %vm3209, %v3220, 0.0
    %v3223 = vadd.f32 %v3221, %v3222
    %3224 = vadd.xlane.f32.xlu0 %v3223
    %v3225 = vpop.xlane.xlu0 %3224
    %v3226 = vmul.f32 %v3225, %v3215
    %v3227 = vadd.f32 %v3226, 1e-05
    %v3228 = vrsqrt.pop %v3227
    %v3229 = vmul.f32 %v3217, %v3228
    %v3230 = vmul.f32 %v3218, %v3228
    %vm3231 = vcmp.gt.f32.partialorder %v3229, 0.0
    %vm3232 = vcmp.gt.f32.partialorder %v3230, 0.0
    %v3233 = vmul.f32 %v3229, 0.01
    %v3234 = vmul.f32 %v3230, 0.01
    %v3235 = vsel %vm3231, %v3229, %v3233
    %v3236 = vsel %vm3232, %v3230, %v3234
    %v3237 = vld [vmem:[%s2 + $0x80] sm:$0xff]
    %v3238 = vld [vmem:[%s2 + $0x88] sm:$0xff]
    %v3239 = vld [vmem:[%s2 + $0x90] sm:$0xff]
    %v3240 = vld [vmem:[%s2 + $0x98] sm:$0xff]
    %v3241 = vld [vmem:[%s2 + $0xa0] sm:$0xff]
    %v3242 = vld [vmem:[%s2 + $0xa8] sm:$0xff]
    %v3243 = vld [vmem:[%s2 + $0xb0] sm:$0xff]
    %v3244 = vld [vmem:[%s2 + $0xb8] sm:$0xff]
    %v3245 = vld [vmem:[%s2 + $0xc0] sm:$0xff]
    %v3246 = vld [vmem:[%s2 + $0xc8] sm:$0xff]
    %v3247 = vld [vmem:[%s2 + $0xd0] sm:$0xff]
    %v3248 = vld [vmem:[%s2 + $0xd8] sm:$0xff]
    %v3249 = vld [vmem:[%s2 + $0xe0] sm:$0xff]
    %v3250 = vld [vmem:[%s2 + $0xe8] sm:$0xff]
    %v3251 = vld [vmem:[%s2 + $0xf0] sm:$0xff]
    %v3252 = vld [vmem:[%s2 + $0xf8] sm:$0xff]
    %v3253 = vld [vmem:[%s2 + $0x100] sm:$0xff]
    %v3254 = vld [vmem:[%s2 + $0x108] sm:$0xff]
    %v3255 = vld [vmem:[%s2 + $0x110] sm:$0xff]
    %v3256 = vld [vmem:[%s2 + $0x118] sm:$0xff]
    %v3257 = vld [vmem:[%s2 + $0x120] sm:$0xff]
    %v3258 = vld [vmem:[%s2 + $0x128] sm:$0xff]
    %v3259 = vld [vmem:[%s2 + $0x130] sm:$0xff]
    %v3260 = vld [vmem:[%s2 + $0x138] sm:$0xff]
    %v3261 = vld [vmem:[%s2 + $0x140] sm:$0xff]
    %v3262 = vld [vmem:[%s2 + $0x148] sm:$0xff]
    %v3263 = vld [vmem:[%s2 + $0x150] sm:$0xff]
    %v3264 = vld [vmem:[%s2 + $0x158] sm:$0xff]
    %v3265 = vld [vmem:[%s2 + $0x160] sm:$0xff]
    %v3266 = vld [vmem:[%s2 + $0x168] sm:$0xff]
    %v3267 = vld [vmem:[%s2 + $0x170] sm:$0xff]
    %v3268 = vld [vmem:[%s2 + $0x178] sm:$0xff]
    %v3269 = vld [vmem:[%s5 + $0x3] ss:$0 sm:$0xff]
    %3270 = vmatprep.subr.mxu0 0.0
    %3271 = vmatpush1.msra.mxu0 %v3237
    %3272 = vmatprep.subr.mxu0 0.0
    %3273 = vmatpush1.msra.mxu0 %v3238
    %3274 = vmatprep.subr.mxu0 0.0
    %3275 = vmatpush1.msra.mxu0 %v3239
    %3276 = vmatprep.subr.mxu0 0.0
    %3277 = vmatpush1.msra.mxu0 %v3240
    %3278 = vmatprep.subr.mxu0 0.0
    %3279 = vmatpush1.msra.mxu0 %v3241
    %3280 = vmatprep.subr.mxu0 0.0
    %3281 = vmatpush1.msra.mxu0 %v3242
    %3282 = vmatprep.subr.mxu0 0.0
    %3283 = vmatpush1.msra.mxu0 %v3243
    %3284 = vmatprep.subr.mxu0 0.0
    %3285 = vmatpush1.msra.mxu0 %v3244
    %3286 = vmatprep.subr.mxu0 0.0
    %3287 = vmatpush1.msra.mxu0 %v3245
    %3288 = vmatprep.subr.mxu0 0.0
    %3289 = vmatpush1.msra.mxu0 %v3246
    %3290 = vmatprep.subr.mxu0 0.0
    %3291 = vmatpush1.msra.mxu0 %v3247
    %3292 = vmatprep.subr.mxu0 0.0
    %3293 = vmatpush1.msra.mxu0 %v3248
    %3294 = vmatprep.subr.mxu0 0.0
    %3295 = vmatpush1.msra.mxu0 %v3249
    %3296 = vmatprep.subr.mxu0 0.0
    %3297 = vmatpush1.msra.mxu0 %v3250
    %3298 = vmatprep.subr.mxu0 0.0
    %3299 = vmatpush1.msra.mxu0 %v3251
    %3300 = vmatprep.subr.mxu0 0.0
    %3301 = vmatpush1.msra.mxu0 %v3252
    %3302 = vmatprep.subr.mxu0 0.0
    %3303 = vmatpush1.msra.mxu0 %v3253
    %3304 = vmatprep.subr.mxu0 0.0
    %3305 = vmatpush1.msra.mxu0 %v3254
    %3306 = vmatprep.subr.mxu0 0.0
    %3307 = vmatpush1.msra.mxu0 %v3255
    %3308 = vmatprep.subr.mxu0 0.0
    %3309 = vmatpush1.msra.mxu0 %v3256
    %3310 = vmatprep.subr.mxu0 0.0
    %3311 = vmatpush1.msra.mxu0 %v3257
    %3312 = vmatprep.subr.mxu0 0.0
    %3313 = vmatpush1.msra.mxu0 %v3258
    %3314 = vmatprep.subr.mxu0 0.0
    %3315 = vmatpush1.msra.mxu0 %v3259
    %3316 = vmatprep.subr.mxu0 0.0
    %3317 = vmatpush1.msra.mxu0 %v3260
    %3318 = vmatprep.subr.mxu0 0.0
    %3319 = vmatpush1.msra.mxu0 %v3261
    %3320 = vmatprep.subr.mxu0 0.0
    %3321 = vmatpush1.msra.mxu0 %v3262
    %3322 = vmatprep.subr.mxu0 0.0
    %3323 = vmatpush1.msra.mxu0 %v3263
    %3324 = vmatprep.subr.mxu0 0.0
    %3325 = vmatpush1.msra.mxu0 %v3264
    %3326 = vmatprep.subr.mxu0 0.0
    %3327 = vmatpush1.msra.mxu0 %v3265
    %3328 = vmatprep.subr.mxu0 0.0
    %3329 = vmatpush1.msra.mxu0 %v3266
    %3330 = vmatprep.subr.mxu0 0.0
    %3331 = vmatpush1.msra.mxu0 %v3267
    %3332 = vmatprep.subr.mxu0 0.0
    %3333 = vmatpush1.msra.mxu0 %v3268
    %3334 = vmatprep.mubr.f32.mxu0 %v3236
    %3335 = vmatmul.mubr.f32.gmra.mrb[0].mxu0 %v3235
    %v3336 = vpop.f32.mrb[0].mxu0
    %v3337 = vadd.f32 %v3269, %v3336
    %v3338 = vpop.f32.mrb[0].mxu0
    %3339 = vdwg.mxu0
    %v3340 = vsel %vm3209, %v3337, 0.0
    %3341 = vadd.xlane.f32.xlu0 %v3340
    %v3342 = vpop.xlane.xlu0 %3341
    %v3343 = vmul.f32 %v3342, %v54
    %v3344 = vsub.f32 %v3337, %v3343
    %v3345 = vmul.f32 %v3344, %v3344
    %v3346 = vsel %vm3209, %v3345, 0.0
    %3347 = vadd.xlane.f32.xlu0 %v3346
    %v3348 = vpop.xlane.xlu0 %3347
    %v3349 = vmul.f32 %v3348, %v54
    %v3350 = vadd.f32 %v3349, 1e-05
    %v3351 = vrsqrt.pop %v3350
    %v3352 = vmul.f32 %v3344, %v3351
    %vm3353 = vcmp.gt.f32.partialorder %v3352, 0.0
    %v3354 = vmul.f32 %v3352, 0.01
    %v3355 = vsel %vm3353, %v3352, %v3354
    %v3356 = vld [vmem:[%s4 + $0x100] sm:$0xff]
    %v3357 = vld [vmem:[%s4 + $0x108] sm:$0xff]
    %v3358 = vld [vmem:[%s4 + $0x110] sm:$0xff]
    %v3359 = vld [vmem:[%s4 + $0x118] sm:$0xff]
    %v3360 = vld [vmem:[%s4 + $0x120] sm:$0xff]
    %v3361 = vld [vmem:[%s4 + $0x128] sm:$0xff]
    %v3362 = vld [vmem:[%s4 + $0x130] sm:$0xff]
    %v3363 = vld [vmem:[%s4 + $0x138] sm:$0xff]
    %v3364 = vld [vmem:[%s4 + $0x140] sm:$0xff]
    %v3365 = vld [vmem:[%s4 + $0x148] sm:$0xff]
    %v3366 = vld [vmem:[%s4 + $0x150] sm:$0xff]
    %v3367 = vld [vmem:[%s4 + $0x158] sm:$0xff]
    %v3368 = vld [vmem:[%s4 + $0x160] sm:$0xff]
    %v3369 = vld [vmem:[%s4 + $0x168] sm:$0xff]
    %v3370 = vld [vmem:[%s4 + $0x170] sm:$0xff]
    %v3371 = vld [vmem:[%s4 + $0x178] sm:$0xff]
    %v3372 = vld [vmem:[%s5 + $0x5] ss:$0 sm:$0xff]
    %3373 = vmatprep.subr.mxu0 0.0
    %3374 = vmatpush1.msra.mxu0 %v3356
    %3375 = vmatprep.subr.mxu0 0.0
    %3376 = vmatpush1.msra.mxu0 %v3357
    %3377 = vmatprep.subr.mxu0 0.0
    %3378 = vmatpush1.msra.mxu0 %v3358
    %3379 = vmatprep.subr.mxu0 0.0
    %3380 = vmatpush1.msra.mxu0 %v3359
    %3381 = vmatprep.subr.mxu0 0.0
    %3382 = vmatpush1.msra.mxu0 %v3360
    %3383 = vmatprep.subr.mxu0 0.0
    %3384 = vmatpush1.msra.mxu0 %v3361
    %3385 = vmatprep.subr.mxu0 0.0
    %3386 = vmatpush1.msra.mxu0 %v3362
    %3387 = vmatprep.subr.mxu0 0.0
    %3388 = vmatpush1.msra.mxu0 %v3363
    %3389 = vmatprep.subr.mxu0 0.0
    %3390 = vmatpush1.msra.mxu0 %v3364
    %3391 = vmatprep.subr.mxu0 0.0
    %3392 = vmatpush1.msra.mxu0 %v3365
    %3393 = vmatprep.subr.mxu0 0.0
    %3394 = vmatpush1.msra.mxu0 %v3366
    %3395 = vmatprep.subr.mxu0 0.0
    %3396 = vmatpush1.msra.mxu0 %v3367
    %3397 = vmatprep.subr.mxu0 0.0
    %3398 = vmatpush1.msra.mxu0 %v3368
    %3399 = vmatprep.subr.mxu0 0.0
    %3400 = vmatpush1.msra.mxu0 %v3369
    %3401 = vmatprep.subr.mxu0 0.0
    %3402 = vmatpush1.msra.mxu0 %v3370
    %3403 = vmatprep.subr.mxu0 0.0
    %3404 = vmatpush1.msra.mxu0 %v3371
    %3405 = vmatprep.subr.mxu0 0.0
    %3406 = vmatpush1.msra.mxu0 0.0
    %3407 = vmatprep.subr.mxu0 0.0
    %3408 = vmatpush1.msra.mxu0 0.0
    %3409 = vmatprep.subr.mxu0 0.0
    %3410 = vmatpush1.msra.mxu0 0.0
    %3411 = vmatprep.subr.mxu0 0.0
    %3412 = vmatpush1.msra.mxu0 0.0
    %3413 = vmatprep.subr.mxu0 0.0
    %3414 = vmatpush1.msra.mxu0 0.0
    %3415 = vmatprep.subr.mxu0 0.0
    %3416 = vmatpush1.msra.mxu0 0.0
    %3417 = vmatprep.subr.mxu0 0.0
    %3418 = vmatpush1.msra.mxu0 0.0
    %3419 = vmatprep.subr.mxu0 0.0
    %3420 = vmatpush1.msra.mxu0 0.0
    %3421 = vmatprep.subr.mxu0 0.0
    %3422 = vmatpush1.msra.mxu0 0.0
    %3423 = vmatprep.subr.mxu0 0.0
    %3424 = vmatpush1.msra.mxu0 0.0
    %3425 = vmatprep.subr.mxu0 0.0
    %3426 = vmatpush1.msra.mxu0 0.0
    %3427 = vmatprep.subr.mxu0 0.0
    %3428 = vmatpush1.msra.mxu0 0.0
    %3429 = vmatprep.subr.mxu0 0.0
    %3430 = vmatpush1.msra.mxu0 0.0
    %3431 = vmatprep.subr.mxu0 0.0
    %3432 = vmatpush1.msra.mxu0 0.0
    %3433 = vmatprep.subr.mxu0 0.0
    %3434 = vmatpush1.msra.mxu0 0.0
    %3435 = vmatprep.subr.mxu0 0.0
    %3436 = vmatpush1.msra.mxu0 0.0
    %3437 = vmatprep.mubr.f32.mxu0 0.0
    %3438 = vmatmul.mubr.f32.gmra.mrb[0].mxu0 %v3355
    %v3439 = vpop.f32.mrb[0].mxu0
    %v3440 = vadd.f32 %v3372, %v3439
    %v3441 = vpop.f32.mrb[0].mxu0
    %3442 = vdwg.mxu0
    %3443 = vst [vmem:[%s6] sm:$0xff] 0.0
    %vm3444 = vcmask 58368
    %3445 = vst.msk [vmem:[%s6] sm:$0x3] %vm3444, %v3440
    %vm3446 = vcmask 60416
    %3447 = vst.msk [vmem:[%s6 + $0x2] sm:$0xf] %vm3446, %v2915
    // Predicated region
    $region30: #{pointnetv2_treg_forward.1} parent=1 // pred_check
      _
    $region31: #{pointnetv2_treg_forward.1} parent=1 // pred_check_branch
      %3449 = sbr.rel (0) target = $region33
    $region32: #{pointnetv2_treg_forward.1} parent=1 // pred_region
      _
    $region33: #{pointnetv2_treg_forward.1} parent=1 // pred_fallthru
      _
    // Predicated region
    $region34: #{pointnetv2_treg_forward.1} parent=1 // pred_check
      _
    $region35: #{pointnetv2_treg_forward.1} parent=1 // pred_check_branch
      %3451 = sbr.rel (0) target = $region37
    $region36: #{pointnetv2_treg_forward.1} parent=1 // pred_region
      _
    $region37: #{pointnetv2_treg_forward.1} parent=1 // pred_fallthru
      _
    %3452 = vsyncpa [#allocation3], 1

</llo_original>
